<compile_context>
chip_gen: v6e
topology: v6e:2x2x1
jax: 0.10.0
libtpu: 0.0.40
codegen_flags: <defaults>
</compile_context>

<pallas_src>
import math

import numpy as np
import jax
import jax.numpy as jnp
from jax import lax
from jax.experimental import pallas as pl
from jax.experimental.pallas import tpu as pltpu

EPS = 1e-5  # PyTorch BatchNorm2d default eps


# ---------------------------------------------------------------------------
# Pallas kernel
# ---------------------------------------------------------------------------
def _make_kernel(H, W, in_ch, out_ch, i1, B_blk, widx, cidx, eca_k):
    HW = H * W
    L = B_blk * HW
    o2 = out_ch - i1
    taps3 = [(dy, dx) for dy in (-1, 0, 1) for dx in (-1, 0, 1)]

    def kernel(x_ref, masks_ref, wpak_ref, colpak_ref, o_ref):
        x = x_ref[0]                           # (in_ch, L) f32
        WP = wpak_ref[...]                     # bf16 packed matmul weights
        CP = colpak_ref[...]                   # f32  packed per-channel vectors

        def wget(name):
            off, r, w = widx[name]
            return WP[:r, off:off + w]

        def cget(name):
            off, r, w = cidx[name]
            return CP[:r, off:off + w]

        def sigmoid(v):
            return pl.reciprocal(1.0 + jnp.exp(-v), approx=True)

        # -- host-built mask rows: 49 tap masks + B_blk image-indicator masks --
        mcache = {}

        def mrow(dy, dx):
            key = (dy, dx)
            if key not in mcache:
                t = (dy + 3) * 7 + (dx + 3)
                mcache[key] = masks_ref[t:t + 1, :]
            return mcache[key]                 # (1, L)

        def irow(b):
            return masks_ref[49 + b:50 + b, :]   # (1, L)

        def shifted(arr, dy, dx):
            """out[:, p] = arr[:, p + dy*W + dx] within its image, 0 outside."""
            off = dy * W + dx
            s = arr if off == 0 else pltpu.roll(arr, (-off) % L, axis=1)
            if dy != 0 or dx != 0:
                s = s * mrow(dy, dx)
            return s

        def stack3(arr):
            """(C, L) -> (9*C, L) im2col stack for a 3x3 conv (tap-major)."""
            return jnp.concatenate([shifted(arr, dy, dx) for dy, dx in taps3],
                                   axis=0)

        def mxu(wa, stk):
            return jnp.dot(wa, stk.astype(jnp.bfloat16),
                           preferred_element_type=jnp.float32)

        def dwconv3(arr, w, b):
            """Depthwise 3x3 (+ folded-BN bias) + relu.  w: (C, 9), b: (C, 1)."""
            acc = arr * w[:, 4:5]              # centre tap: no roll / mask needed
            for t, (dy, dx) in enumerate(taps3):
                if t == 4:
                    continue
                acc = acc + shifted(arr, dy, dx) * w[:, t:t + 1]
            return jnp.maximum(acc + b, 0.0)

        # ---- fused ghost1 primary (3x3) + shortcut primary (1x1) -> one matmul
        xs = stack3(x)                                            # (9*in_ch, L)
        zf = jnp.maximum(mxu(wget('w_fused1'), xs) + cget('b_fused1'), 0.0)
        # fused depthwise "cheap" convs (ghost1 rows 0..i1-1, shortcut rows i1..)
        df = dwconv3(zf, cget('w_dw1'), cget('b_dw1'))            # (2*i1, L)

        # ---- split halves + per-half BatchNorm (bn1 / bn_sc) -------------------
        h1a = jnp.maximum(zf[:i1] * cget('sbn1a') + cget('bbn1a'), 0.0)     # (i1, L)
        h1b = jnp.maximum(df[:o2] * cget('sbn1b') + cget('bbn1b'), 0.0)     # (o2, L)
        sca = zf[i1:] * cget('sbnsca') + cget('bbnsca')                     # (i1, L)
        scb = df[i1:i1 + o2] * cget('sbnscb') + cget('bbnscb')              # (o2, L)

        # ---- ghost2: primary 3x3 conv with K split over the two halves ---------
        y1 = jnp.maximum(mxu(wget('w2p_a'), stack3(h1a))
                         + mxu(wget('w2p_b'), stack3(h1b))
                         + cget('b2p'), 0.0)                                # (i1, L)
        y2 = dwconv3(y1, cget('w2d'), cget('b2d'))                          # (i1, L)
        h2a = y1 * cget('sbn2a') + cget('bbn2a')                            # (i1, L)
        h2b = y2[:o2] * cget('sbn2b') + cget('bbn2b')                       # (o2, L)

        # ---- ECA channel attention (per image in the lane-folded block) --------
        eca = cget('eca_w')                                                 # (k, 1)
        pad = eca_k // 2
        za = jnp.zeros((pad, 1), jnp.float32)
        inv_hw = 1.0 / HW
        att_f_a = None
        att_f_b = None
        for b in range(B_blk):
            im = irow(b)                                                    # (1, L)
            avg_a = jnp.sum(h2a * im, axis=1, keepdims=True) * inv_hw       # (i1, 1)
            avg_b = jnp.sum(h2b * im, axis=1, keepdims=True) * inv_hw       # (o2, 1)
            avg = jnp.concatenate([za, avg_a, avg_b, za], axis=0)
            att = eca[0:1, 0:1] * avg[0:out_ch]
            for j in range(1, eca_k):
                att = att + eca[j:j + 1, 0:1] * avg[j:j + out_ch]
            att = sigmoid(att)                                              # (out_ch, 1)
            fa = att[:i1] * im
            fb = att[i1:out_ch] * im
            att_f_a = fa if att_f_a is None else att_f_a + fa
            att_f_b = fb if att_f_b is None else att_f_b + fb
        h3a = h2a * att_f_a
        h3b = h2b * att_f_b

        # ---- spatial attention: 7x7 conv over [mean, max] -> one MXU matmul ----
        amap = (jnp.sum(h3a, axis=0, keepdims=True)
                + jnp.sum(h3b, axis=0, keepdims=True)) * (1.0 / out_ch)
        mmap = jnp.maximum(jnp.max(h3a, axis=0, keepdims=True),
                           jnp.max(h3b, axis=0, keepdims=True))
        sp = jnp.concatenate([amap, mmap], axis=0)                          # (2, L)
        sp_stack = jnp.concatenate(
            [shifted(sp, dy, dx) for dy in range(-3, 4) for dx in range(-3, 4)],
            axis=0)                                                         # (98, L)
        att_s = sigmoid(mxu(wget('wsp'), sp_stack) + cget('bsp'))           # (1, L)

        # StochasticDepth: eval mode == identity.
        # TODO(synk): train-mode StochasticDepth (host-RNG layer drop) and train-mode
        # BatchNorm batch statistics are not implemented (eval semantics only).

        # ---- residual add + final relu (single lane-dense (out_ch, L) store) ---
        ra = jnp.maximum(h3a * att_s + sca, 0.0)
        rb = jnp.maximum(h3b * att_s + scb, 0.0)
        o_ref[0] = jnp.concatenate([ra, rb], axis=0)

    return kernel


# ---------------------------------------------------------------------------
# Host-side helpers: BN folding, operand packing, mask building
# ---------------------------------------------------------------------------
def _fold_bn_into_conv(w, bn, eps=EPS):
    gamma, beta, mean, var = bn
    s = gamma / jnp.sqrt(var + eps)
    wf = w * s.reshape((-1,) + (1,) * (w.ndim - 1))
    bf = beta - mean * s
    return wf.astype(jnp.float32), bf.astype(jnp.float32)


def _bn_scale_shift(bn, eps=EPS):
    gamma, beta, mean, var = bn
    s = gamma / jnp.sqrt(var + eps)
    return s.astype(jnp.float32), (beta - mean * s).astype(jnp.float32)


def _pack(blocks, n_rows, dtype):
    """Packs many small 2-D blocks side-by-side on the lane axis of one array."""
    idx, cols, off = {}, [], 0
    for name, a in blocks:
        a = jnp.asarray(a, jnp.float32)
        if a.ndim == 1:
            a = a.reshape(-1, 1)
        r, w = a.shape
        assert r <= n_rows
        if r < n_rows:
            a = jnp.concatenate([a, jnp.zeros((n_rows - r, w), jnp.float32)], axis=0)
        cols.append(a)
        idx[name] = (off, r, w)
        off += w
    return jnp.concatenate(cols, axis=1).astype(dtype), idx


def _build_masks(H, W, B_blk):
    """(49 + B_blk, B_blk*H*W) f32: 7x7 tap validity masks + image indicators."""
    HW = H * W
    L = B_blk * HW
    pos = np.arange(L)
    y = (pos % HW) // W
    x = pos % W
    rows = []
    for dy in range(-3, 4):
        for dx in range(-3, 4):
            ok = ((y + dy >= 0) & (y + dy < H) & (x + dx >= 0) & (x + dx < W))
            rows.append(ok.astype(np.float32))
    for b in range(B_blk):
        rows.append(((pos // HW) == b).astype(np.float32))
    return jnp.asarray(np.stack(rows, axis=0), jnp.float32)


# ---------------------------------------------------------------------------
# pallas_call wrapper
# ---------------------------------------------------------------------------
def improved_residual_block(x, P, block_batch=None):
    """Eval-mode forward of ImprovedResidualBlock (stride=1, projection shortcut)."""
    N, in_ch, H, W = x.shape
    out_ch = P['bn1'][0].shape[0]
    HW = H * W
    assert HW % 128 == 0, "flattened spatial dim must be a multiple of 128"
    i1 = P['g1']['pw'].shape[0]          # ghost init channels (ratio=2)
    o2 = out_ch - i1
    assert 0 < o2 <= i1

    if block_batch is None:
        block_batch = max(1, min(N, max(1, 1024 // HW)))   # target ~1024+ lanes
    B_blk = block_batch
    L = B_blk * HW
    G = -(-N // B_blk)
    N_pad = G * B_blk

    def conv_mat(w):
        # (Cout, Cin, kh, kw) -> (Cout, kh*kw*Cin): tap-major / channel-minor,
        # matching the sublane-stacked roll order used in the kernel.
        co, ci, kh, kw = w.shape
        return jnp.transpose(w, (0, 2, 3, 1)).reshape(co, kh * kw * ci)

    # ---- fold eval-mode BatchNorms into the convs -----------------------------
    w1p, b1p = _fold_bn_into_conv(P['g1']['pw'], P['g1']['pbn'])
    w1d, b1d = _fold_bn_into_conv(P['g1']['cw'], P['g1']['cbn'])
    sbn1, bbn1 = _bn_scale_shift(P['bn1'])
    w2p, b2p = _fold_bn_into_conv(P['g2']['pw'], P['g2']['pbn'])
    w2d, b2d = _fold_bn_into_conv(P['g2']['cw'], P['g2']['cbn'])
    sbn2, bbn2 = _bn_scale_shift(P['bn2'])
    wscp, bscp = _fold_bn_into_conv(P['gs']['pw'], P['gs']['pbn'])
    wscd, bscd = _fold_bn_into_conv(P['gs']['cw'], P['gs']['cbn'])
    sbnsc, bbnsc = _bn_scale_shift(P['bn_sc'])

    # fused [ghost1 3x3 primary ; shortcut 1x1 primary] weight (1x1 == centre tap)
    wf1 = jnp.zeros((2 * i1, 9 * in_ch), jnp.float32)
    wf1 = wf1.at[:i1].set(conv_mat(w1p))
    wf1 = wf1.at[i1:, 4 * in_ch:5 * in_ch].set(wscp.reshape(i1, in_ch))
    b_fused1 = jnp.concatenate([b1p, bscp])
    w_dw1 = jnp.concatenate([w1d.reshape(i1, 9), wscd.reshape(i1, 9)], axis=0)
    b_dw1 = jnp.concatenate([b1d, bscd])

    # ghost2 primary conv, K split over the two halves of its input
    w2p_a = conv_mat(w2p[:, :i1])            # (i1, 9*i1)
    w2p_b = conv_mat(w2p[:, i1:out_ch])      # (i1, 9*o2)

    # ECA taps + spatial-attention 7x7 weights
    eca_w = jnp.asarray(P['eca_w'], jnp.float32)
    eca_k = int(eca_w.shape[0])
    wsp = jnp.transpose(jnp.asarray(P['sp_w'], jnp.float32)[0], (1, 2, 0)).reshape(1, 98)
    bsp = jnp.asarray(P['sp_b'], jnp.float32).reshape(1, 1)

    # ---- pack operands: one bf16 weight array + one f32 vector array ----------
    wpak, widx = _pack([
        ('w_fused1', wf1), ('w2p_a', w2p_a), ('w2p_b', w2p_b), ('wsp', wsp),
    ], 2 * i1, jnp.bfloat16)

    colpak, cidx = _pack([
        ('b_fused1', b_fused1), ('b_dw1', b_dw1), ('w_dw1', w_dw1),
        ('sbn1a', sbn1[:i1]), ('bbn1a', bbn1[:i1]),
        ('sbn1b', sbn1[i1:out_ch]), ('bbn1b', bbn1[i1:out_ch]),
        ('sbnsca', sbnsc[:i1]), ('bbnsca', bbnsc[:i1]),
        ('sbnscb', sbnsc[i1:out_ch]), ('bbnscb', bbnsc[i1:out_ch]),
        ('b2p', b2p), ('w2d', w2d.reshape(i1, 9)), ('b2d', b2d),
        ('sbn2a', sbn2[:i1]), ('bbn2a', bbn2[:i1]),
        ('sbn2b', sbn2[i1:out_ch]), ('bbn2b', bbn2[i1:out_ch]),
        ('eca_w', eca_w), ('bsp', bsp),
    ], 2 * i1, jnp.float32)

    masks = _build_masks(H, W, B_blk)        # (49 + B_blk, L)

    # ---- fold batch onto the lane axis: (G, C, B_blk*HW) ----------------------
    x = jnp.asarray(x, jnp.float32)
    if N_pad != N:
        x = jnp.concatenate([x, jnp.zeros((N_pad - N, in_ch, H, W), jnp.float32)], 0)
    xg = x.reshape(G, B_blk, in_ch, HW).transpose(0, 2, 1, 3).reshape(G, in_ch, L)

    kernel = _make_kernel(H, W, in_ch, out_ch, i1, B_blk, widx, cidx, eca_k)
    out = pl.pallas_call(
        kernel,
        out_shape=jax.ShapeDtypeStruct((G, out_ch, L), jnp.float32),
        grid=(G,),
        in_specs=[
            pl.BlockSpec((1, in_ch, L), lambda g: (g, 0, 0)),
            pl.BlockSpec(masks.shape, lambda g: (0, 0)),
            pl.BlockSpec(wpak.shape, lambda g: (0, 0)),
            pl.BlockSpec(colpak.shape, lambda g: (0, 0)),
        ],
        out_specs=pl.BlockSpec((1, out_ch, L), lambda g: (g, 0, 0)),
        compiler_params=pltpu.CompilerParams(
            dimension_semantics=("parallel",),
            vmem_limit_bytes=32 * 1024 * 1024),
    )(xg, masks, wpak, colpak)

    out = (out.reshape(G, out_ch, B_blk, HW).transpose(0, 2, 1, 3)
              .reshape(N_pad, out_ch, H, W))
    return out[:N]


# ---------------------------------------------------------------------------
# Pure-JAX reference mirroring the PyTorch forward (eval mode)
# ---------------------------------------------------------------------------
def _conv2d_ref(x, w, stride=1, padding=0, groups=1, bias=None):
    out = lax.conv_general_dilated(
        x, w, window_strides=(stride, stride),
        padding=[(padding, padding), (padding, padding)],
        dimension_numbers=('NCHW', 'OIHW', 'NCHW'),
        feature_group_count=groups,
        precision=lax.Precision.HIGHEST)
    if bias is not None:
        out = out + bias.reshape(1, -1, 1, 1)
    return out


def _bn_ref(x, bn, eps=EPS):
    gamma, beta, mean, var = bn
    s = gamma / jnp.sqrt(var + eps)
    return ((x - mean.reshape(1, -1, 1, 1)) * s.reshape(1, -1, 1, 1)
            + beta.reshape(1, -1, 1, 1))


def _ghost_ref(x, p, oup):
    ksz = p['pw'].shape[-1]
    x1 = jax.nn.relu(_bn_ref(_conv2d_ref(x, p['pw'], padding=ksz // 2), p['pbn']))
    x2 = jax.nn.relu(_bn_ref(_conv2d_ref(x1, p['cw'], padding=1,
                                         groups=x1.shape[1]), p['cbn']))
    out = jnp.concatenate([x1, x2], axis=1)
    return out[:, :oup]


def _eca_ref(x, w):
    n, c, _, _ = x.shape
    ksz = w.shape[0]
    y = jnp.mean(x, axis=(2, 3))
    ypad = jnp.pad(y, ((0, 0), (ksz // 2, ksz // 2)))
    att = jnp.stack([jnp.sum(ypad[:, i:i + ksz] * w, axis=-1) for i in range(c)],
                    axis=-1)
    att = jax.nn.sigmoid(att)
    return x * att[:, :, None, None]


def _spatial_ref(x, w, b):
    avg = jnp.mean(x, axis=1, keepdims=True)
    mx = jnp.max(x, axis=1, keepdims=True)
    att = jax.nn.sigmoid(
        _conv2d_ref(jnp.concatenate([avg, mx], axis=1), w, padding=3, bias=b))
    return x * att


def reference(x, P):
    out_ch = P['bn1'][0].shape[0]
    out = jax.nn.relu(_bn_ref(_ghost_ref(x, P['g1'], out_ch), P['bn1']))
    out = _bn_ref(_ghost_ref(out, P['g2'], out_ch), P['bn2'])
    out = _eca_ref(out, P['eca_w'])
    out = _spatial_ref(out, P['sp_w'], P['sp_b'])
    # StochasticDepth (eval) == identity
    sc = _bn_ref(_ghost_ref(x, P['gs'], out_ch), P['bn_sc'])
    return jax.nn.relu(out + sc)


# ---------------------------------------------------------------------------
if __name__ == "__main__":
    N, in_ch, out_ch, H, W = 2, 4, 8, 16, 16
    init1 = math.ceil(out_ch / 2)   # ghost init channels (ratio=2)

    key = jax.random.PRNGKey(0)
    keys = iter(jax.random.split(key, 64))

    def conv_w(shape, fan_in):
        return jax.random.normal(next(keys), shape, jnp.float32) / np.sqrt(fan_in)

    def bn(c):
        return (1.0 + 0.1 * jax.random.normal(next(keys), (c,), jnp.float32),
                0.1 * jax.random.normal(next(keys), (c,), jnp.float32),
                0.1 * jax.random.normal(next(keys), (c,), jnp.float32),
                jax.random.uniform(next(keys), (c,), jnp.float32, 0.5, 1.5))

    # ECA kernel size for `out_ch` channels (gamma=2, b=1) as in the PyTorch module.
    t = int(abs(math.log(out_ch, 2) + 1) / 2)
    eca_k = t if t % 2 else t + 1

    P = {
        'g1': {'pw': conv_w((init1, in_ch, 3, 3), 9 * in_ch), 'pbn': bn(init1),
               'cw': conv_w((init1, 1, 3, 3), 9), 'cbn': bn(init1)},
        'bn1': bn(out_ch),
        'g2': {'pw': conv_w((init1, out_ch, 3, 3), 9 * out_ch), 'pbn': bn(init1),
               'cw': conv_w((init1, 1, 3, 3), 9), 'cbn': bn(init1)},
        'bn2': bn(out_ch),
        'eca_w': conv_w((eca_k,), eca_k),
        'sp_w': conv_w((1, 2, 7, 7), 2 * 49),
        'sp_b': 0.1 * jax.random.normal(next(keys), (1,), jnp.float32),
        'gs': {'pw': conv_w((init1, in_ch, 1, 1), in_ch), 'pbn': bn(init1),
               'cw': conv_w((init1, 1, 3, 3), 9), 'cbn': bn(init1)},
        'bn_sc': bn(out_ch),
    }

    x = jax.random.normal(next(keys), (N, in_ch, H, W), jnp.float32)

    out = jax.block_until_ready(improved_residual_block(x, P))
    assert out.shape == (N, out_ch, H, W)

    ref = jax.block_until_ready(reference(x, P))
    np.testing.assert_allclose(np.asarray(out), np.asarray(ref), rtol=2e-2, atol=2e-2)
    print("KERNEL_OK")
</pallas_src>

<mosaic_0001>
module attributes {stable_mosaic.version = 11 : i64} {
  func.func @kernel(%arg0: i32, %arg1: memref<1x4x512xf32, #tpu.memory_space<vmem>>, %arg2: memref<51x512xf32, #tpu.memory_space<vmem>>, %arg3: memref<8x206xbf16, #tpu.memory_space<vmem>>, %arg4: memref<8x36xf32, #tpu.memory_space<vmem>>, %arg5: memref<1x8x512xf32, #tpu.memory_space<vmem>>) attributes {dimension_semantics = [#tpu.dimension_semantics<parallel>], iteration_bounds = array<i64: 1>, scalar_prefetch = 0 : i64, scratch_operands = 0 : i64, tpu.core_type = #tpu.core_type<tc>, window_params = [{transform_indices = @transform_0, window_bounds = array<i64: 1, 4, 512>}, {pipeline_mode = #tpu.pipeline_mode<synchronous>, transform_indices = @transform_1, window_bounds = array<i64: 51, 512>}, {pipeline_mode = #tpu.pipeline_mode<synchronous>, transform_indices = @transform_2, window_bounds = array<i64: 8, 206>}, {pipeline_mode = #tpu.pipeline_mode<synchronous>, transform_indices = @transform_3, window_bounds = array<i64: 8, 36>}, {transform_indices = @transform_4, window_bounds = array<i64: 1, 8, 512>}]} {
    %c0 = arith.constant 0 : index
    %c0_0 = arith.constant 0 : index
    %c0_1 = arith.constant 0 : index
    %0 = vector.load %arg1[%c0, %c0_0, %c0_1] : memref<1x4x512xf32, #tpu.memory_space<vmem>>, vector<1x4x512xf32>
    %1 = vector.shape_cast %0 : vector<1x4x512xf32> to vector<4x512xf32>
    %c0_2 = arith.constant 0 : index
    %c0_3 = arith.constant 0 : index
    %2 = vector.load %arg3[%c0_2, %c0_3] : memref<8x206xbf16, #tpu.memory_space<vmem>>, vector<8x206xbf16>
    %c0_4 = arith.constant 0 : index
    %c0_5 = arith.constant 0 : index
    %3 = vector.load %arg4[%c0_4, %c0_5] : memref<8x36xf32, #tpu.memory_space<vmem>>, vector<8x36xf32>
    %c17_i32 = arith.constant 17 : i32
    %4 = tpu.dynamic_rotate %1 by %c17_i32 dim 1 : vector<4x512xf32>, i32 -> vector<4x512xf32>
    %c16 = arith.constant 16 : index
    %c0_6 = arith.constant 0 : index
    %5 = vector.load %arg2[%c16, %c0_6] : memref<51x512xf32, #tpu.memory_space<vmem>>, vector<1x512xf32>
    %6 = vector.broadcast %5 : vector<1x512xf32> to vector<4x512xf32>
    %7 = arith.mulf %4, %6 : vector<4x512xf32>
    %c16_i32 = arith.constant 16 : i32
    %8 = tpu.dynamic_rotate %1 by %c16_i32 dim 1 : vector<4x512xf32>, i32 -> vector<4x512xf32>
    %c17 = arith.constant 17 : index
    %c0_7 = arith.constant 0 : index
    %9 = vector.load %arg2[%c17, %c0_7] : memref<51x512xf32, #tpu.memory_space<vmem>>, vector<1x512xf32>
    %10 = vector.broadcast %9 : vector<1x512xf32> to vector<4x512xf32>
    %11 = arith.mulf %8, %10 : vector<4x512xf32>
    %c15_i32 = arith.constant 15 : i32
    %12 = tpu.dynamic_rotate %1 by %c15_i32 dim 1 : vector<4x512xf32>, i32 -> vector<4x512xf32>
    %c18 = arith.constant 18 : index
    %c0_8 = arith.constant 0 : index
    %13 = vector.load %arg2[%c18, %c0_8] : memref<51x512xf32, #tpu.memory_space<vmem>>, vector<1x512xf32>
    %14 = vector.broadcast %13 : vector<1x512xf32> to vector<4x512xf32>
    %15 = arith.mulf %12, %14 : vector<4x512xf32>
    %c1_i32 = arith.constant 1 : i32
    %16 = tpu.dynamic_rotate %1 by %c1_i32 dim 1 : vector<4x512xf32>, i32 -> vector<4x512xf32>
    %c23 = arith.constant 23 : index
    %c0_9 = arith.constant 0 : index
    %17 = vector.load %arg2[%c23, %c0_9] : memref<51x512xf32, #tpu.memory_space<vmem>>, vector<1x512xf32>
    %18 = vector.broadcast %17 : vector<1x512xf32> to vector<4x512xf32>
    %19 = arith.mulf %16, %18 : vector<4x512xf32>
    %c511_i32 = arith.constant 511 : i32
    %20 = tpu.dynamic_rotate %1 by %c511_i32 dim 1 : vector<4x512xf32>, i32 -> vector<4x512xf32>
    %c25 = arith.constant 25 : index
    %c0_10 = arith.constant 0 : index
    %21 = vector.load %arg2[%c25, %c0_10] : memref<51x512xf32, #tpu.memory_space<vmem>>, vector<1x512xf32>
    %22 = vector.broadcast %21 : vector<1x512xf32> to vector<4x512xf32>
    %23 = arith.mulf %20, %22 : vector<4x512xf32>
    %c497_i32 = arith.constant 497 : i32
    %24 = tpu.dynamic_rotate %1 by %c497_i32 dim 1 : vector<4x512xf32>, i32 -> vector<4x512xf32>
    %c30 = arith.constant 30 : index
    %c0_11 = arith.constant 0 : index
    %25 = vector.load %arg2[%c30, %c0_11] : memref<51x512xf32, #tpu.memory_space<vmem>>, vector<1x512xf32>
    %26 = vector.broadcast %25 : vector<1x512xf32> to vector<4x512xf32>
    %27 = arith.mulf %24, %26 : vector<4x512xf32>
    %c496_i32 = arith.constant 496 : i32
    %28 = tpu.dynamic_rotate %1 by %c496_i32 dim 1 : vector<4x512xf32>, i32 -> vector<4x512xf32>
    %c31 = arith.constant 31 : index
    %c0_12 = arith.constant 0 : index
    %29 = vector.load %arg2[%c31, %c0_12] : memref<51x512xf32, #tpu.memory_space<vmem>>, vector<1x512xf32>
    %30 = vector.broadcast %29 : vector<1x512xf32> to vector<4x512xf32>
    %31 = arith.mulf %28, %30 : vector<4x512xf32>
    %c495_i32 = arith.constant 495 : i32
    %32 = tpu.dynamic_rotate %1 by %c495_i32 dim 1 : vector<4x512xf32>, i32 -> vector<4x512xf32>
    %c32 = arith.constant 32 : index
    %c0_13 = arith.constant 0 : index
    %33 = vector.load %arg2[%c32, %c0_13] : memref<51x512xf32, #tpu.memory_space<vmem>>, vector<1x512xf32>
    %34 = vector.broadcast %33 : vector<1x512xf32> to vector<4x512xf32>
    %35 = arith.mulf %32, %34 : vector<4x512xf32>
    %36 = tpu.concatenate %7, %11, %15, %19, %1, %23, %27, %31, %35 in 0 : vector<4x512xf32>, vector<4x512xf32>, vector<4x512xf32>, vector<4x512xf32>, vector<4x512xf32>, vector<4x512xf32>, vector<4x512xf32>, vector<4x512xf32>, vector<4x512xf32> -> vector<36x512xf32>
    %37 = vector.extract_strided_slice %2 {offsets = [0, 0], sizes = [8, 36], strides = [1, 1]} : vector<8x206xbf16> to vector<8x36xbf16>
    %38 = arith.truncf %36 : vector<36x512xf32> to vector<36x512xbf16>
    %cst = arith.constant dense<0.000000e+00> : vector<8x512xf32>
    %39 = tpu.matmul %37, %38, %cst {dimension_numbers = #tpu.dot_dimension_numbers<[1], [0], [0], [1], [0, 0, 1, 1], [], []>} : vector<8x36xbf16>, vector<36x512xbf16>, vector<8x512xf32> -> vector<8x512xf32>
    %40 = vector.extract_strided_slice %3 {offsets = [0, 0], sizes = [8, 1], strides = [1, 1]} : vector<8x36xf32> to vector<8x1xf32>
    %41 = vector.broadcast %40 : vector<8x1xf32> to vector<8x512xf32>
    %42 = arith.addf %39, %41 : vector<8x512xf32>
    %cst_14 = arith.constant 0.000000e+00 : f32
    %43 = vector.broadcast %cst_14 : f32 to vector<8x512xf32>
    %44 = arith.maximumf %42, %43 : vector<8x512xf32>
    %45 = vector.extract_strided_slice %3 {offsets = [0, 2], sizes = [8, 9], strides = [1, 1]} : vector<8x36xf32> to vector<8x9xf32>
    %46 = vector.extract_strided_slice %3 {offsets = [0, 1], sizes = [8, 1], strides = [1, 1]} : vector<8x36xf32> to vector<8x1xf32>
    %47 = vector.extract_strided_slice %45 {offsets = [0, 4], sizes = [8, 1], strides = [1, 1]} : vector<8x9xf32> to vector<8x1xf32>
    %48 = vector.broadcast %47 : vector<8x1xf32> to vector<8x512xf32>
    %49 = arith.mulf %44, %48 : vector<8x512xf32>
    %c17_i32_15 = arith.constant 17 : i32
    %50 = tpu.dynamic_rotate %44 by %c17_i32_15 dim 1 : vector<8x512xf32>, i32 -> vector<8x512xf32>
    %51 = vector.broadcast %5 : vector<1x512xf32> to vector<8x512xf32>
    %52 = arith.mulf %50, %51 : vector<8x512xf32>
    %53 = vector.extract_strided_slice %45 {offsets = [0, 0], sizes = [8, 1], strides = [1, 1]} : vector<8x9xf32> to vector<8x1xf32>
    %54 = vector.broadcast %53 : vector<8x1xf32> to vector<8x512xf32>
    %55 = arith.mulf %52, %54 : vector<8x512xf32>
    %56 = arith.addf %49, %55 : vector<8x512xf32>
    %c16_i32_16 = arith.constant 16 : i32
    %57 = tpu.dynamic_rotate %44 by %c16_i32_16 dim 1 : vector<8x512xf32>, i32 -> vector<8x512xf32>
    %58 = vector.broadcast %9 : vector<1x512xf32> to vector<8x512xf32>
    %59 = arith.mulf %57, %58 : vector<8x512xf32>
    %60 = vector.extract_strided_slice %45 {offsets = [0, 1], sizes = [8, 1], strides = [1, 1]} : vector<8x9xf32> to vector<8x1xf32>
    %61 = vector.broadcast %60 : vector<8x1xf32> to vector<8x512xf32>
    %62 = arith.mulf %59, %61 : vector<8x512xf32>
    %63 = arith.addf %56, %62 : vector<8x512xf32>
    %c15_i32_17 = arith.constant 15 : i32
    %64 = tpu.dynamic_rotate %44 by %c15_i32_17 dim 1 : vector<8x512xf32>, i32 -> vector<8x512xf32>
    %65 = vector.broadcast %13 : vector<1x512xf32> to vector<8x512xf32>
    %66 = arith.mulf %64, %65 : vector<8x512xf32>
    %67 = vector.extract_strided_slice %45 {offsets = [0, 2], sizes = [8, 1], strides = [1, 1]} : vector<8x9xf32> to vector<8x1xf32>
    %68 = vector.broadcast %67 : vector<8x1xf32> to vector<8x512xf32>
    %69 = arith.mulf %66, %68 : vector<8x512xf32>
    %70 = arith.addf %63, %69 : vector<8x512xf32>
    %c1_i32_18 = arith.constant 1 : i32
    %71 = tpu.dynamic_rotate %44 by %c1_i32_18 dim 1 : vector<8x512xf32>, i32 -> vector<8x512xf32>
    %72 = vector.broadcast %17 : vector<1x512xf32> to vector<8x512xf32>
    %73 = arith.mulf %71, %72 : vector<8x512xf32>
    %74 = vector.extract_strided_slice %45 {offsets = [0, 3], sizes = [8, 1], strides = [1, 1]} : vector<8x9xf32> to vector<8x1xf32>
    %75 = vector.broadcast %74 : vector<8x1xf32> to vector<8x512xf32>
    %76 = arith.mulf %73, %75 : vector<8x512xf32>
    %77 = arith.addf %70, %76 : vector<8x512xf32>
    %c511_i32_19 = arith.constant 511 : i32
    %78 = tpu.dynamic_rotate %44 by %c511_i32_19 dim 1 : vector<8x512xf32>, i32 -> vector<8x512xf32>
    %79 = vector.broadcast %21 : vector<1x512xf32> to vector<8x512xf32>
    %80 = arith.mulf %78, %79 : vector<8x512xf32>
    %81 = vector.extract_strided_slice %45 {offsets = [0, 5], sizes = [8, 1], strides = [1, 1]} : vector<8x9xf32> to vector<8x1xf32>
    %82 = vector.broadcast %81 : vector<8x1xf32> to vector<8x512xf32>
    %83 = arith.mulf %80, %82 : vector<8x512xf32>
    %84 = arith.addf %77, %83 : vector<8x512xf32>
    %c497_i32_20 = arith.constant 497 : i32
    %85 = tpu.dynamic_rotate %44 by %c497_i32_20 dim 1 : vector<8x512xf32>, i32 -> vector<8x512xf32>
    %86 = vector.broadcast %25 : vector<1x512xf32> to vector<8x512xf32>
    %87 = arith.mulf %85, %86 : vector<8x512xf32>
    %88 = vector.extract_strided_slice %45 {offsets = [0, 6], sizes = [8, 1], strides = [1, 1]} : vector<8x9xf32> to vector<8x1xf32>
    %89 = vector.broadcast %88 : vector<8x1xf32> to vector<8x512xf32>
    %90 = arith.mulf %87, %89 : vector<8x512xf32>
    %91 = arith.addf %84, %90 : vector<8x512xf32>
    %c496_i32_21 = arith.constant 496 : i32
    %92 = tpu.dynamic_rotate %44 by %c496_i32_21 dim 1 : vector<8x512xf32>, i32 -> vector<8x512xf32>
    %93 = vector.broadcast %29 : vector<1x512xf32> to vector<8x512xf32>
    %94 = arith.mulf %92, %93 : vector<8x512xf32>
    %95 = vector.extract_strided_slice %45 {offsets = [0, 7], sizes = [8, 1], strides = [1, 1]} : vector<8x9xf32> to vector<8x1xf32>
    %96 = vector.broadcast %95 : vector<8x1xf32> to vector<8x512xf32>
    %97 = arith.mulf %94, %96 : vector<8x512xf32>
    %98 = arith.addf %91, %97 : vector<8x512xf32>
    %c495_i32_22 = arith.constant 495 : i32
    %99 = tpu.dynamic_rotate %44 by %c495_i32_22 dim 1 : vector<8x512xf32>, i32 -> vector<8x512xf32>
    %100 = vector.broadcast %33 : vector<1x512xf32> to vector<8x512xf32>
    %101 = arith.mulf %99, %100 : vector<8x512xf32>
    %102 = vector.extract_strided_slice %45 {offsets = [0, 8], sizes = [8, 1], strides = [1, 1]} : vector<8x9xf32> to vector<8x1xf32>
    %103 = vector.broadcast %102 : vector<8x1xf32> to vector<8x512xf32>
    %104 = arith.mulf %101, %103 : vector<8x512xf32>
    %105 = arith.addf %98, %104 : vector<8x512xf32>
    %106 = vector.broadcast %46 : vector<8x1xf32> to vector<8x512xf32>
    %107 = arith.addf %105, %106 : vector<8x512xf32>
    %cst_23 = arith.constant 0.000000e+00 : f32
    %108 = vector.broadcast %cst_23 : f32 to vector<8x512xf32>
    %109 = arith.maximumf %107, %108 : vector<8x512xf32>
    %110 = vector.extract_strided_slice %44 {offsets = [0, 0], sizes = [4, 512], strides = [1, 1]} : vector<8x512xf32> to vector<4x512xf32>
    %111 = vector.extract_strided_slice %3 {offsets = [0, 11], sizes = [4, 1], strides = [1, 1]} : vector<8x36xf32> to vector<4x1xf32>
    %112 = vector.broadcast %111 : vector<4x1xf32> to vector<4x512xf32>
    %113 = arith.mulf %110, %112 : vector<4x512xf32>
    %114 = vector.extract_strided_slice %3 {offsets = [0, 12], sizes = [4, 1], strides = [1, 1]} : vector<8x36xf32> to vector<4x1xf32>
    %115 = vector.broadcast %114 : vector<4x1xf32> to vector<4x512xf32>
    %116 = arith.addf %113, %115 : vector<4x512xf32>
    %cst_24 = arith.constant 0.000000e+00 : f32
    %117 = vector.broadcast %cst_24 : f32 to vector<4x512xf32>
    %118 = arith.maximumf %116, %117 : vector<4x512xf32>
    %119 = vector.extract_strided_slice %109 {offsets = [0, 0], sizes = [4, 512], strides = [1, 1]} : vector<8x512xf32> to vector<4x512xf32>
    %120 = vector.extract_strided_slice %3 {offsets = [0, 13], sizes = [4, 1], strides = [1, 1]} : vector<8x36xf32> to vector<4x1xf32>
    %121 = vector.broadcast %120 : vector<4x1xf32> to vector<4x512xf32>
    %122 = arith.mulf %119, %121 : vector<4x512xf32>
    %123 = vector.extract_strided_slice %3 {offsets = [0, 14], sizes = [4, 1], strides = [1, 1]} : vector<8x36xf32> to vector<4x1xf32>
    %124 = vector.broadcast %123 : vector<4x1xf32> to vector<4x512xf32>
    %125 = arith.addf %122, %124 : vector<4x512xf32>
    %cst_25 = arith.constant 0.000000e+00 : f32
    %126 = vector.broadcast %cst_25 : f32 to vector<4x512xf32>
    %127 = arith.maximumf %125, %126 : vector<4x512xf32>
    %128 = vector.extract_strided_slice %44 {offsets = [4, 0], sizes = [4, 512], strides = [1, 1]} : vector<8x512xf32> to vector<4x512xf32>
    %129 = vector.extract_strided_slice %3 {offsets = [0, 15], sizes = [4, 1], strides = [1, 1]} : vector<8x36xf32> to vector<4x1xf32>
    %130 = vector.broadcast %129 : vector<4x1xf32> to vector<4x512xf32>
    %131 = arith.mulf %128, %130 : vector<4x512xf32>
    %132 = vector.extract_strided_slice %3 {offsets = [0, 16], sizes = [4, 1], strides = [1, 1]} : vector<8x36xf32> to vector<4x1xf32>
    %133 = vector.broadcast %132 : vector<4x1xf32> to vector<4x512xf32>
    %134 = arith.addf %131, %133 : vector<4x512xf32>
    %135 = vector.extract_strided_slice %109 {offsets = [4, 0], sizes = [4, 512], strides = [1, 1]} : vector<8x512xf32> to vector<4x512xf32>
    %136 = vector.extract_strided_slice %3 {offsets = [0, 17], sizes = [4, 1], strides = [1, 1]} : vector<8x36xf32> to vector<4x1xf32>
    %137 = vector.broadcast %136 : vector<4x1xf32> to vector<4x512xf32>
    %138 = arith.mulf %135, %137 : vector<4x512xf32>
    %139 = vector.extract_strided_slice %3 {offsets = [0, 18], sizes = [4, 1], strides = [1, 1]} : vector<8x36xf32> to vector<4x1xf32>
    %140 = vector.broadcast %139 : vector<4x1xf32> to vector<4x512xf32>
    %141 = arith.addf %138, %140 : vector<4x512xf32>
    %142 = vector.extract_strided_slice %2 {offsets = [0, 36], sizes = [4, 36], strides = [1, 1]} : vector<8x206xbf16> to vector<4x36xbf16>
    %c17_i32_26 = arith.constant 17 : i32
    %143 = tpu.dynamic_rotate %118 by %c17_i32_26 dim 1 : vector<4x512xf32>, i32 -> vector<4x512xf32>
    %144 = vector.broadcast %5 : vector<1x512xf32> to vector<4x512xf32>
    %145 = arith.mulf %143, %144 : vector<4x512xf32>
    %c16_i32_27 = arith.constant 16 : i32
    %146 = tpu.dynamic_rotate %118 by %c16_i32_27 dim 1 : vector<4x512xf32>, i32 -> vector<4x512xf32>
    %147 = vector.broadcast %9 : vector<1x512xf32> to vector<4x512xf32>
    %148 = arith.mulf %146, %147 : vector<4x512xf32>
    %c15_i32_28 = arith.constant 15 : i32
    %149 = tpu.dynamic_rotate %118 by %c15_i32_28 dim 1 : vector<4x512xf32>, i32 -> vector<4x512xf32>
    %150 = vector.broadcast %13 : vector<1x512xf32> to vector<4x512xf32>
    %151 = arith.mulf %149, %150 : vector<4x512xf32>
    %c1_i32_29 = arith.constant 1 : i32
    %152 = tpu.dynamic_rotate %118 by %c1_i32_29 dim 1 : vector<4x512xf32>, i32 -> vector<4x512xf32>
    %153 = vector.broadcast %17 : vector<1x512xf32> to vector<4x512xf32>
    %154 = arith.mulf %152, %153 : vector<4x512xf32>
    %c511_i32_30 = arith.constant 511 : i32
    %155 = tpu.dynamic_rotate %118 by %c511_i32_30 dim 1 : vector<4x512xf32>, i32 -> vector<4x512xf32>
    %156 = vector.broadcast %21 : vector<1x512xf32> to vector<4x512xf32>
    %157 = arith.mulf %155, %156 : vector<4x512xf32>
    %c497_i32_31 = arith.constant 497 : i32
    %158 = tpu.dynamic_rotate %118 by %c497_i32_31 dim 1 : vector<4x512xf32>, i32 -> vector<4x512xf32>
    %159 = vector.broadcast %25 : vector<1x512xf32> to vector<4x512xf32>
    %160 = arith.mulf %158, %159 : vector<4x512xf32>
    %c496_i32_32 = arith.constant 496 : i32
    %161 = tpu.dynamic_rotate %118 by %c496_i32_32 dim 1 : vector<4x512xf32>, i32 -> vector<4x512xf32>
    %162 = vector.broadcast %29 : vector<1x512xf32> to vector<4x512xf32>
    %163 = arith.mulf %161, %162 : vector<4x512xf32>
    %c495_i32_33 = arith.constant 495 : i32
    %164 = tpu.dynamic_rotate %118 by %c495_i32_33 dim 1 : vector<4x512xf32>, i32 -> vector<4x512xf32>
    %165 = vector.broadcast %33 : vector<1x512xf32> to vector<4x512xf32>
    %166 = arith.mulf %164, %165 : vector<4x512xf32>
    %167 = tpu.concatenate %145, %148, %151, %154, %118, %157, %160, %163, %166 in 0 : vector<4x512xf32>, vector<4x512xf32>, vector<4x512xf32>, vector<4x512xf32>, vector<4x512xf32>, vector<4x512xf32>, vector<4x512xf32>, vector<4x512xf32>, vector<4x512xf32> -> vector<36x512xf32>
    %168 = arith.truncf %167 : vector<36x512xf32> to vector<36x512xbf16>
    %cst_34 = arith.constant dense<0.000000e+00> : vector<4x512xf32>
    %169 = tpu.matmul %142, %168, %cst_34 {dimension_numbers = #tpu.dot_dimension_numbers<[1], [0], [0], [1], [0, 0, 1, 1], [], []>} : vector<4x36xbf16>, vector<36x512xbf16>, vector<4x512xf32> -> vector<4x512xf32>
    %170 = vector.extract_strided_slice %2 {offsets = [0, 72], sizes = [4, 36], strides = [1, 1]} : vector<8x206xbf16> to vector<4x36xbf16>
    %c17_i32_35 = arith.constant 17 : i32
    %171 = tpu.dynamic_rotate %127 by %c17_i32_35 dim 1 : vector<4x512xf32>, i32 -> vector<4x512xf32>
    %172 = vector.broadcast %5 : vector<1x512xf32> to vector<4x512xf32>
    %173 = arith.mulf %171, %172 : vector<4x512xf32>
    %c16_i32_36 = arith.constant 16 : i32
    %174 = tpu.dynamic_rotate %127 by %c16_i32_36 dim 1 : vector<4x512xf32>, i32 -> vector<4x512xf32>
    %175 = vector.broadcast %9 : vector<1x512xf32> to vector<4x512xf32>
    %176 = arith.mulf %174, %175 : vector<4x512xf32>
    %c15_i32_37 = arith.constant 15 : i32
    %177 = tpu.dynamic_rotate %127 by %c15_i32_37 dim 1 : vector<4x512xf32>, i32 -> vector<4x512xf32>
    %178 = vector.broadcast %13 : vector<1x512xf32> to vector<4x512xf32>
    %179 = arith.mulf %177, %178 : vector<4x512xf32>
    %c1_i32_38 = arith.constant 1 : i32
    %180 = tpu.dynamic_rotate %127 by %c1_i32_38 dim 1 : vector<4x512xf32>, i32 -> vector<4x512xf32>
    %181 = vector.broadcast %17 : vector<1x512xf32> to vector<4x512xf32>
    %182 = arith.mulf %180, %181 : vector<4x512xf32>
    %c511_i32_39 = arith.constant 511 : i32
    %183 = tpu.dynamic_rotate %127 by %c511_i32_39 dim 1 : vector<4x512xf32>, i32 -> vector<4x512xf32>
    %184 = vector.broadcast %21 : vector<1x512xf32> to vector<4x512xf32>
    %185 = arith.mulf %183, %184 : vector<4x512xf32>
    %c497_i32_40 = arith.constant 497 : i32
    %186 = tpu.dynamic_rotate %127 by %c497_i32_40 dim 1 : vector<4x512xf32>, i32 -> vector<4x512xf32>
    %187 = vector.broadcast %25 : vector<1x512xf32> to vector<4x512xf32>
    %188 = arith.mulf %186, %187 : vector<4x512xf32>
    %c496_i32_41 = arith.constant 496 : i32
    %189 = tpu.dynamic_rotate %127 by %c496_i32_41 dim 1 : vector<4x512xf32>, i32 -> vector<4x512xf32>
    %190 = vector.broadcast %29 : vector<1x512xf32> to vector<4x512xf32>
    %191 = arith.mulf %189, %190 : vector<4x512xf32>
    %c495_i32_42 = arith.constant 495 : i32
    %192 = tpu.dynamic_rotate %127 by %c495_i32_42 dim 1 : vector<4x512xf32>, i32 -> vector<4x512xf32>
    %193 = vector.broadcast %33 : vector<1x512xf32> to vector<4x512xf32>
    %194 = arith.mulf %192, %193 : vector<4x512xf32>
    %195 = tpu.concatenate %173, %176, %179, %182, %127, %185, %188, %191, %194 in 0 : vector<4x512xf32>, vector<4x512xf32>, vector<4x512xf32>, vector<4x512xf32>, vector<4x512xf32>, vector<4x512xf32>, vector<4x512xf32>, vector<4x512xf32>, vector<4x512xf32> -> vector<36x512xf32>
    %196 = arith.truncf %195 : vector<36x512xf32> to vector<36x512xbf16>
    %cst_43 = arith.constant dense<0.000000e+00> : vector<4x512xf32>
    %197 = tpu.matmul %170, %196, %cst_43 {dimension_numbers = #tpu.dot_dimension_numbers<[1], [0], [0], [1], [0, 0, 1, 1], [], []>} : vector<4x36xbf16>, vector<36x512xbf16>, vector<4x512xf32> -> vector<4x512xf32>
    %198 = arith.addf %169, %197 : vector<4x512xf32>
    %199 = vector.extract_strided_slice %3 {offsets = [0, 19], sizes = [4, 1], strides = [1, 1]} : vector<8x36xf32> to vector<4x1xf32>
    %200 = vector.broadcast %199 : vector<4x1xf32> to vector<4x512xf32>
    %201 = arith.addf %198, %200 : vector<4x512xf32>
    %cst_44 = arith.constant 0.000000e+00 : f32
    %202 = vector.broadcast %cst_44 : f32 to vector<4x512xf32>
    %203 = arith.maximumf %201, %202 : vector<4x512xf32>
    %204 = vector.extract_strided_slice %3 {offsets = [0, 20], sizes = [4, 9], strides = [1, 1]} : vector<8x36xf32> to vector<4x9xf32>
    %205 = vector.extract_strided_slice %3 {offsets = [0, 29], sizes = [4, 1], strides = [1, 1]} : vector<8x36xf32> to vector<4x1xf32>
    %206 = vector.extract_strided_slice %204 {offsets = [0, 4], sizes = [4, 1], strides = [1, 1]} : vector<4x9xf32> to vector<4x1xf32>
    %207 = vector.broadcast %206 : vector<4x1xf32> to vector<4x512xf32>
    %208 = arith.mulf %203, %207 : vector<4x512xf32>
    %c17_i32_45 = arith.constant 17 : i32
    %209 = tpu.dynamic_rotate %203 by %c17_i32_45 dim 1 : vector<4x512xf32>, i32 -> vector<4x512xf32>
    %210 = vector.broadcast %5 : vector<1x512xf32> to vector<4x512xf32>
    %211 = arith.mulf %209, %210 : vector<4x512xf32>
    %212 = vector.extract_strided_slice %204 {offsets = [0, 0], sizes = [4, 1], strides = [1, 1]} : vector<4x9xf32> to vector<4x1xf32>
    %213 = vector.broadcast %212 : vector<4x1xf32> to vector<4x512xf32>
    %214 = arith.mulf %211, %213 : vector<4x512xf32>
    %215 = arith.addf %208, %214 : vector<4x512xf32>
    %c16_i32_46 = arith.constant 16 : i32
    %216 = tpu.dynamic_rotate %203 by %c16_i32_46 dim 1 : vector<4x512xf32>, i32 -> vector<4x512xf32>
    %217 = vector.broadcast %9 : vector<1x512xf32> to vector<4x512xf32>
    %218 = arith.mulf %216, %217 : vector<4x512xf32>
    %219 = vector.extract_strided_slice %204 {offsets = [0, 1], sizes = [4, 1], strides = [1, 1]} : vector<4x9xf32> to vector<4x1xf32>
    %220 = vector.broadcast %219 : vector<4x1xf32> to vector<4x512xf32>
    %221 = arith.mulf %218, %220 : vector<4x512xf32>
    %222 = arith.addf %215, %221 : vector<4x512xf32>
    %c15_i32_47 = arith.constant 15 : i32
    %223 = tpu.dynamic_rotate %203 by %c15_i32_47 dim 1 : vector<4x512xf32>, i32 -> vector<4x512xf32>
    %224 = vector.broadcast %13 : vector<1x512xf32> to vector<4x512xf32>
    %225 = arith.mulf %223, %224 : vector<4x512xf32>
    %226 = vector.extract_strided_slice %204 {offsets = [0, 2], sizes = [4, 1], strides = [1, 1]} : vector<4x9xf32> to vector<4x1xf32>
    %227 = vector.broadcast %226 : vector<4x1xf32> to vector<4x512xf32>
    %228 = arith.mulf %225, %227 : vector<4x512xf32>
    %229 = arith.addf %222, %228 : vector<4x512xf32>
    %c1_i32_48 = arith.constant 1 : i32
    %230 = tpu.dynamic_rotate %203 by %c1_i32_48 dim 1 : vector<4x512xf32>, i32 -> vector<4x512xf32>
    %231 = vector.broadcast %17 : vector<1x512xf32> to vector<4x512xf32>
    %232 = arith.mulf %230, %231 : vector<4x512xf32>
    %233 = vector.extract_strided_slice %204 {offsets = [0, 3], sizes = [4, 1], strides = [1, 1]} : vector<4x9xf32> to vector<4x1xf32>
    %234 = vector.broadcast %233 : vector<4x1xf32> to vector<4x512xf32>
    %235 = arith.mulf %232, %234 : vector<4x512xf32>
    %236 = arith.addf %229, %235 : vector<4x512xf32>
    %c511_i32_49 = arith.constant 511 : i32
    %237 = tpu.dynamic_rotate %203 by %c511_i32_49 dim 1 : vector<4x512xf32>, i32 -> vector<4x512xf32>
    %238 = vector.broadcast %21 : vector<1x512xf32> to vector<4x512xf32>
    %239 = arith.mulf %237, %238 : vector<4x512xf32>
    %240 = vector.extract_strided_slice %204 {offsets = [0, 5], sizes = [4, 1], strides = [1, 1]} : vector<4x9xf32> to vector<4x1xf32>
    %241 = vector.broadcast %240 : vector<4x1xf32> to vector<4x512xf32>
    %242 = arith.mulf %239, %241 : vector<4x512xf32>
    %243 = arith.addf %236, %242 : vector<4x512xf32>
    %c497_i32_50 = arith.constant 497 : i32
    %244 = tpu.dynamic_rotate %203 by %c497_i32_50 dim 1 : vector<4x512xf32>, i32 -> vector<4x512xf32>
    %245 = vector.broadcast %25 : vector<1x512xf32> to vector<4x512xf32>
    %246 = arith.mulf %244, %245 : vector<4x512xf32>
    %247 = vector.extract_strided_slice %204 {offsets = [0, 6], sizes = [4, 1], strides = [1, 1]} : vector<4x9xf32> to vector<4x1xf32>
    %248 = vector.broadcast %247 : vector<4x1xf32> to vector<4x512xf32>
    %249 = arith.mulf %246, %248 : vector<4x512xf32>
    %250 = arith.addf %243, %249 : vector<4x512xf32>
    %c496_i32_51 = arith.constant 496 : i32
    %251 = tpu.dynamic_rotate %203 by %c496_i32_51 dim 1 : vector<4x512xf32>, i32 -> vector<4x512xf32>
    %252 = vector.broadcast %29 : vector<1x512xf32> to vector<4x512xf32>
    %253 = arith.mulf %251, %252 : vector<4x512xf32>
    %254 = vector.extract_strided_slice %204 {offsets = [0, 7], sizes = [4, 1], strides = [1, 1]} : vector<4x9xf32> to vector<4x1xf32>
    %255 = vector.broadcast %254 : vector<4x1xf32> to vector<4x512xf32>
    %256 = arith.mulf %253, %255 : vector<4x512xf32>
    %257 = arith.addf %250, %256 : vector<4x512xf32>
    %c495_i32_52 = arith.constant 495 : i32
    %258 = tpu.dynamic_rotate %203 by %c495_i32_52 dim 1 : vector<4x512xf32>, i32 -> vector<4x512xf32>
    %259 = vector.broadcast %33 : vector<1x512xf32> to vector<4x512xf32>
    %260 = arith.mulf %258, %259 : vector<4x512xf32>
    %261 = vector.extract_strided_slice %204 {offsets = [0, 8], sizes = [4, 1], strides = [1, 1]} : vector<4x9xf32> to vector<4x1xf32>
    %262 = vector.broadcast %261 : vector<4x1xf32> to vector<4x512xf32>
    %263 = arith.mulf %260, %262 : vector<4x512xf32>
    %264 = arith.addf %257, %263 : vector<4x512xf32>
    %265 = vector.broadcast %205 : vector<4x1xf32> to vector<4x512xf32>
    %266 = arith.addf %264, %265 : vector<4x512xf32>
    %cst_53 = arith.constant 0.000000e+00 : f32
    %267 = vector.broadcast %cst_53 : f32 to vector<4x512xf32>
    %268 = arith.maximumf %266, %267 : vector<4x512xf32>
    %269 = vector.extract_strided_slice %3 {offsets = [0, 30], sizes = [4, 1], strides = [1, 1]} : vector<8x36xf32> to vector<4x1xf32>
    %270 = vector.broadcast %269 : vector<4x1xf32> to vector<4x512xf32>
    %271 = arith.mulf %203, %270 : vector<4x512xf32>
    %272 = vector.extract_strided_slice %3 {offsets = [0, 31], sizes = [4, 1], strides = [1, 1]} : vector<8x36xf32> to vector<4x1xf32>
    %273 = vector.broadcast %272 : vector<4x1xf32> to vector<4x512xf32>
    %274 = arith.addf %271, %273 : vector<4x512xf32>
    %275 = vector.extract_strided_slice %3 {offsets = [0, 32], sizes = [4, 1], strides = [1, 1]} : vector<8x36xf32> to vector<4x1xf32>
    %276 = vector.broadcast %275 : vector<4x1xf32> to vector<4x512xf32>
    %277 = arith.mulf %268, %276 : vector<4x512xf32>
    %278 = vector.extract_strided_slice %3 {offsets = [0, 33], sizes = [4, 1], strides = [1, 1]} : vector<8x36xf32> to vector<4x1xf32>
    %279 = vector.broadcast %278 : vector<4x1xf32> to vector<4x512xf32>
    %280 = arith.addf %277, %279 : vector<4x512xf32>
    %281 = vector.extract_strided_slice %3 {offsets = [0, 34], sizes = [3, 1], strides = [1, 1]} : vector<8x36xf32> to vector<3x1xf32>
    %cst_54 = arith.constant 0.000000e+00 : f32
    %282 = vector.broadcast %cst_54 : f32 to vector<1x1xf32>
    %c49 = arith.constant 49 : index
    %c0_55 = arith.constant 0 : index
    %283 = vector.load %arg2[%c49, %c0_55] : memref<51x512xf32, #tpu.memory_space<vmem>>, vector<1x512xf32>
    %284 = vector.broadcast %283 : vector<1x512xf32> to vector<4x512xf32>
    %285 = arith.mulf %274, %284 : vector<4x512xf32>
    %cst_56 = arith.constant dense<0.000000e+00> : vector<4xf32>
    %286 = vector.multi_reduction <add>, %285, %cst_56 [1] : vector<4x512xf32> to vector<4xf32>
    %287 = vector.shape_cast %286 : vector<4xf32> to vector<4x1xf32>
    %cst_57 = arith.constant 3.906250e-03 : f32
    %288 = vector.broadcast %cst_57 : f32 to vector<4x1xf32>
    %289 = arith.mulf %287, %288 : vector<4x1xf32>
    %290 = vector.broadcast %283 : vector<1x512xf32> to vector<4x512xf32>
    %291 = arith.mulf %280, %290 : vector<4x512xf32>
    %cst_58 = arith.constant dense<0.000000e+00> : vector<4xf32>
    %292 = vector.multi_reduction <add>, %291, %cst_58 [1] : vector<4x512xf32> to vector<4xf32>
    %293 = vector.shape_cast %292 : vector<4xf32> to vector<4x1xf32>
    %cst_59 = arith.constant 3.906250e-03 : f32
    %294 = vector.broadcast %cst_59 : f32 to vector<4x1xf32>
    %295 = arith.mulf %293, %294 : vector<4x1xf32>
    %296 = tpu.concatenate %282, %289, %295, %282 in 0 : vector<1x1xf32>, vector<4x1xf32>, vector<4x1xf32>, vector<1x1xf32> -> vector<10x1xf32>
    %297 = vector.extract_strided_slice %281 {offsets = [0, 0], sizes = [1, 1], strides = [1, 1]} : vector<3x1xf32> to vector<1x1xf32>
    %298 = vector.extract_strided_slice %296 {offsets = [0, 0], sizes = [8, 1], strides = [1, 1]} : vector<10x1xf32> to vector<8x1xf32>
    %299 = vector.broadcast %297 : vector<1x1xf32> to vector<8x1xf32>
    %300 = arith.mulf %299, %298 : vector<8x1xf32>
    %301 = vector.extract_strided_slice %281 {offsets = [1, 0], sizes = [1, 1], strides = [1, 1]} : vector<3x1xf32> to vector<1x1xf32>
    %302 = vector.extract_strided_slice %296 {offsets = [1, 0], sizes = [8, 1], strides = [1, 1]} : vector<10x1xf32> to vector<8x1xf32>
    %303 = vector.broadcast %301 : vector<1x1xf32> to vector<8x1xf32>
    %304 = arith.mulf %303, %302 : vector<8x1xf32>
    %305 = arith.addf %300, %304 : vector<8x1xf32>
    %306 = vector.extract_strided_slice %281 {offsets = [2, 0], sizes = [1, 1], strides = [1, 1]} : vector<3x1xf32> to vector<1x1xf32>
    %307 = vector.extract_strided_slice %296 {offsets = [2, 0], sizes = [8, 1], strides = [1, 1]} : vector<10x1xf32> to vector<8x1xf32>
    %308 = vector.broadcast %306 : vector<1x1xf32> to vector<8x1xf32>
    %309 = arith.mulf %308, %307 : vector<8x1xf32>
    %310 = arith.addf %305, %309 : vector<8x1xf32>
    %cst_60 = arith.constant 0.000000e+00 : f32
    %311 = vector.broadcast %cst_60 : f32 to vector<8x1xf32>
    %312 = arith.subf %311, %310 : vector<8x1xf32>
    %313 = math.exp %312 : vector<8x1xf32>
    %cst_61 = arith.constant 1.000000e+00 : f32
    %314 = vector.broadcast %cst_61 : f32 to vector<8x1xf32>
    %315 = arith.addf %314, %313 : vector<8x1xf32>
    %316 = tpu.reciprocal %315 {approx = true} : vector<8x1xf32> -> vector<8x1xf32>
    %317 = vector.extract_strided_slice %316 {offsets = [0, 0], sizes = [4, 1], strides = [1, 1]} : vector<8x1xf32> to vector<4x1xf32>
    %318 = vector.broadcast %317 : vector<4x1xf32> to vector<4x512xf32>
    %319 = vector.broadcast %283 : vector<1x512xf32> to vector<4x512xf32>
    %320 = arith.mulf %318, %319 : vector<4x512xf32>
    %321 = vector.extract_strided_slice %316 {offsets = [4, 0], sizes = [4, 1], strides = [1, 1]} : vector<8x1xf32> to vector<4x1xf32>
    %322 = vector.broadcast %321 : vector<4x1xf32> to vector<4x512xf32>
    %323 = vector.broadcast %283 : vector<1x512xf32> to vector<4x512xf32>
    %324 = arith.mulf %322, %323 : vector<4x512xf32>
    %c50 = arith.constant 50 : index
    %c0_62 = arith.constant 0 : index
    %325 = vector.load %arg2[%c50, %c0_62] : memref<51x512xf32, #tpu.memory_space<vmem>>, vector<1x512xf32>
    %326 = vector.broadcast %325 : vector<1x512xf32> to vector<4x512xf32>
    %327 = arith.mulf %274, %326 : vector<4x512xf32>
    %cst_63 = arith.constant dense<0.000000e+00> : vector<4xf32>
    %328 = vector.multi_reduction <add>, %327, %cst_63 [1] : vector<4x512xf32> to vector<4xf32>
    %329 = vector.shape_cast %328 : vector<4xf32> to vector<4x1xf32>
    %cst_64 = arith.constant 3.906250e-03 : f32
    %330 = vector.broadcast %cst_64 : f32 to vector<4x1xf32>
    %331 = arith.mulf %329, %330 : vector<4x1xf32>
    %332 = vector.broadcast %325 : vector<1x512xf32> to vector<4x512xf32>
    %333 = arith.mulf %280, %332 : vector<4x512xf32>
    %cst_65 = arith.constant dense<0.000000e+00> : vector<4xf32>
    %334 = vector.multi_reduction <add>, %333, %cst_65 [1] : vector<4x512xf32> to vector<4xf32>
    %335 = vector.shape_cast %334 : vector<4xf32> to vector<4x1xf32>
    %cst_66 = arith.constant 3.906250e-03 : f32
    %336 = vector.broadcast %cst_66 : f32 to vector<4x1xf32>
    %337 = arith.mulf %335, %336 : vector<4x1xf32>
    %338 = tpu.concatenate %282, %331, %337, %282 in 0 : vector<1x1xf32>, vector<4x1xf32>, vector<4x1xf32>, vector<1x1xf32> -> vector<10x1xf32>
    %339 = vector.extract_strided_slice %281 {offsets = [0, 0], sizes = [1, 1], strides = [1, 1]} : vector<3x1xf32> to vector<1x1xf32>
    %340 = vector.extract_strided_slice %338 {offsets = [0, 0], sizes = [8, 1], strides = [1, 1]} : vector<10x1xf32> to vector<8x1xf32>
    %341 = vector.broadcast %339 : vector<1x1xf32> to vector<8x1xf32>
    %342 = arith.mulf %341, %340 : vector<8x1xf32>
    %343 = vector.extract_strided_slice %281 {offsets = [1, 0], sizes = [1, 1], strides = [1, 1]} : vector<3x1xf32> to vector<1x1xf32>
    %344 = vector.extract_strided_slice %338 {offsets = [1, 0], sizes = [8, 1], strides = [1, 1]} : vector<10x1xf32> to vector<8x1xf32>
    %345 = vector.broadcast %343 : vector<1x1xf32> to vector<8x1xf32>
    %346 = arith.mulf %345, %344 : vector<8x1xf32>
    %347 = arith.addf %342, %346 : vector<8x1xf32>
    %348 = vector.extract_strided_slice %281 {offsets = [2, 0], sizes = [1, 1], strides = [1, 1]} : vector<3x1xf32> to vector<1x1xf32>
    %349 = vector.extract_strided_slice %338 {offsets = [2, 0], sizes = [8, 1], strides = [1, 1]} : vector<10x1xf32> to vector<8x1xf32>
    %350 = vector.broadcast %348 : vector<1x1xf32> to vector<8x1xf32>
    %351 = arith.mulf %350, %349 : vector<8x1xf32>
    %352 = arith.addf %347, %351 : vector<8x1xf32>
    %cst_67 = arith.constant 0.000000e+00 : f32
    %353 = vector.broadcast %cst_67 : f32 to vector<8x1xf32>
    %354 = arith.subf %353, %352 : vector<8x1xf32>
    %355 = math.exp %354 : vector<8x1xf32>
    %cst_68 = arith.constant 1.000000e+00 : f32
    %356 = vector.broadcast %cst_68 : f32 to vector<8x1xf32>
    %357 = arith.addf %356, %355 : vector<8x1xf32>
    %358 = tpu.reciprocal %357 {approx = true} : vector<8x1xf32> -> vector<8x1xf32>
    %359 = vector.extract_strided_slice %358 {offsets = [0, 0], sizes = [4, 1], strides = [1, 1]} : vector<8x1xf32> to vector<4x1xf32>
    %360 = vector.broadcast %359 : vector<4x1xf32> to vector<4x512xf32>
    %361 = vector.broadcast %325 : vector<1x512xf32> to vector<4x512xf32>
    %362 = arith.mulf %360, %361 : vector<4x512xf32>
    %363 = vector.extract_strided_slice %358 {offsets = [4, 0], sizes = [4, 1], strides = [1, 1]} : vector<8x1xf32> to vector<4x1xf32>
    %364 = vector.broadcast %363 : vector<4x1xf32> to vector<4x512xf32>
    %365 = vector.broadcast %325 : vector<1x512xf32> to vector<4x512xf32>
    %366 = arith.mulf %364, %365 : vector<4x512xf32>
    %367 = arith.addf %320, %362 : vector<4x512xf32>
    %368 = arith.addf %324, %366 : vector<4x512xf32>
    %369 = arith.mulf %274, %367 : vector<4x512xf32>
    %370 = arith.mulf %280, %368 : vector<4x512xf32>
    %cst_69 = arith.constant dense<0.000000e+00> : vector<512xf32>
    %371 = vector.multi_reduction <add>, %369, %cst_69 [0] : vector<4x512xf32> to vector<512xf32>
    %372 = vector.shape_cast %371 : vector<512xf32> to vector<1x512xf32>
    %cst_70 = arith.constant dense<0.000000e+00> : vector<512xf32>
    %373 = vector.multi_reduction <add>, %370, %cst_70 [0] : vector<4x512xf32> to vector<512xf32>
    %374 = vector.shape_cast %373 : vector<512xf32> to vector<1x512xf32>
    %375 = arith.addf %372, %374 : vector<1x512xf32>
    %cst_71 = arith.constant 1.250000e-01 : f32
    %376 = vector.broadcast %cst_71 : f32 to vector<1x512xf32>
    %377 = arith.mulf %375, %376 : vector<1x512xf32>
    %cst_72 = arith.constant dense<0xFF800000> : vector<512xf32>
    %378 = vector.multi_reduction <maximumf>, %369, %cst_72 [0] : vector<4x512xf32> to vector<512xf32>
    %379 = vector.shape_cast %378 : vector<512xf32> to vector<1x512xf32>
    %cst_73 = arith.constant dense<0xFF800000> : vector<512xf32>
    %380 = vector.multi_reduction <maximumf>, %370, %cst_73 [0] : vector<4x512xf32> to vector<512xf32>
    %381 = vector.shape_cast %380 : vector<512xf32> to vector<1x512xf32>
    %382 = arith.maximumf %379, %381 : vector<1x512xf32>
    %383 = tpu.concatenate %377, %382 in 0 : vector<1x512xf32>, vector<1x512xf32> -> vector<2x512xf32>
    %c51_i32 = arith.constant 51 : i32
    %384 = tpu.dynamic_rotate %383 by %c51_i32 dim 1 : vector<2x512xf32>, i32 -> vector<2x512xf32>
    %c0_74 = arith.constant 0 : index
    %c0_75 = arith.constant 0 : index
    %385 = vector.load %arg2[%c0_74, %c0_75] : memref<51x512xf32, #tpu.memory_space<vmem>>, vector<1x512xf32>
    %386 = vector.broadcast %385 : vector<1x512xf32> to vector<2x512xf32>
    %387 = arith.mulf %384, %386 : vector<2x512xf32>
    %c50_i32 = arith.constant 50 : i32
    %388 = tpu.dynamic_rotate %383 by %c50_i32 dim 1 : vector<2x512xf32>, i32 -> vector<2x512xf32>
    %c1 = arith.constant 1 : index
    %c0_76 = arith.constant 0 : index
    %389 = vector.load %arg2[%c1, %c0_76] : memref<51x512xf32, #tpu.memory_space<vmem>>, vector<1x512xf32>
    %390 = vector.broadcast %389 : vector<1x512xf32> to vector<2x512xf32>
    %391 = arith.mulf %388, %390 : vector<2x512xf32>
    %c49_i32 = arith.constant 49 : i32
    %392 = tpu.dynamic_rotate %383 by %c49_i32 dim 1 : vector<2x512xf32>, i32 -> vector<2x512xf32>
    %c2 = arith.constant 2 : index
    %c0_77 = arith.constant 0 : index
    %393 = vector.load %arg2[%c2, %c0_77] : memref<51x512xf32, #tpu.memory_space<vmem>>, vector<1x512xf32>
    %394 = vector.broadcast %393 : vector<1x512xf32> to vector<2x512xf32>
    %395 = arith.mulf %392, %394 : vector<2x512xf32>
    %c48_i32 = arith.constant 48 : i32
    %396 = tpu.dynamic_rotate %383 by %c48_i32 dim 1 : vector<2x512xf32>, i32 -> vector<2x512xf32>
    %c3 = arith.constant 3 : index
    %c0_78 = arith.constant 0 : index
    %397 = vector.load %arg2[%c3, %c0_78] : memref<51x512xf32, #tpu.memory_space<vmem>>, vector<1x512xf32>
    %398 = vector.broadcast %397 : vector<1x512xf32> to vector<2x512xf32>
    %399 = arith.mulf %396, %398 : vector<2x512xf32>
    %c47_i32 = arith.constant 47 : i32
    %400 = tpu.dynamic_rotate %383 by %c47_i32 dim 1 : vector<2x512xf32>, i32 -> vector<2x512xf32>
    %c4 = arith.constant 4 : index
    %c0_79 = arith.constant 0 : index
    %401 = vector.load %arg2[%c4, %c0_79] : memref<51x512xf32, #tpu.memory_space<vmem>>, vector<1x512xf32>
    %402 = vector.broadcast %401 : vector<1x512xf32> to vector<2x512xf32>
    %403 = arith.mulf %400, %402 : vector<2x512xf32>
    %c46_i32 = arith.constant 46 : i32
    %404 = tpu.dynamic_rotate %383 by %c46_i32 dim 1 : vector<2x512xf32>, i32 -> vector<2x512xf32>
    %c5 = arith.constant 5 : index
    %c0_80 = arith.constant 0 : index
    %405 = vector.load %arg2[%c5, %c0_80] : memref<51x512xf32, #tpu.memory_space<vmem>>, vector<1x512xf32>
    %406 = vector.broadcast %405 : vector<1x512xf32> to vector<2x512xf32>
    %407 = arith.mulf %404, %406 : vector<2x512xf32>
    %c45_i32 = arith.constant 45 : i32
    %408 = tpu.dynamic_rotate %383 by %c45_i32 dim 1 : vector<2x512xf32>, i32 -> vector<2x512xf32>
    %c6 = arith.constant 6 : index
    %c0_81 = arith.constant 0 : index
    %409 = vector.load %arg2[%c6, %c0_81] : memref<51x512xf32, #tpu.memory_space<vmem>>, vector<1x512xf32>
    %410 = vector.broadcast %409 : vector<1x512xf32> to vector<2x512xf32>
    %411 = arith.mulf %408, %410 : vector<2x512xf32>
    %c35_i32 = arith.constant 35 : i32
    %412 = tpu.dynamic_rotate %383 by %c35_i32 dim 1 : vector<2x512xf32>, i32 -> vector<2x512xf32>
    %c7 = arith.constant 7 : index
    %c0_82 = arith.constant 0 : index
    %413 = vector.load %arg2[%c7, %c0_82] : memref<51x512xf32, #tpu.memory_space<vmem>>, vector<1x512xf32>
    %414 = vector.broadcast %413 : vector<1x512xf32> to vector<2x512xf32>
    %415 = arith.mulf %412, %414 : vector<2x512xf32>
    %c34_i32 = arith.constant 34 : i32
    %416 = tpu.dynamic_rotate %383 by %c34_i32 dim 1 : vector<2x512xf32>, i32 -> vector<2x512xf32>
    %c8 = arith.constant 8 : index
    %c0_83 = arith.constant 0 : index
    %417 = vector.load %arg2[%c8, %c0_83] : memref<51x512xf32, #tpu.memory_space<vmem>>, vector<1x512xf32>
    %418 = vector.broadcast %417 : vector<1x512xf32> to vector<2x512xf32>
    %419 = arith.mulf %416, %418 : vector<2x512xf32>
    %c33_i32 = arith.constant 33 : i32
    %420 = tpu.dynamic_rotate %383 by %c33_i32 dim 1 : vector<2x512xf32>, i32 -> vector<2x512xf32>
    %c9 = arith.constant 9 : index
    %c0_84 = arith.constant 0 : index
    %421 = vector.load %arg2[%c9, %c0_84] : memref<51x512xf32, #tpu.memory_space<vmem>>, vector<1x512xf32>
    %422 = vector.broadcast %421 : vector<1x512xf32> to vector<2x512xf32>
    %423 = arith.mulf %420, %422 : vector<2x512xf32>
    %c32_i32 = arith.constant 32 : i32
    %424 = tpu.dynamic_rotate %383 by %c32_i32 dim 1 : vector<2x512xf32>, i32 -> vector<2x512xf32>
    %c10 = arith.constant 10 : index
    %c0_85 = arith.constant 0 : index
    %425 = vector.load %arg2[%c10, %c0_85] : memref<51x512xf32, #tpu.memory_space<vmem>>, vector<1x512xf32>
    %426 = vector.broadcast %425 : vector<1x512xf32> to vector<2x512xf32>
    %427 = arith.mulf %424, %426 : vector<2x512xf32>
    %c31_i32 = arith.constant 31 : i32
    %428 = tpu.dynamic_rotate %383 by %c31_i32 dim 1 : vector<2x512xf32>, i32 -> vector<2x512xf32>
    %c11 = arith.constant 11 : index
    %c0_86 = arith.constant 0 : index
    %429 = vector.load %arg2[%c11, %c0_86] : memref<51x512xf32, #tpu.memory_space<vmem>>, vector<1x512xf32>
    %430 = vector.broadcast %429 : vector<1x512xf32> to vector<2x512xf32>
    %431 = arith.mulf %428, %430 : vector<2x512xf32>
    %c30_i32 = arith.constant 30 : i32
    %432 = tpu.dynamic_rotate %383 by %c30_i32 dim 1 : vector<2x512xf32>, i32 -> vector<2x512xf32>
    %c12 = arith.constant 12 : index
    %c0_87 = arith.constant 0 : index
    %433 = vector.load %arg2[%c12, %c0_87] : memref<51x512xf32, #tpu.memory_space<vmem>>, vector<1x512xf32>
    %434 = vector.broadcast %433 : vector<1x512xf32> to vector<2x512xf32>
    %435 = arith.mulf %432, %434 : vector<2x512xf32>
    %c29_i32 = arith.constant 29 : i32
    %436 = tpu.dynamic_rotate %383 by %c29_i32 dim 1 : vector<2x512xf32>, i32 -> vector<2x512xf32>
    %c13 = arith.constant 13 : index
    %c0_88 = arith.constant 0 : index
    %437 = vector.load %arg2[%c13, %c0_88] : memref<51x512xf32, #tpu.memory_space<vmem>>, vector<1x512xf32>
    %438 = vector.broadcast %437 : vector<1x512xf32> to vector<2x512xf32>
    %439 = arith.mulf %436, %438 : vector<2x512xf32>
    %c19_i32 = arith.constant 19 : i32
    %440 = tpu.dynamic_rotate %383 by %c19_i32 dim 1 : vector<2x512xf32>, i32 -> vector<2x512xf32>
    %c14 = arith.constant 14 : index
    %c0_89 = arith.constant 0 : index
    %441 = vector.load %arg2[%c14, %c0_89] : memref<51x512xf32, #tpu.memory_space<vmem>>, vector<1x512xf32>
    %442 = vector.broadcast %441 : vector<1x512xf32> to vector<2x512xf32>
    %443 = arith.mulf %440, %442 : vector<2x512xf32>
    %c18_i32 = arith.constant 18 : i32
    %444 = tpu.dynamic_rotate %383 by %c18_i32 dim 1 : vector<2x512xf32>, i32 -> vector<2x512xf32>
    %c15 = arith.constant 15 : index
    %c0_90 = arith.constant 0 : index
    %445 = vector.load %arg2[%c15, %c0_90] : memref<51x512xf32, #tpu.memory_space<vmem>>, vector<1x512xf32>
    %446 = vector.broadcast %445 : vector<1x512xf32> to vector<2x512xf32>
    %447 = arith.mulf %444, %446 : vector<2x512xf32>
    %c17_i32_91 = arith.constant 17 : i32
    %448 = tpu.dynamic_rotate %383 by %c17_i32_91 dim 1 : vector<2x512xf32>, i32 -> vector<2x512xf32>
    %449 = vector.broadcast %5 : vector<1x512xf32> to vector<2x512xf32>
    %450 = arith.mulf %448, %449 : vector<2x512xf32>
    %c16_i32_92 = arith.constant 16 : i32
    %451 = tpu.dynamic_rotate %383 by %c16_i32_92 dim 1 : vector<2x512xf32>, i32 -> vector<2x512xf32>
    %452 = vector.broadcast %9 : vector<1x512xf32> to vector<2x512xf32>
    %453 = arith.mulf %451, %452 : vector<2x512xf32>
    %c15_i32_93 = arith.constant 15 : i32
    %454 = tpu.dynamic_rotate %383 by %c15_i32_93 dim 1 : vector<2x512xf32>, i32 -> vector<2x512xf32>
    %455 = vector.broadcast %13 : vector<1x512xf32> to vector<2x512xf32>
    %456 = arith.mulf %454, %455 : vector<2x512xf32>
    %c14_i32 = arith.constant 14 : i32
    %457 = tpu.dynamic_rotate %383 by %c14_i32 dim 1 : vector<2x512xf32>, i32 -> vector<2x512xf32>
    %c19 = arith.constant 19 : index
    %c0_94 = arith.constant 0 : index
    %458 = vector.load %arg2[%c19, %c0_94] : memref<51x512xf32, #tpu.memory_space<vmem>>, vector<1x512xf32>
    %459 = vector.broadcast %458 : vector<1x512xf32> to vector<2x512xf32>
    %460 = arith.mulf %457, %459 : vector<2x512xf32>
    %c13_i32 = arith.constant 13 : i32
    %461 = tpu.dynamic_rotate %383 by %c13_i32 dim 1 : vector<2x512xf32>, i32 -> vector<2x512xf32>
    %c20 = arith.constant 20 : index
    %c0_95 = arith.constant 0 : index
    %462 = vector.load %arg2[%c20, %c0_95] : memref<51x512xf32, #tpu.memory_space<vmem>>, vector<1x512xf32>
    %463 = vector.broadcast %462 : vector<1x512xf32> to vector<2x512xf32>
    %464 = arith.mulf %461, %463 : vector<2x512xf32>
    %c3_i32 = arith.constant 3 : i32
    %465 = tpu.dynamic_rotate %383 by %c3_i32 dim 1 : vector<2x512xf32>, i32 -> vector<2x512xf32>
    %c21 = arith.constant 21 : index
    %c0_96 = arith.constant 0 : index
    %466 = vector.load %arg2[%c21, %c0_96] : memref<51x512xf32, #tpu.memory_space<vmem>>, vector<1x512xf32>
    %467 = vector.broadcast %466 : vector<1x512xf32> to vector<2x512xf32>
    %468 = arith.mulf %465, %467 : vector<2x512xf32>
    %c2_i32 = arith.constant 2 : i32
    %469 = tpu.dynamic_rotate %383 by %c2_i32 dim 1 : vector<2x512xf32>, i32 -> vector<2x512xf32>
    %c22 = arith.constant 22 : index
    %c0_97 = arith.constant 0 : index
    %470 = vector.load %arg2[%c22, %c0_97] : memref<51x512xf32, #tpu.memory_space<vmem>>, vector<1x512xf32>
    %471 = vector.broadcast %470 : vector<1x512xf32> to vector<2x512xf32>
    %472 = arith.mulf %469, %471 : vector<2x512xf32>
    %c1_i32_98 = arith.constant 1 : i32
    %473 = tpu.dynamic_rotate %383 by %c1_i32_98 dim 1 : vector<2x512xf32>, i32 -> vector<2x512xf32>
    %474 = vector.broadcast %17 : vector<1x512xf32> to vector<2x512xf32>
    %475 = arith.mulf %473, %474 : vector<2x512xf32>
    %c511_i32_99 = arith.constant 511 : i32
    %476 = tpu.dynamic_rotate %383 by %c511_i32_99 dim 1 : vector<2x512xf32>, i32 -> vector<2x512xf32>
    %477 = vector.broadcast %21 : vector<1x512xf32> to vector<2x512xf32>
    %478 = arith.mulf %476, %477 : vector<2x512xf32>
    %c510_i32 = arith.constant 510 : i32
    %479 = tpu.dynamic_rotate %383 by %c510_i32 dim 1 : vector<2x512xf32>, i32 -> vector<2x512xf32>
    %c26 = arith.constant 26 : index
    %c0_100 = arith.constant 0 : index
    %480 = vector.load %arg2[%c26, %c0_100] : memref<51x512xf32, #tpu.memory_space<vmem>>, vector<1x512xf32>
    %481 = vector.broadcast %480 : vector<1x512xf32> to vector<2x512xf32>
    %482 = arith.mulf %479, %481 : vector<2x512xf32>
    %c509_i32 = arith.constant 509 : i32
    %483 = tpu.dynamic_rotate %383 by %c509_i32 dim 1 : vector<2x512xf32>, i32 -> vector<2x512xf32>
    %c27 = arith.constant 27 : index
    %c0_101 = arith.constant 0 : index
    %484 = vector.load %arg2[%c27, %c0_101] : memref<51x512xf32, #tpu.memory_space<vmem>>, vector<1x512xf32>
    %485 = vector.broadcast %484 : vector<1x512xf32> to vector<2x512xf32>
    %486 = arith.mulf %483, %485 : vector<2x512xf32>
    %c499_i32 = arith.constant 499 : i32
    %487 = tpu.dynamic_rotate %383 by %c499_i32 dim 1 : vector<2x512xf32>, i32 -> vector<2x512xf32>
    %c28 = arith.constant 28 : index
    %c0_102 = arith.constant 0 : index
    %488 = vector.load %arg2[%c28, %c0_102] : memref<51x512xf32, #tpu.memory_space<vmem>>, vector<1x512xf32>
    %489 = vector.broadcast %488 : vector<1x512xf32> to vector<2x512xf32>
    %490 = arith.mulf %487, %489 : vector<2x512xf32>
    %c498_i32 = arith.constant 498 : i32
    %491 = tpu.dynamic_rotate %383 by %c498_i32 dim 1 : vector<2x512xf32>, i32 -> vector<2x512xf32>
    %c29 = arith.constant 29 : index
    %c0_103 = arith.constant 0 : index
    %492 = vector.load %arg2[%c29, %c0_103] : memref<51x512xf32, #tpu.memory_space<vmem>>, vector<1x512xf32>
    %493 = vector.broadcast %492 : vector<1x512xf32> to vector<2x512xf32>
    %494 = arith.mulf %491, %493 : vector<2x512xf32>
    %c497_i32_104 = arith.constant 497 : i32
    %495 = tpu.dynamic_rotate %383 by %c497_i32_104 dim 1 : vector<2x512xf32>, i32 -> vector<2x512xf32>
    %496 = vector.broadcast %25 : vector<1x512xf32> to vector<2x512xf32>
    %497 = arith.mulf %495, %496 : vector<2x512xf32>
    %c496_i32_105 = arith.constant 496 : i32
    %498 = tpu.dynamic_rotate %383 by %c496_i32_105 dim 1 : vector<2x512xf32>, i32 -> vector<2x512xf32>
    %499 = vector.broadcast %29 : vector<1x512xf32> to vector<2x512xf32>
    %500 = arith.mulf %498, %499 : vector<2x512xf32>
    %c495_i32_106 = arith.constant 495 : i32
    %501 = tpu.dynamic_rotate %383 by %c495_i32_106 dim 1 : vector<2x512xf32>, i32 -> vector<2x512xf32>
    %502 = vector.broadcast %33 : vector<1x512xf32> to vector<2x512xf32>
    %503 = arith.mulf %501, %502 : vector<2x512xf32>
    %c494_i32 = arith.constant 494 : i32
    %504 = tpu.dynamic_rotate %383 by %c494_i32 dim 1 : vector<2x512xf32>, i32 -> vector<2x512xf32>
    %c33 = arith.constant 33 : index
    %c0_107 = arith.constant 0 : index
    %505 = vector.load %arg2[%c33, %c0_107] : memref<51x512xf32, #tpu.memory_space<vmem>>, vector<1x512xf32>
    %506 = vector.broadcast %505 : vector<1x512xf32> to vector<2x512xf32>
    %507 = arith.mulf %504, %506 : vector<2x512xf32>
    %c493_i32 = arith.constant 493 : i32
    %508 = tpu.dynamic_rotate %383 by %c493_i32 dim 1 : vector<2x512xf32>, i32 -> vector<2x512xf32>
    %c34 = arith.constant 34 : index
    %c0_108 = arith.constant 0 : index
    %509 = vector.load %arg2[%c34, %c0_108] : memref<51x512xf32, #tpu.memory_space<vmem>>, vector<1x512xf32>
    %510 = vector.broadcast %509 : vector<1x512xf32> to vector<2x512xf32>
    %511 = arith.mulf %508, %510 : vector<2x512xf32>
    %c483_i32 = arith.constant 483 : i32
    %512 = tpu.dynamic_rotate %383 by %c483_i32 dim 1 : vector<2x512xf32>, i32 -> vector<2x512xf32>
    %c35 = arith.constant 35 : index
    %c0_109 = arith.constant 0 : index
    %513 = vector.load %arg2[%c35, %c0_109] : memref<51x512xf32, #tpu.memory_space<vmem>>, vector<1x512xf32>
    %514 = vector.broadcast %513 : vector<1x512xf32> to vector<2x512xf32>
    %515 = arith.mulf %512, %514 : vector<2x512xf32>
    %c482_i32 = arith.constant 482 : i32
    %516 = tpu.dynamic_rotate %383 by %c482_i32 dim 1 : vector<2x512xf32>, i32 -> vector<2x512xf32>
    %c36 = arith.constant 36 : index
    %c0_110 = arith.constant 0 : index
    %517 = vector.load %arg2[%c36, %c0_110] : memref<51x512xf32, #tpu.memory_space<vmem>>, vector<1x512xf32>
    %518 = vector.broadcast %517 : vector<1x512xf32> to vector<2x512xf32>
    %519 = arith.mulf %516, %518 : vector<2x512xf32>
    %c481_i32 = arith.constant 481 : i32
    %520 = tpu.dynamic_rotate %383 by %c481_i32 dim 1 : vector<2x512xf32>, i32 -> vector<2x512xf32>
    %c37 = arith.constant 37 : index
    %c0_111 = arith.constant 0 : index
    %521 = vector.load %arg2[%c37, %c0_111] : memref<51x512xf32, #tpu.memory_space<vmem>>, vector<1x512xf32>
    %522 = vector.broadcast %521 : vector<1x512xf32> to vector<2x512xf32>
    %523 = arith.mulf %520, %522 : vector<2x512xf32>
    %c480_i32 = arith.constant 480 : i32
    %524 = tpu.dynamic_rotate %383 by %c480_i32 dim 1 : vector<2x512xf32>, i32 -> vector<2x512xf32>
    %c38 = arith.constant 38 : index
    %c0_112 = arith.constant 0 : index
    %525 = vector.load %arg2[%c38, %c0_112] : memref<51x512xf32, #tpu.memory_space<vmem>>, vector<1x512xf32>
    %526 = vector.broadcast %525 : vector<1x512xf32> to vector<2x512xf32>
    %527 = arith.mulf %524, %526 : vector<2x512xf32>
    %c479_i32 = arith.constant 479 : i32
    %528 = tpu.dynamic_rotate %383 by %c479_i32 dim 1 : vector<2x512xf32>, i32 -> vector<2x512xf32>
    %c39 = arith.constant 39 : index
    %c0_113 = arith.constant 0 : index
    %529 = vector.load %arg2[%c39, %c0_113] : memref<51x512xf32, #tpu.memory_space<vmem>>, vector<1x512xf32>
    %530 = vector.broadcast %529 : vector<1x512xf32> to vector<2x512xf32>
    %531 = arith.mulf %528, %530 : vector<2x512xf32>
    %c478_i32 = arith.constant 478 : i32
    %532 = tpu.dynamic_rotate %383 by %c478_i32 dim 1 : vector<2x512xf32>, i32 -> vector<2x512xf32>
    %c40 = arith.constant 40 : index
    %c0_114 = arith.constant 0 : index
    %533 = vector.load %arg2[%c40, %c0_114] : memref<51x512xf32, #tpu.memory_space<vmem>>, vector<1x512xf32>
    %534 = vector.broadcast %533 : vector<1x512xf32> to vector<2x512xf32>
    %535 = arith.mulf %532, %534 : vector<2x512xf32>
    %c477_i32 = arith.constant 477 : i32
    %536 = tpu.dynamic_rotate %383 by %c477_i32 dim 1 : vector<2x512xf32>, i32 -> vector<2x512xf32>
    %c41 = arith.constant 41 : index
    %c0_115 = arith.constant 0 : index
    %537 = vector.load %arg2[%c41, %c0_115] : memref<51x512xf32, #tpu.memory_space<vmem>>, vector<1x512xf32>
    %538 = vector.broadcast %537 : vector<1x512xf32> to vector<2x512xf32>
    %539 = arith.mulf %536, %538 : vector<2x512xf32>
    %c467_i32 = arith.constant 467 : i32
    %540 = tpu.dynamic_rotate %383 by %c467_i32 dim 1 : vector<2x512xf32>, i32 -> vector<2x512xf32>
    %c42 = arith.constant 42 : index
    %c0_116 = arith.constant 0 : index
    %541 = vector.load %arg2[%c42, %c0_116] : memref<51x512xf32, #tpu.memory_space<vmem>>, vector<1x512xf32>
    %542 = vector.broadcast %541 : vector<1x512xf32> to vector<2x512xf32>
    %543 = arith.mulf %540, %542 : vector<2x512xf32>
    %c466_i32 = arith.constant 466 : i32
    %544 = tpu.dynamic_rotate %383 by %c466_i32 dim 1 : vector<2x512xf32>, i32 -> vector<2x512xf32>
    %c43 = arith.constant 43 : index
    %c0_117 = arith.constant 0 : index
    %545 = vector.load %arg2[%c43, %c0_117] : memref<51x512xf32, #tpu.memory_space<vmem>>, vector<1x512xf32>
    %546 = vector.broadcast %545 : vector<1x512xf32> to vector<2x512xf32>
    %547 = arith.mulf %544, %546 : vector<2x512xf32>
    %c465_i32 = arith.constant 465 : i32
    %548 = tpu.dynamic_rotate %383 by %c465_i32 dim 1 : vector<2x512xf32>, i32 -> vector<2x512xf32>
    %c44 = arith.constant 44 : index
    %c0_118 = arith.constant 0 : index
    %549 = vector.load %arg2[%c44, %c0_118] : memref<51x512xf32, #tpu.memory_space<vmem>>, vector<1x512xf32>
    %550 = vector.broadcast %549 : vector<1x512xf32> to vector<2x512xf32>
    %551 = arith.mulf %548, %550 : vector<2x512xf32>
    %c464_i32 = arith.constant 464 : i32
    %552 = tpu.dynamic_rotate %383 by %c464_i32 dim 1 : vector<2x512xf32>, i32 -> vector<2x512xf32>
    %c45 = arith.constant 45 : index
    %c0_119 = arith.constant 0 : index
    %553 = vector.load %arg2[%c45, %c0_119] : memref<51x512xf32, #tpu.memory_space<vmem>>, vector<1x512xf32>
    %554 = vector.broadcast %553 : vector<1x512xf32> to vector<2x512xf32>
    %555 = arith.mulf %552, %554 : vector<2x512xf32>
    %c463_i32 = arith.constant 463 : i32
    %556 = tpu.dynamic_rotate %383 by %c463_i32 dim 1 : vector<2x512xf32>, i32 -> vector<2x512xf32>
    %c46 = arith.constant 46 : index
    %c0_120 = arith.constant 0 : index
    %557 = vector.load %arg2[%c46, %c0_120] : memref<51x512xf32, #tpu.memory_space<vmem>>, vector<1x512xf32>
    %558 = vector.broadcast %557 : vector<1x512xf32> to vector<2x512xf32>
    %559 = arith.mulf %556, %558 : vector<2x512xf32>
    %c462_i32 = arith.constant 462 : i32
    %560 = tpu.dynamic_rotate %383 by %c462_i32 dim 1 : vector<2x512xf32>, i32 -> vector<2x512xf32>
    %c47 = arith.constant 47 : index
    %c0_121 = arith.constant 0 : index
    %561 = vector.load %arg2[%c47, %c0_121] : memref<51x512xf32, #tpu.memory_space<vmem>>, vector<1x512xf32>
    %562 = vector.broadcast %561 : vector<1x512xf32> to vector<2x512xf32>
    %563 = arith.mulf %560, %562 : vector<2x512xf32>
    %c461_i32 = arith.constant 461 : i32
    %564 = tpu.dynamic_rotate %383 by %c461_i32 dim 1 : vector<2x512xf32>, i32 -> vector<2x512xf32>
    %c48 = arith.constant 48 : index
    %c0_122 = arith.constant 0 : index
    %565 = vector.load %arg2[%c48, %c0_122] : memref<51x512xf32, #tpu.memory_space<vmem>>, vector<1x512xf32>
    %566 = vector.broadcast %565 : vector<1x512xf32> to vector<2x512xf32>
    %567 = arith.mulf %564, %566 : vector<2x512xf32>
    %568 = tpu.concatenate %387, %391, %395, %399, %403, %407, %411, %415, %419, %423, %427, %431, %435, %439, %443, %447 in 0 : vector<2x512xf32>, vector<2x512xf32>, vector<2x512xf32>, vector<2x512xf32>, vector<2x512xf32>, vector<2x512xf32>, vector<2x512xf32>, vector<2x512xf32>, vector<2x512xf32>, vector<2x512xf32>, vector<2x512xf32>, vector<2x512xf32>, vector<2x512xf32>, vector<2x512xf32>, vector<2x512xf32>, vector<2x512xf32> -> vector<32x512xf32>
    %569 = tpu.concatenate %450, %453, %456, %460, %464, %468, %472, %475, %383, %478, %482, %486, %490, %494, %497, %500 in 0 : vector<2x512xf32>, vector<2x512xf32>, vector<2x512xf32>, vector<2x512xf32>, vector<2x512xf32>, vector<2x512xf32>, vector<2x512xf32>, vector<2x512xf32>, vector<2x512xf32>, vector<2x512xf32>, vector<2x512xf32>, vector<2x512xf32>, vector<2x512xf32>, vector<2x512xf32>, vector<2x512xf32>, vector<2x512xf32> -> vector<32x512xf32>
    %570 = tpu.concatenate %503, %507, %511, %515, %519, %523, %527, %531, %535, %539, %543, %547, %551, %555, %559, %563 in 0 : vector<2x512xf32>, vector<2x512xf32>, vector<2x512xf32>, vector<2x512xf32>, vector<2x512xf32>, vector<2x512xf32>, vector<2x512xf32>, vector<2x512xf32>, vector<2x512xf32>, vector<2x512xf32>, vector<2x512xf32>, vector<2x512xf32>, vector<2x512xf32>, vector<2x512xf32>, vector<2x512xf32>, vector<2x512xf32> -> vector<32x512xf32>
    %571 = tpu.concatenate %568, %569, %570, %567 in 0 : vector<32x512xf32>, vector<32x512xf32>, vector<32x512xf32>, vector<2x512xf32> -> vector<98x512xf32>
    %572 = vector.extract_strided_slice %2 {offsets = [0, 108], sizes = [1, 98], strides = [1, 1]} : vector<8x206xbf16> to vector<1x98xbf16>
    %573 = arith.truncf %571 : vector<98x512xf32> to vector<98x512xbf16>
    %cst_123 = arith.constant dense<0.000000e+00> : vector<1x512xf32>
    %574 = tpu.matmul %572, %573, %cst_123 {dimension_numbers = #tpu.dot_dimension_numbers<[1], [0], [0], [1], [0, 0, 1, 1], [], []>} : vector<1x98xbf16>, vector<98x512xbf16>, vector<1x512xf32> -> vector<1x512xf32>
    %575 = vector.extract_strided_slice %3 {offsets = [0, 35], sizes = [1, 1], strides = [1, 1]} : vector<8x36xf32> to vector<1x1xf32>
    %576 = vector.broadcast %575 : vector<1x1xf32> to vector<1x512xf32>
    %577 = arith.addf %574, %576 : vector<1x512xf32>
    %cst_124 = arith.constant 0.000000e+00 : f32
    %578 = vector.broadcast %cst_124 : f32 to vector<1x512xf32>
    %579 = arith.subf %578, %577 : vector<1x512xf32>
    %580 = math.exp %579 : vector<1x512xf32>
    %cst_125 = arith.constant 1.000000e+00 : f32
    %581 = vector.broadcast %cst_125 : f32 to vector<1x512xf32>
    %582 = arith.addf %581, %580 : vector<1x512xf32>
    %583 = tpu.reciprocal %582 {approx = true} : vector<1x512xf32> -> vector<1x512xf32>
    %584 = vector.broadcast %583 : vector<1x512xf32> to vector<4x512xf32>
    %585 = arith.mulf %369, %584 : vector<4x512xf32>
    %586 = arith.addf %585, %134 : vector<4x512xf32>
    %cst_126 = arith.constant 0.000000e+00 : f32
    %587 = vector.broadcast %cst_126 : f32 to vector<4x512xf32>
    %588 = arith.maximumf %586, %587 : vector<4x512xf32>
    %589 = vector.broadcast %583 : vector<1x512xf32> to vector<4x512xf32>
    %590 = arith.mulf %370, %589 : vector<4x512xf32>
    %591 = arith.addf %590, %141 : vector<4x512xf32>
    %cst_127 = arith.constant 0.000000e+00 : f32
    %592 = vector.broadcast %cst_127 : f32 to vector<4x512xf32>
    %593 = arith.maximumf %591, %592 : vector<4x512xf32>
    %594 = tpu.concatenate %588, %593 in 0 : vector<4x512xf32>, vector<4x512xf32> -> vector<8x512xf32>
    %c0_128 = arith.constant 0 : index
    %c0_129 = arith.constant 0 : index
    %c0_130 = arith.constant 0 : index
    %595 = vector.load %arg5[%c0_128, %c0_129, %c0_130] : memref<1x8x512xf32, #tpu.memory_space<vmem>>, vector<1x8x512xf32>
    %596 = vector.shape_cast %595 : vector<1x8x512xf32> to vector<8x512xf32>
    %597 = vector.shape_cast %594 : vector<8x512xf32> to vector<1x8x512xf32>
    tpu.vector_store %arg5[%c0_128, %c0_129, %c0_130], %597 {strides = array<i32>} : memref<1x8x512xf32, #tpu.memory_space<vmem>>, vector<1x8x512xf32>,
    return
  }
  func.func @transform_0(%arg0: i32) -> (i32, i32, i32) {
    %c0_i32 = arith.constant 0 : i32
    %c0_i32_0 = arith.constant 0 : i32
    %c0_i32_1 = arith.constant 0 : i32
    return %arg0, %c0_i32, %c0_i32_0 : i32, i32, i32
  }
  func.func @transform_1(%arg0: i32) -> (i32, i32) {
    %c0_i32 = arith.constant 0 : i32
    %c0_i32_0 = arith.constant 0 : i32
    %c0_i32_1 = arith.constant 0 : i32
    return %c0_i32, %c0_i32_0 : i32, i32
  }
  func.func @transform_2(%arg0: i32) -> (i32, i32) {
    %c0_i32 = arith.constant 0 : i32
    %c0_i32_0 = arith.constant 0 : i32
    %c0_i32_1 = arith.constant 0 : i32
    return %c0_i32, %c0_i32_0 : i32, i32
  }
  func.func @transform_3(%arg0: i32) -> (i32, i32) {
    %c0_i32 = arith.constant 0 : i32
    %c0_i32_0 = arith.constant 0 : i32
    %c0_i32_1 = arith.constant 0 : i32
    return %c0_i32, %c0_i32_0 : i32, i32
  }
  func.func @transform_4(%arg0: i32) -> (i32, i32, i32) {
    %c0_i32 = arith.constant 0 : i32
    %c0_i32_0 = arith.constant 0 : i32
    %c0_i32_1 = arith.constant 0 : i32
    return %arg0, %c0_i32, %c0_i32_0 : i32, i32, i32
  }
}

</mosaic_0001>

<llo_original>
// kernel: tpu_custom_call.1
$region0: #{tpu_custom_call.1}
  #allocation0 [shape = 'u32[]', space=smem, size = 0x4, offset = 0x4, fixed_abs, tag = 'smem constant byte address 0x4 - core index']
  #allocation1 [shape = 'u32[144,128]{1,0:T(1,128)}', space=vmem, size = 0x12000, scoped, tag = 'internal scratch']
  %s0 = inlined_call_operand.hbm [shape: f32[1,4,512], index: 0, kind: input, shape index: {}]
  %s1 = inlined_call_operand.hbm [shape: f32[51,512], index: 1, kind: input, shape index: {}]
  %s2 = inlined_call_operand.hbm [shape: bf16[8,206], index: 2, kind: input, shape index: {}]
  %s3 = inlined_call_operand.hbm [shape: f32[8,36], index: 3, kind: input, shape index: {}]
  %s4 = inlined_call_operand.hbm [shape: f32[1,8,512], index: 4, kind: output, shape index: {}]
  %s5 = sld [smem:[#allocation0]]
  $region42: #{tpu_custom_call.1} parent=0
    _
  %s7 = ssub.s32 1, %s5
  %s8 = scalar_select 0, %s7, %s5
  $region1: #{tpu_custom_call.1} parent=0
    #allocation2 [shape = 'u8[8192]{0}', space=vmem, size = 0x2000, scoped, tag = 'input window, operand 0, single buffered']
    #allocation3 [shape = 's32[1]{0}', space=sflag, size = 0x4, scoped, tag = 'scoped memory for tpu_custom_call.1']
    #allocation4 [shape = 's32[1]{0}', space=sflag, size = 0x4, scoped, tag = 'scoped memory for tpu_custom_call.1']
    #allocation5 [shape = 'u8[114688]{0}', space=vmem, size = 0x1c000, scoped, tag = 'input window, operand 1, single buffered']
    #allocation6 [shape = 's32[1]{0}', space=sflag, size = 0x4, scoped, tag = 'scoped memory for tpu_custom_call.1']
    #allocation7 [shape = 'u8[4096]{0}', space=vmem, size = 0x1000, scoped, tag = 'input window, operand 2, single buffered']
    #allocation8 [shape = 'u8[4096]{0}', space=vmem, size = 0x1000, scoped, tag = 'input window, operand 3, single buffered']
    #allocation9 [shape = 's32[1]{0}', space=sflag, size = 0x4, scoped, tag = 'scoped memory for tpu_custom_call.1']
    #allocation10 [shape = 'u8[16384]{0}', space=vmem, size = 0x4000, scoped, tag = 'output window, operand 0, single buffered']
    %9 = vsyncpa [#allocation3], 0
    %10 = vsyncpa [#allocation6], 0
    %11 = vsyncpa [#allocation9], 0
    %12 = vsyncpa [#allocation4], 0
    // Predicated region
    $region2: #{tpu_custom_call.1} parent=1 // pred_check
      _
    $region3: #{tpu_custom_call.1} parent=1 // pred_check_branch
      %14 = sbr.rel (0) target = $region5
    $region4: #{tpu_custom_call.1} parent=1 // pred_region
      %s16 = ssub.s32 256, 256
      %17 = vsyncadd [#allocation3], %s16
      %s19 = sshll.u32 [#allocation2], 4
      %s20 = int_to_ptr.vmem [resolvable:$true] %s19
      %22 = dma.hbm_to_vmem [thread:$0]  %s0, 256, %s20, [#allocation3]
    $region5: #{tpu_custom_call.1} parent=1 // pred_fallthru
      _
    // Predicated region
    $region6: #{tpu_custom_call.1} parent=1 // pred_check
      _
    $region7: #{tpu_custom_call.1} parent=1 // pred_check_branch
      %24 = sbr.rel (0) target = $region9
    $region8: #{tpu_custom_call.1} parent=1 // pred_region
      %s26 = ssub.s32 3584, 3584
      %27 = vsyncadd [#allocation6], %s26
      %s28 = sshll.u32 [#allocation5], 4
      %s29 = int_to_ptr.vmem [resolvable:$true] %s28
      %34 = dma.hbm_to_vmem [thread:$0]  %s1, 3584, %s29, [#allocation6], 512, 512, 32
    $region9: #{tpu_custom_call.1} parent=1 // pred_fallthru
      _
    // Predicated region
    $region10: #{tpu_custom_call.1} parent=1 // pred_check
      _
    $region11: #{tpu_custom_call.1} parent=1 // pred_check_branch
      %36 = sbr.rel (0) target = $region13
    $region12: #{tpu_custom_call.1} parent=1 // pred_region
      %s38 = ssub.s32 128, 128
      %39 = vsyncadd [#allocation6], %s38
      %s41 = sshll.u32 [#allocation7], 4
      %s42 = int_to_ptr.vmem [resolvable:$true] %s41
      %44 = dma.hbm_to_vmem [thread:$0]  %s2, 128, %s42, [#allocation6]
    $region13: #{tpu_custom_call.1} parent=1 // pred_fallthru
      _
    // Predicated region
    $region14: #{tpu_custom_call.1} parent=1 // pred_check
      _
    $region15: #{tpu_custom_call.1} parent=1 // pred_check_branch
      %46 = sbr.rel (0) target = $region17
    $region16: #{tpu_custom_call.1} parent=1 // pred_region
      %s48 = ssub.s32 128, 128
      %49 = vsyncadd [#allocation9], %s48
      %s51 = sshll.u32 [#allocation8], 4
      %s52 = int_to_ptr.vmem [resolvable:$true] %s51
      %54 = dma.hbm_to_vmem [thread:$0]  %s3, 128, %s52, [#allocation9]
    $region17: #{tpu_custom_call.1} parent=1 // pred_fallthru
      _
    // Predicated region
    $region18: #{tpu_custom_call.1} parent=1 // pred_check
      _
    $region19: #{tpu_custom_call.1} parent=1 // pred_check_branch
      %56 = sbr.rel (0) target = $region21
    $region20: #{tpu_custom_call.1} parent=1 // pred_region
      %57 = dma.done [#allocation3], 256
    $region21: #{tpu_custom_call.1} parent=1 // pred_fallthru
      _
    // Predicated region
    $region22: #{tpu_custom_call.1} parent=1 // pred_check
      _
    $region23: #{tpu_custom_call.1} parent=1 // pred_check_branch
      %59 = sbr.rel (0) target = $region25
    $region24: #{tpu_custom_call.1} parent=1 // pred_region
      %60 = dma.done [#allocation6], 3584
    $region25: #{tpu_custom_call.1} parent=1 // pred_fallthru
      _
    // Predicated region
    $region26: #{tpu_custom_call.1} parent=1 // pred_check
      _
    $region27: #{tpu_custom_call.1} parent=1 // pred_check_branch
      %62 = sbr.rel (0) target = $region29
    $region28: #{tpu_custom_call.1} parent=1 // pred_region
      %63 = dma.done [#allocation6], 128
    $region29: #{tpu_custom_call.1} parent=1 // pred_fallthru
      _
    // Predicated region
    $region30: #{tpu_custom_call.1} parent=1 // pred_check
      _
    $region31: #{tpu_custom_call.1} parent=1 // pred_check_branch
      %65 = sbr.rel (0) target = $region33
    $region32: #{tpu_custom_call.1} parent=1 // pred_region
      %66 = dma.done [#allocation9], 128
    $region33: #{tpu_custom_call.1} parent=1 // pred_fallthru
      _
    %v68 = vld [vmem:[#allocation2] sm:$0xff]
    %v69 = vld [vmem:[#allocation2 + $0x8] sm:$0xff]
    %v70 = vld [vmem:[#allocation7] sm:$0xff]
    %v71 = vld [vmem:[#allocation8] sm:$0xff]
    %v74 = vcombine.high %v68, %v68
    %v75 = vcombine.high %v69, %v69
    %78 = vrot.lane.b32.xlu0 %v68, 17
    %v79 = vpop.permute.xlu0 %78
    %80 = vrot.lane.b32.xlu0 %v74, 17
    %v81 = vpop.permute.xlu0 %80
    %82 = vrot.lane.b32.xlu0 %v69, 17
    %v83 = vpop.permute.xlu0 %82
    %84 = vrot.lane.b32.xlu0 %v75, 17
    %v85 = vpop.permute.xlu0 %84
    %v86 = vlaneseq
    %v87 = vand.u32 %v86, 127
    %vm88 = vcmp.lt.s32.totalorder %v87, 17
    %v89 = vsel %vm88, %v83, %v85
    %v90 = vsel %vm88, %v81, %v83
    %v91 = vsel %vm88, %v79, %v81
    %v92 = vsel %vm88, %v85, %v79
    %s93 = scalar_lea.vmem [#allocation5], 64
    %v94 = vld [vmem:[%s93] ss:$8 sm:$0xf]
    %v96 = vlaneseq
    %v97 = vshrl.u32 %v96, 7
    %v98 = vsub.s32 0, %v97
    %v99 = vrot.slane %v94, %v98
    %v100 = vlaneseq
    %v101 = vshrl.u32 %v100, 7
    %v102 = vsub.s32 1, %v101
    %v103 = vrot.slane %v94, %v102
    %v104 = vlaneseq
    %v105 = vshrl.u32 %v104, 7
    %v106 = vsub.s32 2, %v105
    %v107 = vrot.slane %v94, %v106
    %v108 = vlaneseq
    %v109 = vshrl.u32 %v108, 7
    %v110 = vsub.s32 3, %v109
    %v111 = vrot.slane %v94, %v110
    %v116 = vmul.f32 %v92, %v99
    %v117 = vmul.f32 %v91, %v103
    %v118 = vmul.f32 %v90, %v107
    %v119 = vmul.f32 %v89, %v111
    %120 = vrot.lane.b32.xlu0 %v68, 16
    %v121 = vpop.permute.xlu0 %120
    %122 = vrot.lane.b32.xlu0 %v74, 16
    %v123 = vpop.permute.xlu0 %122
    %124 = vrot.lane.b32.xlu0 %v69, 16
    %v125 = vpop.permute.xlu0 %124
    %126 = vrot.lane.b32.xlu0 %v75, 16
    %v127 = vpop.permute.xlu0 %126
    %vm128 = vcmp.lt.s32.totalorder %v87, 16
    %v129 = vsel %vm128, %v125, %v127
    %v130 = vsel %vm128, %v123, %v125
    %v131 = vsel %vm128, %v121, %v123
    %v132 = vsel %vm128, %v127, %v121
    %s133 = scalar_lea.vmem [#allocation5], 65
    %v134 = vld [vmem:[%s133] ss:$8 sm:$0xf]
    %v136 = vlaneseq
    %v137 = vshrl.u32 %v136, 7
    %v138 = vsub.s32 0, %v137
    %v139 = vrot.slane %v134, %v138
    %v140 = vlaneseq
    %v141 = vshrl.u32 %v140, 7
    %v142 = vsub.s32 1, %v141
    %v143 = vrot.slane %v134, %v142
    %v144 = vlaneseq
    %v145 = vshrl.u32 %v144, 7
    %v146 = vsub.s32 2, %v145
    %v147 = vrot.slane %v134, %v146
    %v148 = vlaneseq
    %v149 = vshrl.u32 %v148, 7
    %v150 = vsub.s32 3, %v149
    %v151 = vrot.slane %v134, %v150
    %v156 = vmul.f32 %v132, %v139
    %v157 = vmul.f32 %v131, %v143
    %v158 = vmul.f32 %v130, %v147
    %v159 = vmul.f32 %v129, %v151
    %160 = vrot.lane.b32.xlu0 %v68, 15
    %v161 = vpop.permute.xlu0 %160
    %162 = vrot.lane.b32.xlu0 %v74, 15
    %v163 = vpop.permute.xlu0 %162
    %164 = vrot.lane.b32.xlu0 %v69, 15
    %v165 = vpop.permute.xlu0 %164
    %166 = vrot.lane.b32.xlu0 %v75, 15
    %v167 = vpop.permute.xlu0 %166
    %vm168 = vcmp.lt.s32.totalorder %v87, 15
    %v169 = vsel %vm168, %v165, %v167
    %v170 = vsel %vm168, %v163, %v165
    %v171 = vsel %vm168, %v161, %v163
    %v172 = vsel %vm168, %v167, %v161
    %s173 = scalar_lea.vmem [#allocation5], 66
    %v174 = vld [vmem:[%s173] ss:$8 sm:$0xf]
    %v176 = vlaneseq
    %v177 = vshrl.u32 %v176, 7
    %v178 = vsub.s32 0, %v177
    %v179 = vrot.slane %v174, %v178
    %v180 = vlaneseq
    %v181 = vshrl.u32 %v180, 7
    %v182 = vsub.s32 1, %v181
    %v183 = vrot.slane %v174, %v182
    %v184 = vlaneseq
    %v185 = vshrl.u32 %v184, 7
    %v186 = vsub.s32 2, %v185
    %v187 = vrot.slane %v174, %v186
    %v188 = vlaneseq
    %v189 = vshrl.u32 %v188, 7
    %v190 = vsub.s32 3, %v189
    %v191 = vrot.slane %v174, %v190
    %v196 = vmul.f32 %v172, %v179
    %v197 = vmul.f32 %v171, %v183
    %v198 = vmul.f32 %v170, %v187
    %v199 = vmul.f32 %v169, %v191
    %200 = vrot.lane.b32.xlu0 %v68, 1
    %v201 = vpop.permute.xlu0 %200
    %202 = vrot.lane.b32.xlu0 %v74, 1
    %v203 = vpop.permute.xlu0 %202
    %204 = vrot.lane.b32.xlu0 %v69, 1
    %v205 = vpop.permute.xlu0 %204
    %206 = vrot.lane.b32.xlu0 %v75, 1
    %v207 = vpop.permute.xlu0 %206
    %vm208 = vcmp.lt.s32.totalorder %v87, 1
    %v209 = vsel %vm208, %v205, %v207
    %v210 = vsel %vm208, %v203, %v205
    %v211 = vsel %vm208, %v201, %v203
    %v212 = vsel %vm208, %v207, %v201
    %s213 = scalar_lea.vmem [#allocation5], 71
    %v214 = vld [vmem:[%s213] ss:$8 sm:$0xf]
    %v216 = vlaneseq
    %v217 = vshrl.u32 %v216, 7
    %v218 = vsub.s32 0, %v217
    %v219 = vrot.slane %v214, %v218
    %v220 = vlaneseq
    %v221 = vshrl.u32 %v220, 7
    %v222 = vsub.s32 1, %v221
    %v223 = vrot.slane %v214, %v222
    %v224 = vlaneseq
    %v225 = vshrl.u32 %v224, 7
    %v226 = vsub.s32 2, %v225
    %v227 = vrot.slane %v214, %v226
    %v228 = vlaneseq
    %v229 = vshrl.u32 %v228, 7
    %v230 = vsub.s32 3, %v229
    %v231 = vrot.slane %v214, %v230
    %v236 = vmul.f32 %v212, %v219
    %v237 = vmul.f32 %v211, %v223
    %v238 = vmul.f32 %v210, %v227
    %v239 = vmul.f32 %v209, %v231
    %240 = vrot.lane.b32.xlu0 %v68, 127
    %v241 = vpop.permute.xlu0 %240
    %242 = vrot.lane.b32.xlu0 %v74, 127
    %v243 = vpop.permute.xlu0 %242
    %244 = vrot.lane.b32.xlu0 %v69, 127
    %v245 = vpop.permute.xlu0 %244
    %246 = vrot.lane.b32.xlu0 %v75, 127
    %v247 = vpop.permute.xlu0 %246
    %vm248 = vcmp.lt.s32.totalorder %v87, 127
    %v249 = vsel %vm248, %v245, %v247
    %v250 = vsel %vm248, %v243, %v245
    %v251 = vsel %vm248, %v241, %v243
    %v252 = vsel %vm248, %v247, %v241
    %s253 = scalar_lea.vmem [#allocation5], 97
    %v254 = vld [vmem:[%s253] ss:$8 sm:$0xf]
    %v256 = vlaneseq
    %v257 = vshrl.u32 %v256, 7
    %v258 = vsub.s32 0, %v257
    %v259 = vrot.slane %v254, %v258
    %v260 = vlaneseq
    %v261 = vshrl.u32 %v260, 7
    %v262 = vsub.s32 1, %v261
    %v263 = vrot.slane %v254, %v262
    %v264 = vlaneseq
    %v265 = vshrl.u32 %v264, 7
    %v266 = vsub.s32 2, %v265
    %v267 = vrot.slane %v254, %v266
    %v268 = vlaneseq
    %v269 = vshrl.u32 %v268, 7
    %v270 = vsub.s32 3, %v269
    %v271 = vrot.slane %v254, %v270
    %v276 = vmul.f32 %v251, %v259
    %v277 = vmul.f32 %v250, %v263
    %v278 = vmul.f32 %v249, %v267
    %v279 = vmul.f32 %v252, %v271
    %280 = vrot.lane.b32.xlu0 %v68, 113
    %v281 = vpop.permute.xlu0 %280
    %282 = vrot.lane.b32.xlu0 %v74, 113
    %v283 = vpop.permute.xlu0 %282
    %284 = vrot.lane.b32.xlu0 %v69, 113
    %v285 = vpop.permute.xlu0 %284
    %286 = vrot.lane.b32.xlu0 %v75, 113
    %v287 = vpop.permute.xlu0 %286
    %vm288 = vcmp.lt.s32.totalorder %v87, 113
    %v289 = vsel %vm288, %v285, %v287
    %v290 = vsel %vm288, %v283, %v285
    %v291 = vsel %vm288, %v281, %v283
    %v292 = vsel %vm288, %v287, %v281
    %s293 = scalar_lea.vmem [#allocation5], 102
    %v294 = vld [vmem:[%s293] ss:$8 sm:$0xf]
    %v296 = vlaneseq
    %v297 = vshrl.u32 %v296, 7
    %v298 = vsub.s32 0, %v297
    %v299 = vrot.slane %v294, %v298
    %v300 = vlaneseq
    %v301 = vshrl.u32 %v300, 7
    %v302 = vsub.s32 1, %v301
    %v303 = vrot.slane %v294, %v302
    %v304 = vlaneseq
    %v305 = vshrl.u32 %v304, 7
    %v306 = vsub.s32 2, %v305
    %v307 = vrot.slane %v294, %v306
    %v308 = vlaneseq
    %v309 = vshrl.u32 %v308, 7
    %v310 = vsub.s32 3, %v309
    %v311 = vrot.slane %v294, %v310
    %v316 = vmul.f32 %v291, %v299
    %v317 = vmul.f32 %v290, %v303
    %v318 = vmul.f32 %v289, %v307
    %v319 = vmul.f32 %v292, %v311
    %320 = vrot.lane.b32.xlu0 %v68, 112
    %v321 = vpop.permute.xlu0 %320
    %322 = vrot.lane.b32.xlu0 %v74, 112
    %v323 = vpop.permute.xlu0 %322
    %324 = vrot.lane.b32.xlu0 %v69, 112
    %v325 = vpop.permute.xlu0 %324
    %326 = vrot.lane.b32.xlu0 %v75, 112
    %v327 = vpop.permute.xlu0 %326
    %vm328 = vcmp.lt.s32.totalorder %v87, 112
    %v329 = vsel %vm328, %v325, %v327
    %v330 = vsel %vm328, %v323, %v325
    %v331 = vsel %vm328, %v321, %v323
    %v332 = vsel %vm328, %v327, %v321
    %s333 = scalar_lea.vmem [#allocation5], 103
    %v334 = vld [vmem:[%s333] ss:$8 sm:$0xf]
    %v336 = vlaneseq
    %v337 = vshrl.u32 %v336, 7
    %v338 = vsub.s32 0, %v337
    %v339 = vrot.slane %v334, %v338
    %v340 = vlaneseq
    %v341 = vshrl.u32 %v340, 7
    %v342 = vsub.s32 1, %v341
    %v343 = vrot.slane %v334, %v342
    %v344 = vlaneseq
    %v345 = vshrl.u32 %v344, 7
    %v346 = vsub.s32 2, %v345
    %v347 = vrot.slane %v334, %v346
    %v348 = vlaneseq
    %v349 = vshrl.u32 %v348, 7
    %v350 = vsub.s32 3, %v349
    %v351 = vrot.slane %v334, %v350
    %v356 = vmul.f32 %v331, %v339
    %v357 = vmul.f32 %v330, %v343
    %v358 = vmul.f32 %v329, %v347
    %v359 = vmul.f32 %v332, %v351
    %360 = vrot.lane.b32.xlu0 %v68, 111
    %v361 = vpop.permute.xlu0 %360
    %362 = vrot.lane.b32.xlu0 %v74, 111
    %v363 = vpop.permute.xlu0 %362
    %364 = vrot.lane.b32.xlu0 %v69, 111
    %v365 = vpop.permute.xlu0 %364
    %366 = vrot.lane.b32.xlu0 %v75, 111
    %v367 = vpop.permute.xlu0 %366
    %vm368 = vcmp.lt.s32.totalorder %v87, 111
    %v369 = vsel %vm368, %v365, %v367
    %v370 = vsel %vm368, %v363, %v365
    %v371 = vsel %vm368, %v361, %v363
    %v372 = vsel %vm368, %v367, %v361
    %s373 = scalar_lea.vmem [#allocation5], 128
    %v374 = vld [vmem:[%s373] ss:$8 sm:$0xf]
    %v376 = vlaneseq
    %v377 = vshrl.u32 %v376, 7
    %v378 = vsub.s32 0, %v377
    %v379 = vrot.slane %v374, %v378
    %v380 = vlaneseq
    %v381 = vshrl.u32 %v380, 7
    %v382 = vsub.s32 1, %v381
    %v383 = vrot.slane %v374, %v382
    %v384 = vlaneseq
    %v385 = vshrl.u32 %v384, 7
    %v386 = vsub.s32 2, %v385
    %v387 = vrot.slane %v374, %v386
    %v388 = vlaneseq
    %v389 = vshrl.u32 %v388, 7
    %v390 = vsub.s32 3, %v389
    %v391 = vrot.slane %v374, %v390
    %v396 = vmul.f32 %v371, %v379
    %v397 = vmul.f32 %v370, %v383
    %v398 = vmul.f32 %v369, %v387
    %v399 = vmul.f32 %v372, %v391
    %v404 = vrot.slane %v156, 4
    %v405 = vrot.slane %v157, 4
    %v406 = vrot.slane %v158, 4
    %v407 = vrot.slane %v159, 4
    %v416 = vrot.slane %v236, 4
    %v417 = vrot.slane %v237, 4
    %v418 = vrot.slane %v238, 4
    %v419 = vrot.slane %v239, 4
    %v428 = vrot.slane %v276, 4
    %v429 = vrot.slane %v277, 4
    %v430 = vrot.slane %v278, 4
    %v431 = vrot.slane %v279, 4
    %v440 = vrot.slane %v356, 4
    %v441 = vrot.slane %v357, 4
    %v442 = vrot.slane %v358, 4
    %v443 = vrot.slane %v359, 4
    %vm448 = vcmask 1043456
    %v449 = vsel %vm448, %v116, %v404
    %v450 = vsel %vm448, %v117, %v405
    %v451 = vsel %vm448, %v118, %v406
    %v452 = vsel %vm448, %v119, %v407
    %v453 = vsel %vm448, %v196, %v416
    %v454 = vsel %vm448, %v197, %v417
    %v455 = vsel %vm448, %v198, %v418
    %v456 = vsel %vm448, %v199, %v419
    %v457 = vsel %vm448, %v68, %v428
    %v458 = vsel %vm448, %v74, %v429
    %v459 = vsel %vm448, %v69, %v430
    %v460 = vsel %vm448, %v75, %v431
    %v461 = vsel %vm448, %v316, %v440
    %v462 = vsel %vm448, %v317, %v441
    %v463 = vsel %vm448, %v318, %v442
    %v464 = vsel %vm448, %v319, %v443
    %v465 = vpack.c.bf16 %v453, %v449
    %v466 = vpack.c.bf16 %v454, %v450
    %v467 = vpack.c.bf16 %v455, %v451
    %v468 = vpack.c.bf16 %v456, %v452
    %v469 = vpack.c.bf16 %v461, %v457
    %v470 = vpack.c.bf16 %v462, %v458
    %v471 = vpack.c.bf16 %v463, %v459
    %v472 = vpack.c.bf16 %v464, %v460
    %v473 = vpack.c.bf16 %v396, %v396
    %v474 = vpack.c.bf16 %v397, %v397
    %v475 = vpack.c.bf16 %v398, %v398
    %v476 = vpack.c.bf16 %v399, %v399
    %478 = vset.pattern.permute.xlu0 0
    %479 = vperm.xlu0 %478, %v71
    %v480 = vpop.permute.xlu0 %479
    %vm482 = vcmask 293888
    %v484 = vsel %vm482, %v70, 0
    %vm486 = vcmask 1041408
    %v488 = vsel %vm486, %v473, 0
    %v491 = vsel %vm486, %v474, 0
    %v494 = vsel %vm486, %v475, 0
    %v497 = vsel %vm486, %v476, 0
    %499 = vmatprep.subr.bf16.mxu0 0
    %500 = vmatpush1.bf16.msra.mxu0 0
    %501 = vmatprep.subr.bf16.mxu0 0
    %502 = vmatpush1.bf16.msra.mxu0 0
    %503 = vmatprep.subr.bf16.mxu0 0
    %504 = vmatpush1.bf16.msra.mxu0 0
    %505 = vmatprep.subr.bf16.mxu0 0
    %506 = vmatpush1.bf16.msra.mxu0 0
    %507 = vmatprep.subr.bf16.mxu0 0
    %508 = vmatpush1.bf16.msra.mxu0 0
    %509 = vmatprep.subr.bf16.mxu0 %v491
    %510 = vmatpush1.bf16.msra.mxu0 %v488
    %511 = vmatprep.subr.bf16.mxu0 %v470
    %512 = vmatpush1.bf16.msra.mxu0 %v469
    %513 = vmatprep.subr.bf16.mxu0 %v466
    %514 = vmatpush1.bf16.msra.mxu0 %v465
    %515 = vmatprep.subr.bf16.mxu0 0
    %516 = vmatpush2.bf16.msra.mxu0 0
    %517 = vmatprep.subr.bf16.mxu0 0
    %518 = vmatpush2.bf16.msra.mxu0 0
    %519 = vmatprep.subr.bf16.mxu0 0
    %520 = vmatpush2.bf16.msra.mxu0 0
    %521 = vmatprep.subr.bf16.mxu0 0
    %522 = vmatpush2.bf16.msra.mxu0 0
    %523 = vmatprep.subr.bf16.mxu0 0
    %524 = vmatpush2.bf16.msra.mxu0 0
    %525 = vmatprep.subr.bf16.mxu0 0
    %526 = vmatpush2.bf16.msra.mxu0 0
    %527 = vmatprep.subr.bf16.mxu0 0
    %528 = vmatpush2.bf16.msra.mxu0 0
    %529 = vmatprep.subr.bf16.mxu0 0
    %530 = vmatpush2.bf16.msra.mxu0 0
    %531 = vmatprep.mubr.bf16.mxu0 0
    %532 = vmatmul.mubr.bf16.gmra.mxu0 %v484
    %v533 = vpop.f32.mrf.mxu0
    %v534 = vadd.f32 %v480, %v533
    %v535 = vpop.f32.mrf.mxu0
    %v536 = vadd.f32 %v480, %v535
    %v537 = vpop.f32.mrf.mxu0
    %v538 = vpop.f32.mrf.mxu0
    %539 = vdwg.mxu0
    %540 = vmatprep.subr.bf16.mxu0 0
    %541 = vmatpush1.bf16.msra.mxu0 0
    %542 = vmatprep.subr.bf16.mxu0 0
    %543 = vmatpush1.bf16.msra.mxu0 0
    %544 = vmatprep.subr.bf16.mxu0 0
    %545 = vmatpush1.bf16.msra.mxu0 0
    %546 = vmatprep.subr.bf16.mxu0 0
    %547 = vmatpush1.bf16.msra.mxu0 0
    %548 = vmatprep.subr.bf16.mxu0 0
    %549 = vmatpush1.bf16.msra.mxu0 0
    %550 = vmatprep.subr.bf16.mxu0 %v497
    %551 = vmatpush1.bf16.msra.mxu0 %v494
    %552 = vmatprep.subr.bf16.mxu0 %v472
    %553 = vmatpush1.bf16.msra.mxu0 %v471
    %554 = vmatprep.subr.bf16.mxu0 %v468
    %555 = vmatpush1.bf16.msra.mxu0 %v467
    %556 = vmatprep.subr.bf16.mxu0 0
    %557 = vmatpush2.bf16.msra.mxu0 0
    %558 = vmatprep.subr.bf16.mxu0 0
    %559 = vmatpush2.bf16.msra.mxu0 0
    %560 = vmatprep.subr.bf16.mxu0 0
    %561 = vmatpush2.bf16.msra.mxu0 0
    %562 = vmatprep.subr.bf16.mxu0 0
    %563 = vmatpush2.bf16.msra.mxu0 0
    %564 = vmatprep.subr.bf16.mxu0 0
    %565 = vmatpush2.bf16.msra.mxu0 0
    %566 = vmatprep.subr.bf16.mxu0 0
    %567 = vmatpush2.bf16.msra.mxu0 0
    %568 = vmatprep.subr.bf16.mxu0 0
    %569 = vmatpush2.bf16.msra.mxu0 0
    %570 = vmatprep.subr.bf16.mxu0 0
    %571 = vmatpush2.bf16.msra.mxu0 0
    %572 = vmatprep.mubr.bf16.mxu0 0
    %573 = vmatmul.mubr.bf16.gmra.mxu0 %v484
    %v574 = vpop.f32.mrf.mxu0
    %v575 = vadd.f32 %v480, %v574
    %v576 = vpop.f32.mrf.mxu0
    %v577 = vadd.f32 %v480, %v576
    %v578 = vpop.f32.mrf.mxu0
    %v579 = vpop.f32.mrf.mxu0
    %580 = vdwg.mxu0
    %v581 = vmax.f32 %v534, 0.0
    %v582 = vmax.f32 %v536, 0.0
    %v583 = vmax.f32 %v575, 0.0
    %v584 = vmax.f32 %v577, 0.0
    %585 = vset.pattern.permute.xlu0 6
    %586 = vperm.xlu0 %585, %v71
    %v587 = vpop.permute.xlu0 %586
    %v589 = vmul.f32 %v581, %v587
    %v590 = vmul.f32 %v582, %v587
    %v591 = vmul.f32 %v583, %v587
    %v592 = vmul.f32 %v584, %v587
    %593 = vrot.lane.b32.xlu0 %v581, 17
    %v594 = vpop.permute.xlu0 %593
    %595 = vrot.lane.b32.xlu0 %v582, 17
    %v596 = vpop.permute.xlu0 %595
    %597 = vrot.lane.b32.xlu0 %v583, 17
    %v598 = vpop.permute.xlu0 %597
    %599 = vrot.lane.b32.xlu0 %v584, 17
    %v600 = vpop.permute.xlu0 %599
    %v601 = vsel %vm88, %v598, %v600
    %v602 = vsel %vm88, %v596, %v598
    %v603 = vsel %vm88, %v594, %v596
    %v604 = vsel %vm88, %v600, %v594
    %v605 = vmul.f32 %v604, %v99
    %v606 = vmul.f32 %v603, %v103
    %v607 = vmul.f32 %v602, %v107
    %v608 = vmul.f32 %v601, %v111
    %609 = vset.pattern.permute.xlu0 2
    %610 = vperm.xlu0 %609, %v71
    %v611 = vpop.permute.xlu0 %610
    %v613 = vmul.f32 %v605, %v611
    %v614 = vmul.f32 %v606, %v611
    %v615 = vmul.f32 %v607, %v611
    %v616 = vmul.f32 %v608, %v611
    %v617 = vadd.f32 %v589, %v613
    %v618 = vadd.f32 %v590, %v614
    %v619 = vadd.f32 %v591, %v615
    %v620 = vadd.f32 %v592, %v616
    %621 = vrot.lane.b32.xlu0 %v581, 16
    %v622 = vpop.permute.xlu0 %621
    %623 = vrot.lane.b32.xlu0 %v582, 16
    %v624 = vpop.permute.xlu0 %623
    %625 = vrot.lane.b32.xlu0 %v583, 16
    %v626 = vpop.permute.xlu0 %625
    %627 = vrot.lane.b32.xlu0 %v584, 16
    %v628 = vpop.permute.xlu0 %627
    %v629 = vsel %vm128, %v626, %v628
    %v630 = vsel %vm128, %v624, %v626
    %v631 = vsel %vm128, %v622, %v624
    %v632 = vsel %vm128, %v628, %v622
    %v633 = vmul.f32 %v632, %v139
    %v634 = vmul.f32 %v631, %v143
    %v635 = vmul.f32 %v630, %v147
    %v636 = vmul.f32 %v629, %v151
    %637 = vset.pattern.permute.xlu0 3
    %638 = vperm.xlu0 %637, %v71
    %v639 = vpop.permute.xlu0 %638
    %v641 = vmul.f32 %v633, %v639
    %v642 = vmul.f32 %v634, %v639
    %v643 = vmul.f32 %v635, %v639
    %v644 = vmul.f32 %v636, %v639
    %v645 = vadd.f32 %v617, %v641
    %v646 = vadd.f32 %v618, %v642
    %v647 = vadd.f32 %v619, %v643
    %v648 = vadd.f32 %v620, %v644
    %649 = vrot.lane.b32.xlu0 %v581, 15
    %v650 = vpop.permute.xlu0 %649
    %651 = vrot.lane.b32.xlu0 %v582, 15
    %v652 = vpop.permute.xlu0 %651
    %653 = vrot.lane.b32.xlu0 %v583, 15
    %v654 = vpop.permute.xlu0 %653
    %655 = vrot.lane.b32.xlu0 %v584, 15
    %v656 = vpop.permute.xlu0 %655
    %v657 = vsel %vm168, %v654, %v656
    %v658 = vsel %vm168, %v652, %v654
    %v659 = vsel %vm168, %v650, %v652
    %v660 = vsel %vm168, %v656, %v650
    %v661 = vmul.f32 %v660, %v179
    %v662 = vmul.f32 %v659, %v183
    %v663 = vmul.f32 %v658, %v187
    %v664 = vmul.f32 %v657, %v191
    %665 = vset.pattern.permute.xlu0 4
    %666 = vperm.xlu0 %665, %v71
    %v667 = vpop.permute.xlu0 %666
    %v669 = vmul.f32 %v661, %v667
    %v670 = vmul.f32 %v662, %v667
    %v671 = vmul.f32 %v663, %v667
    %v672 = vmul.f32 %v664, %v667
    %v673 = vadd.f32 %v645, %v669
    %v674 = vadd.f32 %v646, %v670
    %v675 = vadd.f32 %v647, %v671
    %v676 = vadd.f32 %v648, %v672
    %677 = vrot.lane.b32.xlu0 %v581, 1
    %v678 = vpop.permute.xlu0 %677
    %679 = vrot.lane.b32.xlu0 %v582, 1
    %v680 = vpop.permute.xlu0 %679
    %681 = vrot.lane.b32.xlu0 %v583, 1
    %v682 = vpop.permute.xlu0 %681
    %683 = vrot.lane.b32.xlu0 %v584, 1
    %v684 = vpop.permute.xlu0 %683
    %v685 = vsel %vm208, %v682, %v684
    %v686 = vsel %vm208, %v680, %v682
    %v687 = vsel %vm208, %v678, %v680
    %v688 = vsel %vm208, %v684, %v678
    %v689 = vmul.f32 %v688, %v219
    %v690 = vmul.f32 %v687, %v223
    %v691 = vmul.f32 %v686, %v227
    %v692 = vmul.f32 %v685, %v231
    %693 = vset.pattern.permute.xlu0 5
    %694 = vperm.xlu0 %693, %v71
    %v695 = vpop.permute.xlu0 %694
    %v697 = vmul.f32 %v689, %v695
    %v698 = vmul.f32 %v690, %v695
    %v699 = vmul.f32 %v691, %v695
    %v700 = vmul.f32 %v692, %v695
    %v701 = vadd.f32 %v673, %v697
    %v702 = vadd.f32 %v674, %v698
    %v703 = vadd.f32 %v675, %v699
    %v704 = vadd.f32 %v676, %v700
    %705 = vrot.lane.b32.xlu0 %v581, 127
    %v706 = vpop.permute.xlu0 %705
    %707 = vrot.lane.b32.xlu0 %v582, 127
    %v708 = vpop.permute.xlu0 %707
    %709 = vrot.lane.b32.xlu0 %v583, 127
    %v710 = vpop.permute.xlu0 %709
    %711 = vrot.lane.b32.xlu0 %v584, 127
    %v712 = vpop.permute.xlu0 %711
    %v713 = vsel %vm248, %v710, %v712
    %v714 = vsel %vm248, %v708, %v710
    %v715 = vsel %vm248, %v706, %v708
    %v716 = vsel %vm248, %v712, %v706
    %v717 = vmul.f32 %v715, %v259
    %v718 = vmul.f32 %v714, %v263
    %v719 = vmul.f32 %v713, %v267
    %v720 = vmul.f32 %v716, %v271
    %721 = vset.pattern.permute.xlu0 7
    %722 = vperm.xlu0 %721, %v71
    %v723 = vpop.permute.xlu0 %722
    %v725 = vmul.f32 %v717, %v723
    %v726 = vmul.f32 %v718, %v723
    %v727 = vmul.f32 %v719, %v723
    %v728 = vmul.f32 %v720, %v723
    %v729 = vadd.f32 %v701, %v725
    %v730 = vadd.f32 %v702, %v726
    %v731 = vadd.f32 %v703, %v727
    %v732 = vadd.f32 %v704, %v728
    %733 = vrot.lane.b32.xlu0 %v581, 113
    %v734 = vpop.permute.xlu0 %733
    %735 = vrot.lane.b32.xlu0 %v582, 113
    %v736 = vpop.permute.xlu0 %735
    %737 = vrot.lane.b32.xlu0 %v583, 113
    %v738 = vpop.permute.xlu0 %737
    %739 = vrot.lane.b32.xlu0 %v584, 113
    %v740 = vpop.permute.xlu0 %739
    %v741 = vsel %vm288, %v738, %v740
    %v742 = vsel %vm288, %v736, %v738
    %v743 = vsel %vm288, %v734, %v736
    %v744 = vsel %vm288, %v740, %v734
    %v745 = vmul.f32 %v743, %v299
    %v746 = vmul.f32 %v742, %v303
    %v747 = vmul.f32 %v741, %v307
    %v748 = vmul.f32 %v744, %v311
    %749 = vset.pattern.permute.xlu0 8
    %750 = vperm.xlu0 %749, %v71
    %v751 = vpop.permute.xlu0 %750
    %v753 = vmul.f32 %v745, %v751
    %v754 = vmul.f32 %v746, %v751
    %v755 = vmul.f32 %v747, %v751
    %v756 = vmul.f32 %v748, %v751
    %v757 = vadd.f32 %v729, %v753
    %v758 = vadd.f32 %v730, %v754
    %v759 = vadd.f32 %v731, %v755
    %v760 = vadd.f32 %v732, %v756
    %761 = vrot.lane.b32.xlu0 %v581, 112
    %v762 = vpop.permute.xlu0 %761
    %763 = vrot.lane.b32.xlu0 %v582, 112
    %v764 = vpop.permute.xlu0 %763
    %765 = vrot.lane.b32.xlu0 %v583, 112
    %v766 = vpop.permute.xlu0 %765
    %767 = vrot.lane.b32.xlu0 %v584, 112
    %v768 = vpop.permute.xlu0 %767
    %v769 = vsel %vm328, %v766, %v768
    %v770 = vsel %vm328, %v764, %v766
    %v771 = vsel %vm328, %v762, %v764
    %v772 = vsel %vm328, %v768, %v762
    %v773 = vmul.f32 %v771, %v339
    %v774 = vmul.f32 %v770, %v343
    %v775 = vmul.f32 %v769, %v347
    %v776 = vmul.f32 %v772, %v351
    %777 = vset.pattern.permute.xlu0 9
    %778 = vperm.xlu0 %777, %v71
    %v779 = vpop.permute.xlu0 %778
    %v781 = vmul.f32 %v773, %v779
    %v782 = vmul.f32 %v774, %v779
    %v783 = vmul.f32 %v775, %v779
    %v784 = vmul.f32 %v776, %v779
    %v785 = vadd.f32 %v757, %v781
    %v786 = vadd.f32 %v758, %v782
    %v787 = vadd.f32 %v759, %v783
    %v788 = vadd.f32 %v760, %v784
    %789 = vrot.lane.b32.xlu0 %v581, 111
    %v790 = vpop.permute.xlu0 %789
    %791 = vrot.lane.b32.xlu0 %v582, 111
    %v792 = vpop.permute.xlu0 %791
    %793 = vrot.lane.b32.xlu0 %v583, 111
    %v794 = vpop.permute.xlu0 %793
    %795 = vrot.lane.b32.xlu0 %v584, 111
    %v796 = vpop.permute.xlu0 %795
    %v797 = vsel %vm368, %v794, %v796
    %v798 = vsel %vm368, %v792, %v794
    %v799 = vsel %vm368, %v790, %v792
    %v800 = vsel %vm368, %v796, %v790
    %v801 = vmul.f32 %v799, %v379
    %v802 = vmul.f32 %v798, %v383
    %v803 = vmul.f32 %v797, %v387
    %v804 = vmul.f32 %v800, %v391
    %805 = vset.pattern.permute.xlu0 10
    %806 = vperm.xlu0 %805, %v71
    %v807 = vpop.permute.xlu0 %806
    %v809 = vmul.f32 %v801, %v807
    %v810 = vmul.f32 %v802, %v807
    %v811 = vmul.f32 %v803, %v807
    %v812 = vmul.f32 %v804, %v807
    %v813 = vadd.f32 %v785, %v809
    %v814 = vadd.f32 %v786, %v810
    %v815 = vadd.f32 %v787, %v811
    %v816 = vadd.f32 %v788, %v812
    %817 = vset.pattern.permute.xlu0 1
    %818 = vperm.xlu0 %817, %v71
    %v819 = vpop.permute.xlu0 %818
    %v821 = vadd.f32 %v813, %v819
    %v822 = vadd.f32 %v814, %v819
    %v823 = vadd.f32 %v815, %v819
    %v824 = vadd.f32 %v816, %v819
    %v825 = vmax.f32 %v821, 0.0
    %v826 = vmax.f32 %v822, 0.0
    %v827 = vmax.f32 %v823, 0.0
    %v828 = vmax.f32 %v824, 0.0
    %829 = vset.pattern.permute.xlu0 11
    %830 = vperm.xlu0 %829, %v71
    %v831 = vpop.permute.xlu0 %830
    %v833 = vmul.f32 %v581, %v831
    %v834 = vmul.f32 %v582, %v831
    %v835 = vmul.f32 %v583, %v831
    %v836 = vmul.f32 %v584, %v831
    %837 = vset.pattern.permute.xlu0 12
    %838 = vperm.xlu0 %837, %v71
    %v839 = vpop.permute.xlu0 %838
    %v841 = vadd.f32 %v833, %v839
    %v842 = vadd.f32 %v834, %v839
    %v843 = vadd.f32 %v835, %v839
    %v844 = vadd.f32 %v836, %v839
    %v845 = vmax.f32 %v841, 0.0
    %v846 = vmax.f32 %v842, 0.0
    %v847 = vmax.f32 %v843, 0.0
    %v848 = vmax.f32 %v844, 0.0
    %849 = vset.pattern.permute.xlu0 13
    %850 = vperm.xlu0 %849, %v71
    %v851 = vpop.permute.xlu0 %850
    %v853 = vmul.f32 %v825, %v851
    %v854 = vmul.f32 %v826, %v851
    %v855 = vmul.f32 %v827, %v851
    %v856 = vmul.f32 %v828, %v851
    %857 = vset.pattern.permute.xlu0 14
    %858 = vperm.xlu0 %857, %v71
    %v859 = vpop.permute.xlu0 %858
    %v861 = vadd.f32 %v853, %v859
    %v862 = vadd.f32 %v854, %v859
    %v863 = vadd.f32 %v855, %v859
    %v864 = vadd.f32 %v856, %v859
    %v865 = vmax.f32 %v861, 0.0
    %v866 = vmax.f32 %v862, 0.0
    %v867 = vmax.f32 %v863, 0.0
    %v868 = vmax.f32 %v864, 0.0
    %869 = vset.pattern.permute.xlu0 15
    %870 = vperm.xlu0 %869, %v71
    %v871 = vpop.permute.xlu0 %870
    %v872 = vrot.slane %v871, 4
    %v874 = vmul.f32 %v581, %v872
    %v875 = vmul.f32 %v582, %v872
    %v876 = vmul.f32 %v583, %v872
    %v877 = vmul.f32 %v584, %v872
    %878 = vset.pattern.permute.xlu0 16
    %879 = vperm.xlu0 %878, %v71
    %v880 = vpop.permute.xlu0 %879
    %v881 = vrot.slane %v880, 4
    %v883 = vadd.f32 %v874, %v881
    %v884 = vadd.f32 %v875, %v881
    %v885 = vadd.f32 %v876, %v881
    %v886 = vadd.f32 %v877, %v881
    %887 = vset.pattern.permute.xlu0 17
    %888 = vperm.xlu0 %887, %v71
    %v889 = vpop.permute.xlu0 %888
    %v890 = vrot.slane %v889, 4
    %v892 = vmul.f32 %v825, %v890
    %v893 = vmul.f32 %v826, %v890
    %v894 = vmul.f32 %v827, %v890
    %v895 = vmul.f32 %v828, %v890
    %896 = vset.pattern.permute.xlu0 18
    %897 = vperm.xlu0 %896, %v71
    %v898 = vpop.permute.xlu0 %897
    %v899 = vrot.slane %v898, 4
    %v901 = vadd.f32 %v892, %v899
    %v902 = vadd.f32 %v893, %v899
    %v903 = vadd.f32 %v894, %v899
    %v904 = vadd.f32 %v895, %v899
    %905 = vrot.lane.b32.xlu0 %v845, 17
    %v906 = vpop.permute.xlu0 %905
    %907 = vrot.lane.b32.xlu0 %v846, 17
    %v908 = vpop.permute.xlu0 %907
    %909 = vrot.lane.b32.xlu0 %v847, 17
    %v910 = vpop.permute.xlu0 %909
    %911 = vrot.lane.b32.xlu0 %v848, 17
    %v912 = vpop.permute.xlu0 %911
    %v913 = vsel %vm88, %v910, %v912
    %v914 = vsel %vm88, %v908, %v910
    %v915 = vsel %vm88, %v906, %v908
    %v916 = vsel %vm88, %v912, %v906
    %v917 = vmul.f32 %v916, %v99
    %v918 = vmul.f32 %v915, %v103
    %v919 = vmul.f32 %v914, %v107
    %v920 = vmul.f32 %v913, %v111
    %921 = vrot.lane.b32.xlu0 %v845, 16
    %v922 = vpop.permute.xlu0 %921
    %923 = vrot.lane.b32.xlu0 %v846, 16
    %v924 = vpop.permute.xlu0 %923
    %925 = vrot.lane.b32.xlu0 %v847, 16
    %v926 = vpop.permute.xlu0 %925
    %927 = vrot.lane.b32.xlu0 %v848, 16
    %v928 = vpop.permute.xlu0 %927
    %v929 = vsel %vm128, %v926, %v928
    %v930 = vsel %vm128, %v924, %v926
    %v931 = vsel %vm128, %v922, %v924
    %v932 = vsel %vm128, %v928, %v922
    %v933 = vmul.f32 %v932, %v139
    %v934 = vmul.f32 %v931, %v143
    %v935 = vmul.f32 %v930, %v147
    %v936 = vmul.f32 %v929, %v151
    %937 = vrot.lane.b32.xlu0 %v845, 15
    %v938 = vpop.permute.xlu0 %937
    %939 = vrot.lane.b32.xlu0 %v846, 15
    %v940 = vpop.permute.xlu0 %939
    %941 = vrot.lane.b32.xlu0 %v847, 15
    %v942 = vpop.permute.xlu0 %941
    %943 = vrot.lane.b32.xlu0 %v848, 15
    %v944 = vpop.permute.xlu0 %943
    %v945 = vsel %vm168, %v942, %v944
    %v946 = vsel %vm168, %v940, %v942
    %v947 = vsel %vm168, %v938, %v940
    %v948 = vsel %vm168, %v944, %v938
    %v949 = vmul.f32 %v948, %v179
    %v950 = vmul.f32 %v947, %v183
    %v951 = vmul.f32 %v946, %v187
    %v952 = vmul.f32 %v945, %v191
    %953 = vrot.lane.b32.xlu0 %v845, 1
    %v954 = vpop.permute.xlu0 %953
    %955 = vrot.lane.b32.xlu0 %v846, 1
    %v956 = vpop.permute.xlu0 %955
    %957 = vrot.lane.b32.xlu0 %v847, 1
    %v958 = vpop.permute.xlu0 %957
    %959 = vrot.lane.b32.xlu0 %v848, 1
    %v960 = vpop.permute.xlu0 %959
    %v961 = vsel %vm208, %v958, %v960
    %v962 = vsel %vm208, %v956, %v958
    %v963 = vsel %vm208, %v954, %v956
    %v964 = vsel %vm208, %v960, %v954
    %v965 = vmul.f32 %v964, %v219
    %v966 = vmul.f32 %v963, %v223
    %v967 = vmul.f32 %v962, %v227
    %v968 = vmul.f32 %v961, %v231
    %969 = vrot.lane.b32.xlu0 %v845, 127
    %v970 = vpop.permute.xlu0 %969
    %971 = vrot.lane.b32.xlu0 %v846, 127
    %v972 = vpop.permute.xlu0 %971
    %973 = vrot.lane.b32.xlu0 %v847, 127
    %v974 = vpop.permute.xlu0 %973
    %975 = vrot.lane.b32.xlu0 %v848, 127
    %v976 = vpop.permute.xlu0 %975
    %v977 = vsel %vm248, %v974, %v976
    %v978 = vsel %vm248, %v972, %v974
    %v979 = vsel %vm248, %v970, %v972
    %v980 = vsel %vm248, %v976, %v970
    %v981 = vmul.f32 %v979, %v259
    %v982 = vmul.f32 %v978, %v263
    %v983 = vmul.f32 %v977, %v267
    %v984 = vmul.f32 %v980, %v271
    %985 = vrot.lane.b32.xlu0 %v845, 113
    %v986 = vpop.permute.xlu0 %985
    %987 = vrot.lane.b32.xlu0 %v846, 113
    %v988 = vpop.permute.xlu0 %987
    %989 = vrot.lane.b32.xlu0 %v847, 113
    %v990 = vpop.permute.xlu0 %989
    %991 = vrot.lane.b32.xlu0 %v848, 113
    %v992 = vpop.permute.xlu0 %991
    %v993 = vsel %vm288, %v990, %v992
    %v994 = vsel %vm288, %v988, %v990
    %v995 = vsel %vm288, %v986, %v988
    %v996 = vsel %vm288, %v992, %v986
    %v997 = vmul.f32 %v995, %v299
    %v998 = vmul.f32 %v994, %v303
    %v999 = vmul.f32 %v993, %v307
    %v1000 = vmul.f32 %v996, %v311
    %1001 = vrot.lane.b32.xlu0 %v845, 112
    %v1002 = vpop.permute.xlu0 %1001
    %1003 = vrot.lane.b32.xlu0 %v846, 112
    %v1004 = vpop.permute.xlu0 %1003
    %1005 = vrot.lane.b32.xlu0 %v847, 112
    %v1006 = vpop.permute.xlu0 %1005
    %1007 = vrot.lane.b32.xlu0 %v848, 112
    %v1008 = vpop.permute.xlu0 %1007
    %v1009 = vsel %vm328, %v1006, %v1008
    %v1010 = vsel %vm328, %v1004, %v1006
    %v1011 = vsel %vm328, %v1002, %v1004
    %v1012 = vsel %vm328, %v1008, %v1002
    %v1013 = vmul.f32 %v1011, %v339
    %v1014 = vmul.f32 %v1010, %v343
    %v1015 = vmul.f32 %v1009, %v347
    %v1016 = vmul.f32 %v1012, %v351
    %1017 = vrot.lane.b32.xlu0 %v845, 111
    %v1018 = vpop.permute.xlu0 %1017
    %1019 = vrot.lane.b32.xlu0 %v846, 111
    %v1020 = vpop.permute.xlu0 %1019
    %1021 = vrot.lane.b32.xlu0 %v847, 111
    %v1022 = vpop.permute.xlu0 %1021
    %1023 = vrot.lane.b32.xlu0 %v848, 111
    %v1024 = vpop.permute.xlu0 %1023
    %v1025 = vsel %vm368, %v1022, %v1024
    %v1026 = vsel %vm368, %v1020, %v1022
    %v1027 = vsel %vm368, %v1018, %v1020
    %v1028 = vsel %vm368, %v1024, %v1018
    %v1029 = vmul.f32 %v1027, %v379
    %v1030 = vmul.f32 %v1026, %v383
    %v1031 = vmul.f32 %v1025, %v387
    %v1032 = vmul.f32 %v1028, %v391
    %v1037 = vrot.slane %v933, 4
    %v1038 = vrot.slane %v934, 4
    %v1039 = vrot.slane %v935, 4
    %v1040 = vrot.slane %v936, 4
    %v1049 = vrot.slane %v965, 4
    %v1050 = vrot.slane %v966, 4
    %v1051 = vrot.slane %v967, 4
    %v1052 = vrot.slane %v968, 4
    %v1061 = vrot.slane %v981, 4
    %v1062 = vrot.slane %v982, 4
    %v1063 = vrot.slane %v983, 4
    %v1064 = vrot.slane %v984, 4
    %v1073 = vrot.slane %v1013, 4
    %v1074 = vrot.slane %v1014, 4
    %v1075 = vrot.slane %v1015, 4
    %v1076 = vrot.slane %v1016, 4
    %v1081 = vsel %vm448, %v917, %v1037
    %v1082 = vsel %vm448, %v918, %v1038
    %v1083 = vsel %vm448, %v919, %v1039
    %v1084 = vsel %vm448, %v920, %v1040
    %v1085 = vsel %vm448, %v949, %v1049
    %v1086 = vsel %vm448, %v950, %v1050
    %v1087 = vsel %vm448, %v951, %v1051
    %v1088 = vsel %vm448, %v952, %v1052
    %v1089 = vsel %vm448, %v845, %v1061
    %v1090 = vsel %vm448, %v846, %v1062
    %v1091 = vsel %vm448, %v847, %v1063
    %v1092 = vsel %vm448, %v848, %v1064
    %v1093 = vsel %vm448, %v997, %v1073
    %v1094 = vsel %vm448, %v998, %v1074
    %v1095 = vsel %vm448, %v999, %v1075
    %v1096 = vsel %vm448, %v1000, %v1076
    %v1097 = vpack.c.bf16 %v1085, %v1081
    %v1098 = vpack.c.bf16 %v1086, %v1082
    %v1099 = vpack.c.bf16 %v1087, %v1083
    %v1100 = vpack.c.bf16 %v1088, %v1084
    %v1101 = vpack.c.bf16 %v1093, %v1089
    %v1102 = vpack.c.bf16 %v1094, %v1090
    %v1103 = vpack.c.bf16 %v1095, %v1091
    %v1104 = vpack.c.bf16 %v1096, %v1092
    %v1105 = vpack.c.bf16 %v1029, %v1029
    %v1106 = vpack.c.bf16 %v1030, %v1030
    %v1107 = vpack.c.bf16 %v1031, %v1031
    %v1108 = vpack.c.bf16 %v1032, %v1032
    %1109 = vrot.lane.b32.xlu0 %v865, 17
    %v1110 = vpop.permute.xlu0 %1109
    %1111 = vrot.lane.b32.xlu0 %v866, 17
    %v1112 = vpop.permute.xlu0 %1111
    %1113 = vrot.lane.b32.xlu0 %v867, 17
    %v1114 = vpop.permute.xlu0 %1113
    %1115 = vrot.lane.b32.xlu0 %v868, 17
    %v1116 = vpop.permute.xlu0 %1115
    %v1117 = vsel %vm88, %v1114, %v1116
    %v1118 = vsel %vm88, %v1112, %v1114
    %v1119 = vsel %vm88, %v1110, %v1112
    %v1120 = vsel %vm88, %v1116, %v1110
    %v1121 = vmul.f32 %v1120, %v99
    %v1122 = vmul.f32 %v1119, %v103
    %v1123 = vmul.f32 %v1118, %v107
    %v1124 = vmul.f32 %v1117, %v111
    %1125 = vrot.lane.b32.xlu0 %v865, 16
    %v1126 = vpop.permute.xlu0 %1125
    %1127 = vrot.lane.b32.xlu0 %v866, 16
    %v1128 = vpop.permute.xlu0 %1127
    %1129 = vrot.lane.b32.xlu0 %v867, 16
    %v1130 = vpop.permute.xlu0 %1129
    %1131 = vrot.lane.b32.xlu0 %v868, 16
    %v1132 = vpop.permute.xlu0 %1131
    %v1133 = vsel %vm128, %v1130, %v1132
    %v1134 = vsel %vm128, %v1128, %v1130
    %v1135 = vsel %vm128, %v1126, %v1128
    %v1136 = vsel %vm128, %v1132, %v1126
    %v1137 = vmul.f32 %v1136, %v139
    %v1138 = vmul.f32 %v1135, %v143
    %v1139 = vmul.f32 %v1134, %v147
    %v1140 = vmul.f32 %v1133, %v151
    %1141 = vrot.lane.b32.xlu0 %v865, 15
    %v1142 = vpop.permute.xlu0 %1141
    %1143 = vrot.lane.b32.xlu0 %v866, 15
    %v1144 = vpop.permute.xlu0 %1143
    %1145 = vrot.lane.b32.xlu0 %v867, 15
    %v1146 = vpop.permute.xlu0 %1145
    %1147 = vrot.lane.b32.xlu0 %v868, 15
    %v1148 = vpop.permute.xlu0 %1147
    %v1149 = vsel %vm168, %v1146, %v1148
    %v1150 = vsel %vm168, %v1144, %v1146
    %v1151 = vsel %vm168, %v1142, %v1144
    %v1152 = vsel %vm168, %v1148, %v1142
    %v1153 = vmul.f32 %v1152, %v179
    %v1154 = vmul.f32 %v1151, %v183
    %v1155 = vmul.f32 %v1150, %v187
    %v1156 = vmul.f32 %v1149, %v191
    %1157 = vrot.lane.b32.xlu0 %v865, 1
    %v1158 = vpop.permute.xlu0 %1157
    %1159 = vrot.lane.b32.xlu0 %v866, 1
    %v1160 = vpop.permute.xlu0 %1159
    %1161 = vrot.lane.b32.xlu0 %v867, 1
    %v1162 = vpop.permute.xlu0 %1161
    %1163 = vrot.lane.b32.xlu0 %v868, 1
    %v1164 = vpop.permute.xlu0 %1163
    %v1165 = vsel %vm208, %v1162, %v1164
    %v1166 = vsel %vm208, %v1160, %v1162
    %v1167 = vsel %vm208, %v1158, %v1160
    %v1168 = vsel %vm208, %v1164, %v1158
    %v1169 = vmul.f32 %v1168, %v219
    %v1170 = vmul.f32 %v1167, %v223
    %v1171 = vmul.f32 %v1166, %v227
    %v1172 = vmul.f32 %v1165, %v231
    %1173 = vrot.lane.b32.xlu0 %v865, 127
    %v1174 = vpop.permute.xlu0 %1173
    %1175 = vrot.lane.b32.xlu0 %v866, 127
    %v1176 = vpop.permute.xlu0 %1175
    %1177 = vrot.lane.b32.xlu0 %v867, 127
    %v1178 = vpop.permute.xlu0 %1177
    %1179 = vrot.lane.b32.xlu0 %v868, 127
    %v1180 = vpop.permute.xlu0 %1179
    %v1181 = vsel %vm248, %v1178, %v1180
    %v1182 = vsel %vm248, %v1176, %v1178
    %v1183 = vsel %vm248, %v1174, %v1176
    %v1184 = vsel %vm248, %v1180, %v1174
    %v1185 = vmul.f32 %v1183, %v259
    %v1186 = vmul.f32 %v1182, %v263
    %v1187 = vmul.f32 %v1181, %v267
    %v1188 = vmul.f32 %v1184, %v271
    %1189 = vrot.lane.b32.xlu0 %v865, 113
    %v1190 = vpop.permute.xlu0 %1189
    %1191 = vrot.lane.b32.xlu0 %v866, 113
    %v1192 = vpop.permute.xlu0 %1191
    %1193 = vrot.lane.b32.xlu0 %v867, 113
    %v1194 = vpop.permute.xlu0 %1193
    %1195 = vrot.lane.b32.xlu0 %v868, 113
    %v1196 = vpop.permute.xlu0 %1195
    %v1197 = vsel %vm288, %v1194, %v1196
    %v1198 = vsel %vm288, %v1192, %v1194
    %v1199 = vsel %vm288, %v1190, %v1192
    %v1200 = vsel %vm288, %v1196, %v1190
    %v1201 = vmul.f32 %v1199, %v299
    %v1202 = vmul.f32 %v1198, %v303
    %v1203 = vmul.f32 %v1197, %v307
    %v1204 = vmul.f32 %v1200, %v311
    %1205 = vrot.lane.b32.xlu0 %v865, 112
    %v1206 = vpop.permute.xlu0 %1205
    %1207 = vrot.lane.b32.xlu0 %v866, 112
    %v1208 = vpop.permute.xlu0 %1207
    %1209 = vrot.lane.b32.xlu0 %v867, 112
    %v1210 = vpop.permute.xlu0 %1209
    %1211 = vrot.lane.b32.xlu0 %v868, 112
    %v1212 = vpop.permute.xlu0 %1211
    %v1213 = vsel %vm328, %v1210, %v1212
    %v1214 = vsel %vm328, %v1208, %v1210
    %v1215 = vsel %vm328, %v1206, %v1208
    %v1216 = vsel %vm328, %v1212, %v1206
    %v1217 = vmul.f32 %v1215, %v339
    %v1218 = vmul.f32 %v1214, %v343
    %v1219 = vmul.f32 %v1213, %v347
    %v1220 = vmul.f32 %v1216, %v351
    %1221 = vrot.lane.b32.xlu0 %v865, 111
    %v1222 = vpop.permute.xlu0 %1221
    %1223 = vrot.lane.b32.xlu0 %v866, 111
    %v1224 = vpop.permute.xlu0 %1223
    %1225 = vrot.lane.b32.xlu0 %v867, 111
    %v1226 = vpop.permute.xlu0 %1225
    %1227 = vrot.lane.b32.xlu0 %v868, 111
    %v1228 = vpop.permute.xlu0 %1227
    %v1229 = vsel %vm368, %v1226, %v1228
    %v1230 = vsel %vm368, %v1224, %v1226
    %v1231 = vsel %vm368, %v1222, %v1224
    %v1232 = vsel %vm368, %v1228, %v1222
    %v1233 = vmul.f32 %v1231, %v379
    %v1234 = vmul.f32 %v1230, %v383
    %v1235 = vmul.f32 %v1229, %v387
    %v1236 = vmul.f32 %v1232, %v391
    %v1241 = vrot.slane %v1137, 4
    %v1242 = vrot.slane %v1138, 4
    %v1243 = vrot.slane %v1139, 4
    %v1244 = vrot.slane %v1140, 4
    %v1253 = vrot.slane %v1169, 4
    %v1254 = vrot.slane %v1170, 4
    %v1255 = vrot.slane %v1171, 4
    %v1256 = vrot.slane %v1172, 4
    %v1265 = vrot.slane %v1185, 4
    %v1266 = vrot.slane %v1186, 4
    %v1267 = vrot.slane %v1187, 4
    %v1268 = vrot.slane %v1188, 4
    %v1277 = vrot.slane %v1217, 4
    %v1278 = vrot.slane %v1218, 4
    %v1279 = vrot.slane %v1219, 4
    %v1280 = vrot.slane %v1220, 4
    %v1285 = vsel %vm448, %v1121, %v1241
    %v1286 = vsel %vm448, %v1122, %v1242
    %v1287 = vsel %vm448, %v1123, %v1243
    %v1288 = vsel %vm448, %v1124, %v1244
    %v1289 = vsel %vm448, %v1153, %v1253
    %v1290 = vsel %vm448, %v1154, %v1254
    %v1291 = vsel %vm448, %v1155, %v1255
    %v1292 = vsel %vm448, %v1156, %v1256
    %v1293 = vsel %vm448, %v865, %v1265
    %v1294 = vsel %vm448, %v866, %v1266
    %v1295 = vsel %vm448, %v867, %v1267
    %v1296 = vsel %vm448, %v868, %v1268
    %v1297 = vsel %vm448, %v1201, %v1277
    %v1298 = vsel %vm448, %v1202, %v1278
    %v1299 = vsel %vm448, %v1203, %v1279
    %v1300 = vsel %vm448, %v1204, %v1280
    %v1301 = vpack.c.bf16 %v1289, %v1285
    %v1302 = vpack.c.bf16 %v1290, %v1286
    %v1303 = vpack.c.bf16 %v1291, %v1287
    %v1304 = vpack.c.bf16 %v1292, %v1288
    %v1305 = vpack.c.bf16 %v1297, %v1293
    %v1306 = vpack.c.bf16 %v1298, %v1294
    %v1307 = vpack.c.bf16 %v1299, %v1295
    %v1308 = vpack.c.bf16 %v1300, %v1296
    %v1309 = vpack.c.bf16 %v1233, %v1233
    %v1310 = vpack.c.bf16 %v1234, %v1234
    %v1311 = vpack.c.bf16 %v1235, %v1235
    %v1312 = vpack.c.bf16 %v1236, %v1236
    %v1314 = vunpack.c.l.b16 %v70
    %v1315 = vpack.c.b16 %v1314, %v1314
    %1316 = vrot.lane.b32.xlu0 %v1315, 56
    %v1317 = vpop.permute.xlu0 %1316
    %v1319 = vsel %vm482, %v1317, 0
    %v1322 = vsel %vm486, %v1309, 0
    %v1325 = vsel %vm486, %v1310, 0
    %v1328 = vsel %vm486, %v1311, 0
    %v1331 = vsel %vm486, %v1312, 0
    %1333 = vmatprep.subr.bf16.mxu0 0
    %1334 = vmatpush1.bf16.msra.mxu0 0
    %1335 = vmatprep.subr.bf16.mxu0 0
    %1336 = vmatpush1.bf16.msra.mxu0 0
    %1337 = vmatprep.subr.bf16.mxu0 0
    %1338 = vmatpush1.bf16.msra.mxu0 0
    %1339 = vmatprep.subr.bf16.mxu0 0
    %1340 = vmatpush1.bf16.msra.mxu0 0
    %1341 = vmatprep.subr.bf16.mxu0 0
    %1342 = vmatpush1.bf16.msra.mxu0 0
    %1343 = vmatprep.subr.bf16.mxu0 %v1325
    %1344 = vmatpush1.bf16.msra.mxu0 %v1322
    %1345 = vmatprep.subr.bf16.mxu0 %v1306
    %1346 = vmatpush1.bf16.msra.mxu0 %v1305
    %1347 = vmatprep.subr.bf16.mxu0 %v1302
    %1348 = vmatpush1.bf16.msra.mxu0 %v1301
    %1349 = vmatprep.subr.bf16.mxu0 0
    %1350 = vmatpush2.bf16.msra.mxu0 0
    %1351 = vmatprep.subr.bf16.mxu0 0
    %1352 = vmatpush2.bf16.msra.mxu0 0
    %1353 = vmatprep.subr.bf16.mxu0 0
    %1354 = vmatpush2.bf16.msra.mxu0 0
    %1355 = vmatprep.subr.bf16.mxu0 0
    %1356 = vmatpush2.bf16.msra.mxu0 0
    %1357 = vmatprep.subr.bf16.mxu0 0
    %1358 = vmatpush2.bf16.msra.mxu0 0
    %1359 = vmatprep.subr.bf16.mxu0 0
    %1360 = vmatpush2.bf16.msra.mxu0 0
    %1361 = vmatprep.subr.bf16.mxu0 0
    %1362 = vmatpush2.bf16.msra.mxu0 0
    %1363 = vmatprep.subr.bf16.mxu0 0
    %1364 = vmatpush2.bf16.msra.mxu0 0
    %1365 = vmatprep.mubr.bf16.mxu0 0
    %1366 = vmatmul.mubr.bf16.gmra.mxu0 %v1319
    %v1367 = vpop.f32.mrf.mxu0
    %v1368 = vadd.f32 0.0, %v1367
    %v1369 = vpop.f32.mrf.mxu0
    %v1370 = vadd.f32 0.0, %v1369
    %v1371 = vpop.f32.mrf.mxu0
    %v1372 = vpop.f32.mrf.mxu0
    %1373 = vdwg.mxu0
    %1374 = vmatprep.subr.bf16.mxu0 0
    %1375 = vmatpush1.bf16.msra.mxu0 0
    %1376 = vmatprep.subr.bf16.mxu0 0
    %1377 = vmatpush1.bf16.msra.mxu0 0
    %1378 = vmatprep.subr.bf16.mxu0 0
    %1379 = vmatpush1.bf16.msra.mxu0 0
    %1380 = vmatprep.subr.bf16.mxu0 0
    %1381 = vmatpush1.bf16.msra.mxu0 0
    %1382 = vmatprep.subr.bf16.mxu0 0
    %1383 = vmatpush1.bf16.msra.mxu0 0
    %1384 = vmatprep.subr.bf16.mxu0 %v1331
    %1385 = vmatpush1.bf16.msra.mxu0 %v1328
    %1386 = vmatprep.subr.bf16.mxu0 %v1308
    %1387 = vmatpush1.bf16.msra.mxu0 %v1307
    %1388 = vmatprep.subr.bf16.mxu0 %v1304
    %1389 = vmatpush1.bf16.msra.mxu0 %v1303
    %1390 = vmatprep.subr.bf16.mxu0 0
    %1391 = vmatpush2.bf16.msra.mxu0 0
    %1392 = vmatprep.subr.bf16.mxu0 0
    %1393 = vmatpush2.bf16.msra.mxu0 0
    %1394 = vmatprep.subr.bf16.mxu0 0
    %1395 = vmatpush2.bf16.msra.mxu0 0
    %1396 = vmatprep.subr.bf16.mxu0 0
    %1397 = vmatpush2.bf16.msra.mxu0 0
    %1398 = vmatprep.subr.bf16.mxu0 0
    %1399 = vmatpush2.bf16.msra.mxu0 0
    %1400 = vmatprep.subr.bf16.mxu0 0
    %1401 = vmatpush2.bf16.msra.mxu0 0
    %1402 = vmatprep.subr.bf16.mxu0 0
    %1403 = vmatpush2.bf16.msra.mxu0 0
    %1404 = vmatprep.subr.bf16.mxu0 0
    %1405 = vmatpush2.bf16.msra.mxu0 0
    %1406 = vmatprep.mubr.bf16.mxu0 0
    %1407 = vmatmul.mubr.bf16.gmra.mxu0 %v1319
    %v1408 = vpop.f32.mrf.mxu0
    %v1409 = vadd.f32 0.0, %v1408
    %v1410 = vpop.f32.mrf.mxu0
    %v1411 = vadd.f32 0.0, %v1410
    %v1412 = vpop.f32.mrf.mxu0
    %v1413 = vpop.f32.mrf.mxu0
    %1414 = vdwg.mxu0
    %1415 = vrot.lane.b32.xlu0 %v1315, 92
    %v1416 = vpop.permute.xlu0 %1415
    %v1418 = vsel %vm482, %v1416, 0
    %v1421 = vsel %vm486, %v1105, 0
    %v1424 = vsel %vm486, %v1106, 0
    %v1427 = vsel %vm486, %v1107, 0
    %v1430 = vsel %vm486, %v1108, 0
    %1432 = vmatprep.subr.bf16.mxu0 0
    %1433 = vmatpush1.bf16.msra.mxu0 0
    %1434 = vmatprep.subr.bf16.mxu0 0
    %1435 = vmatpush1.bf16.msra.mxu0 0
    %1436 = vmatprep.subr.bf16.mxu0 0
    %1437 = vmatpush1.bf16.msra.mxu0 0
    %1438 = vmatprep.subr.bf16.mxu0 0
    %1439 = vmatpush1.bf16.msra.mxu0 0
    %1440 = vmatprep.subr.bf16.mxu0 0
    %1441 = vmatpush1.bf16.msra.mxu0 0
    %1442 = vmatprep.subr.bf16.mxu0 %v1424
    %1443 = vmatpush1.bf16.msra.mxu0 %v1421
    %1444 = vmatprep.subr.bf16.mxu0 %v1102
    %1445 = vmatpush1.bf16.msra.mxu0 %v1101
    %1446 = vmatprep.subr.bf16.mxu0 %v1098
    %1447 = vmatpush1.bf16.msra.mxu0 %v1097
    %1448 = vmatprep.subr.bf16.mxu0 0
    %1449 = vmatpush2.bf16.msra.mxu0 0
    %1450 = vmatprep.subr.bf16.mxu0 0
    %1451 = vmatpush2.bf16.msra.mxu0 0
    %1452 = vmatprep.subr.bf16.mxu0 0
    %1453 = vmatpush2.bf16.msra.mxu0 0
    %1454 = vmatprep.subr.bf16.mxu0 0
    %1455 = vmatpush2.bf16.msra.mxu0 0
    %1456 = vmatprep.subr.bf16.mxu0 0
    %1457 = vmatpush2.bf16.msra.mxu0 0
    %1458 = vmatprep.subr.bf16.mxu0 0
    %1459 = vmatpush2.bf16.msra.mxu0 0
    %1460 = vmatprep.subr.bf16.mxu0 0
    %1461 = vmatpush2.bf16.msra.mxu0 0
    %1462 = vmatprep.subr.bf16.mxu0 0
    %1463 = vmatpush2.bf16.msra.mxu0 0
    %1464 = vmatprep.mubr.bf16.mxu0 0
    %1465 = vmatmul.mubr.bf16.gmra.mxu0 %v1418
    %v1466 = vpop.f32.mrf.mxu0
    %v1467 = vadd.f32 %v1368, %v1466
    %v1468 = vpop.f32.mrf.mxu0
    %v1469 = vadd.f32 %v1370, %v1468
    %v1470 = vpop.f32.mrf.mxu0
    %v1471 = vpop.f32.mrf.mxu0
    %1472 = vdwg.mxu0
    %1473 = vmatprep.subr.bf16.mxu0 0
    %1474 = vmatpush1.bf16.msra.mxu0 0
    %1475 = vmatprep.subr.bf16.mxu0 0
    %1476 = vmatpush1.bf16.msra.mxu0 0
    %1477 = vmatprep.subr.bf16.mxu0 0
    %1478 = vmatpush1.bf16.msra.mxu0 0
    %1479 = vmatprep.subr.bf16.mxu0 0
    %1480 = vmatpush1.bf16.msra.mxu0 0
    %1481 = vmatprep.subr.bf16.mxu0 0
    %1482 = vmatpush1.bf16.msra.mxu0 0
    %1483 = vmatprep.subr.bf16.mxu0 %v1430
    %1484 = vmatpush1.bf16.msra.mxu0 %v1427
    %1485 = vmatprep.subr.bf16.mxu0 %v1104
    %1486 = vmatpush1.bf16.msra.mxu0 %v1103
    %1487 = vmatprep.subr.bf16.mxu0 %v1100
    %1488 = vmatpush1.bf16.msra.mxu0 %v1099
    %1489 = vmatprep.subr.bf16.mxu0 0
    %1490 = vmatpush2.bf16.msra.mxu0 0
    %1491 = vmatprep.subr.bf16.mxu0 0
    %1492 = vmatpush2.bf16.msra.mxu0 0
    %1493 = vmatprep.subr.bf16.mxu0 0
    %1494 = vmatpush2.bf16.msra.mxu0 0
    %1495 = vmatprep.subr.bf16.mxu0 0
    %1496 = vmatpush2.bf16.msra.mxu0 0
    %1497 = vmatprep.subr.bf16.mxu0 0
    %1498 = vmatpush2.bf16.msra.mxu0 0
    %1499 = vmatprep.subr.bf16.mxu0 0
    %1500 = vmatpush2.bf16.msra.mxu0 0
    %1501 = vmatprep.subr.bf16.mxu0 0
    %1502 = vmatpush2.bf16.msra.mxu0 0
    %1503 = vmatprep.subr.bf16.mxu0 0
    %1504 = vmatpush2.bf16.msra.mxu0 0
    %1505 = vmatprep.mubr.bf16.mxu0 0
    %1506 = vmatmul.mubr.bf16.gmra.mxu0 %v1418
    %v1507 = vpop.f32.mrf.mxu0
    %v1508 = vadd.f32 %v1409, %v1507
    %v1509 = vpop.f32.mrf.mxu0
    %v1510 = vadd.f32 %v1411, %v1509
    %v1511 = vpop.f32.mrf.mxu0
    %v1512 = vpop.f32.mrf.mxu0
    %1513 = vdwg.mxu0
    %1514 = vset.pattern.permute.xlu0 19
    %1515 = vperm.xlu0 %1514, %v71
    %v1516 = vpop.permute.xlu0 %1515
    %v1518 = vadd.f32 %v1467, %v1516
    %v1519 = vadd.f32 %v1469, %v1516
    %v1520 = vadd.f32 %v1508, %v1516
    %v1521 = vadd.f32 %v1510, %v1516
    %v1522 = vmax.f32 %v1518, 0.0
    %v1523 = vmax.f32 %v1519, 0.0
    %v1524 = vmax.f32 %v1520, 0.0
    %v1525 = vmax.f32 %v1521, 0.0
    %1526 = vset.pattern.permute.xlu0 24
    %1527 = vperm.xlu0 %1526, %v71
    %v1528 = vpop.permute.xlu0 %1527
    %v1530 = vmul.f32 %v1522, %v1528
    %v1531 = vmul.f32 %v1523, %v1528
    %v1532 = vmul.f32 %v1524, %v1528
    %v1533 = vmul.f32 %v1525, %v1528
    %1534 = vrot.lane.b32.xlu0 %v1522, 17
    %v1535 = vpop.permute.xlu0 %1534
    %1536 = vrot.lane.b32.xlu0 %v1523, 17
    %v1537 = vpop.permute.xlu0 %1536
    %1538 = vrot.lane.b32.xlu0 %v1524, 17
    %v1539 = vpop.permute.xlu0 %1538
    %1540 = vrot.lane.b32.xlu0 %v1525, 17
    %v1541 = vpop.permute.xlu0 %1540
    %v1542 = vsel %vm88, %v1539, %v1541
    %v1543 = vsel %vm88, %v1537, %v1539
    %v1544 = vsel %vm88, %v1535, %v1537
    %v1545 = vsel %vm88, %v1541, %v1535
    %v1546 = vmul.f32 %v1545, %v99
    %v1547 = vmul.f32 %v1544, %v103
    %v1548 = vmul.f32 %v1543, %v107
    %v1549 = vmul.f32 %v1542, %v111
    %1550 = vset.pattern.permute.xlu0 20
    %1551 = vperm.xlu0 %1550, %v71
    %v1552 = vpop.permute.xlu0 %1551
    %v1554 = vmul.f32 %v1546, %v1552
    %v1555 = vmul.f32 %v1547, %v1552
    %v1556 = vmul.f32 %v1548, %v1552
    %v1557 = vmul.f32 %v1549, %v1552
    %v1558 = vadd.f32 %v1530, %v1554
    %v1559 = vadd.f32 %v1531, %v1555
    %v1560 = vadd.f32 %v1532, %v1556
    %v1561 = vadd.f32 %v1533, %v1557
    %1562 = vrot.lane.b32.xlu0 %v1522, 16
    %v1563 = vpop.permute.xlu0 %1562
    %1564 = vrot.lane.b32.xlu0 %v1523, 16
    %v1565 = vpop.permute.xlu0 %1564
    %1566 = vrot.lane.b32.xlu0 %v1524, 16
    %v1567 = vpop.permute.xlu0 %1566
    %1568 = vrot.lane.b32.xlu0 %v1525, 16
    %v1569 = vpop.permute.xlu0 %1568
    %v1570 = vsel %vm128, %v1567, %v1569
    %v1571 = vsel %vm128, %v1565, %v1567
    %v1572 = vsel %vm128, %v1563, %v1565
    %v1573 = vsel %vm128, %v1569, %v1563
    %v1574 = vmul.f32 %v1573, %v139
    %v1575 = vmul.f32 %v1572, %v143
    %v1576 = vmul.f32 %v1571, %v147
    %v1577 = vmul.f32 %v1570, %v151
    %1578 = vset.pattern.permute.xlu0 21
    %1579 = vperm.xlu0 %1578, %v71
    %v1580 = vpop.permute.xlu0 %1579
    %v1582 = vmul.f32 %v1574, %v1580
    %v1583 = vmul.f32 %v1575, %v1580
    %v1584 = vmul.f32 %v1576, %v1580
    %v1585 = vmul.f32 %v1577, %v1580
    %v1586 = vadd.f32 %v1558, %v1582
    %v1587 = vadd.f32 %v1559, %v1583
    %v1588 = vadd.f32 %v1560, %v1584
    %v1589 = vadd.f32 %v1561, %v1585
    %1590 = vrot.lane.b32.xlu0 %v1522, 15
    %v1591 = vpop.permute.xlu0 %1590
    %1592 = vrot.lane.b32.xlu0 %v1523, 15
    %v1593 = vpop.permute.xlu0 %1592
    %1594 = vrot.lane.b32.xlu0 %v1524, 15
    %v1595 = vpop.permute.xlu0 %1594
    %1596 = vrot.lane.b32.xlu0 %v1525, 15
    %v1597 = vpop.permute.xlu0 %1596
    %v1598 = vsel %vm168, %v1595, %v1597
    %v1599 = vsel %vm168, %v1593, %v1595
    %v1600 = vsel %vm168, %v1591, %v1593
    %v1601 = vsel %vm168, %v1597, %v1591
    %v1602 = vmul.f32 %v1601, %v179
    %v1603 = vmul.f32 %v1600, %v183
    %v1604 = vmul.f32 %v1599, %v187
    %v1605 = vmul.f32 %v1598, %v191
    %1606 = vset.pattern.permute.xlu0 22
    %1607 = vperm.xlu0 %1606, %v71
    %v1608 = vpop.permute.xlu0 %1607
    %v1610 = vmul.f32 %v1602, %v1608
    %v1611 = vmul.f32 %v1603, %v1608
    %v1612 = vmul.f32 %v1604, %v1608
    %v1613 = vmul.f32 %v1605, %v1608
    %v1614 = vadd.f32 %v1586, %v1610
    %v1615 = vadd.f32 %v1587, %v1611
    %v1616 = vadd.f32 %v1588, %v1612
    %v1617 = vadd.f32 %v1589, %v1613
    %1618 = vrot.lane.b32.xlu0 %v1522, 1
    %v1619 = vpop.permute.xlu0 %1618
    %1620 = vrot.lane.b32.xlu0 %v1523, 1
    %v1621 = vpop.permute.xlu0 %1620
    %1622 = vrot.lane.b32.xlu0 %v1524, 1
    %v1623 = vpop.permute.xlu0 %1622
    %1624 = vrot.lane.b32.xlu0 %v1525, 1
    %v1625 = vpop.permute.xlu0 %1624
    %v1626 = vsel %vm208, %v1623, %v1625
    %v1627 = vsel %vm208, %v1621, %v1623
    %v1628 = vsel %vm208, %v1619, %v1621
    %v1629 = vsel %vm208, %v1625, %v1619
    %v1630 = vmul.f32 %v1629, %v219
    %v1631 = vmul.f32 %v1628, %v223
    %v1632 = vmul.f32 %v1627, %v227
    %v1633 = vmul.f32 %v1626, %v231
    %1634 = vset.pattern.permute.xlu0 23
    %1635 = vperm.xlu0 %1634, %v71
    %v1636 = vpop.permute.xlu0 %1635
    %v1638 = vmul.f32 %v1630, %v1636
    %v1639 = vmul.f32 %v1631, %v1636
    %v1640 = vmul.f32 %v1632, %v1636
    %v1641 = vmul.f32 %v1633, %v1636
    %v1642 = vadd.f32 %v1614, %v1638
    %v1643 = vadd.f32 %v1615, %v1639
    %v1644 = vadd.f32 %v1616, %v1640
    %v1645 = vadd.f32 %v1617, %v1641
    %1646 = vrot.lane.b32.xlu0 %v1522, 127
    %v1647 = vpop.permute.xlu0 %1646
    %1648 = vrot.lane.b32.xlu0 %v1523, 127
    %v1649 = vpop.permute.xlu0 %1648
    %1650 = vrot.lane.b32.xlu0 %v1524, 127
    %v1651 = vpop.permute.xlu0 %1650
    %1652 = vrot.lane.b32.xlu0 %v1525, 127
    %v1653 = vpop.permute.xlu0 %1652
    %v1654 = vsel %vm248, %v1651, %v1653
    %v1655 = vsel %vm248, %v1649, %v1651
    %v1656 = vsel %vm248, %v1647, %v1649
    %v1657 = vsel %vm248, %v1653, %v1647
    %v1658 = vmul.f32 %v1656, %v259
    %v1659 = vmul.f32 %v1655, %v263
    %v1660 = vmul.f32 %v1654, %v267
    %v1661 = vmul.f32 %v1657, %v271
    %1662 = vset.pattern.permute.xlu0 25
    %1663 = vperm.xlu0 %1662, %v71
    %v1664 = vpop.permute.xlu0 %1663
    %v1666 = vmul.f32 %v1658, %v1664
    %v1667 = vmul.f32 %v1659, %v1664
    %v1668 = vmul.f32 %v1660, %v1664
    %v1669 = vmul.f32 %v1661, %v1664
    %v1670 = vadd.f32 %v1642, %v1666
    %v1671 = vadd.f32 %v1643, %v1667
    %v1672 = vadd.f32 %v1644, %v1668
    %v1673 = vadd.f32 %v1645, %v1669
    %1674 = vrot.lane.b32.xlu0 %v1522, 113
    %v1675 = vpop.permute.xlu0 %1674
    %1676 = vrot.lane.b32.xlu0 %v1523, 113
    %v1677 = vpop.permute.xlu0 %1676
    %1678 = vrot.lane.b32.xlu0 %v1524, 113
    %v1679 = vpop.permute.xlu0 %1678
    %1680 = vrot.lane.b32.xlu0 %v1525, 113
    %v1681 = vpop.permute.xlu0 %1680
    %v1682 = vsel %vm288, %v1679, %v1681
    %v1683 = vsel %vm288, %v1677, %v1679
    %v1684 = vsel %vm288, %v1675, %v1677
    %v1685 = vsel %vm288, %v1681, %v1675
    %v1686 = vmul.f32 %v1684, %v299
    %v1687 = vmul.f32 %v1683, %v303
    %v1688 = vmul.f32 %v1682, %v307
    %v1689 = vmul.f32 %v1685, %v311
    %1690 = vset.pattern.permute.xlu0 26
    %1691 = vperm.xlu0 %1690, %v71
    %v1692 = vpop.permute.xlu0 %1691
    %v1694 = vmul.f32 %v1686, %v1692
    %v1695 = vmul.f32 %v1687, %v1692
    %v1696 = vmul.f32 %v1688, %v1692
    %v1697 = vmul.f32 %v1689, %v1692
    %v1698 = vadd.f32 %v1670, %v1694
    %v1699 = vadd.f32 %v1671, %v1695
    %v1700 = vadd.f32 %v1672, %v1696
    %v1701 = vadd.f32 %v1673, %v1697
    %1702 = vrot.lane.b32.xlu0 %v1522, 112
    %v1703 = vpop.permute.xlu0 %1702
    %1704 = vrot.lane.b32.xlu0 %v1523, 112
    %v1705 = vpop.permute.xlu0 %1704
    %1706 = vrot.lane.b32.xlu0 %v1524, 112
    %v1707 = vpop.permute.xlu0 %1706
    %1708 = vrot.lane.b32.xlu0 %v1525, 112
    %v1709 = vpop.permute.xlu0 %1708
    %v1710 = vsel %vm328, %v1707, %v1709
    %v1711 = vsel %vm328, %v1705, %v1707
    %v1712 = vsel %vm328, %v1703, %v1705
    %v1713 = vsel %vm328, %v1709, %v1703
    %v1714 = vmul.f32 %v1712, %v339
    %v1715 = vmul.f32 %v1711, %v343
    %v1716 = vmul.f32 %v1710, %v347
    %v1717 = vmul.f32 %v1713, %v351
    %1718 = vset.pattern.permute.xlu0 27
    %1719 = vperm.xlu0 %1718, %v71
    %v1720 = vpop.permute.xlu0 %1719
    %v1722 = vmul.f32 %v1714, %v1720
    %v1723 = vmul.f32 %v1715, %v1720
    %v1724 = vmul.f32 %v1716, %v1720
    %v1725 = vmul.f32 %v1717, %v1720
    %v1726 = vadd.f32 %v1698, %v1722
    %v1727 = vadd.f32 %v1699, %v1723
    %v1728 = vadd.f32 %v1700, %v1724
    %v1729 = vadd.f32 %v1701, %v1725
    %1730 = vrot.lane.b32.xlu0 %v1522, 111
    %v1731 = vpop.permute.xlu0 %1730
    %1732 = vrot.lane.b32.xlu0 %v1523, 111
    %v1733 = vpop.permute.xlu0 %1732
    %1734 = vrot.lane.b32.xlu0 %v1524, 111
    %v1735 = vpop.permute.xlu0 %1734
    %1736 = vrot.lane.b32.xlu0 %v1525, 111
    %v1737 = vpop.permute.xlu0 %1736
    %v1738 = vsel %vm368, %v1735, %v1737
    %v1739 = vsel %vm368, %v1733, %v1735
    %v1740 = vsel %vm368, %v1731, %v1733
    %v1741 = vsel %vm368, %v1737, %v1731
    %v1742 = vmul.f32 %v1740, %v379
    %v1743 = vmul.f32 %v1739, %v383
    %v1744 = vmul.f32 %v1738, %v387
    %v1745 = vmul.f32 %v1741, %v391
    %1746 = vset.pattern.permute.xlu0 28
    %1747 = vperm.xlu0 %1746, %v71
    %v1748 = vpop.permute.xlu0 %1747
    %v1750 = vmul.f32 %v1742, %v1748
    %v1751 = vmul.f32 %v1743, %v1748
    %v1752 = vmul.f32 %v1744, %v1748
    %v1753 = vmul.f32 %v1745, %v1748
    %v1754 = vadd.f32 %v1726, %v1750
    %v1755 = vadd.f32 %v1727, %v1751
    %v1756 = vadd.f32 %v1728, %v1752
    %v1757 = vadd.f32 %v1729, %v1753
    %1758 = vset.pattern.permute.xlu0 29
    %1759 = vperm.xlu0 %1758, %v71
    %v1760 = vpop.permute.xlu0 %1759
    %v1762 = vadd.f32 %v1754, %v1760
    %v1763 = vadd.f32 %v1755, %v1760
    %v1764 = vadd.f32 %v1756, %v1760
    %v1765 = vadd.f32 %v1757, %v1760
    %v1766 = vmax.f32 %v1762, 0.0
    %v1767 = vmax.f32 %v1763, 0.0
    %v1768 = vmax.f32 %v1764, 0.0
    %v1769 = vmax.f32 %v1765, 0.0
    %1770 = vset.pattern.permute.xlu0 30
    %1771 = vperm.xlu0 %1770, %v71
    %v1772 = vpop.permute.xlu0 %1771
    %v1774 = vmul.f32 %v1522, %v1772
    %v1775 = vmul.f32 %v1523, %v1772
    %v1776 = vmul.f32 %v1524, %v1772
    %v1777 = vmul.f32 %v1525, %v1772
    %1778 = vset.pattern.permute.xlu0 31
    %1779 = vperm.xlu0 %1778, %v71
    %v1780 = vpop.permute.xlu0 %1779
    %v1782 = vadd.f32 %v1774, %v1780
    %v1783 = vadd.f32 %v1775, %v1780
    %v1784 = vadd.f32 %v1776, %v1780
    %v1785 = vadd.f32 %v1777, %v1780
    %1786 = vset.pattern.permute.xlu0 32
    %1787 = vperm.xlu0 %1786, %v71
    %v1788 = vpop.permute.xlu0 %1787
    %v1790 = vmul.f32 %v1766, %v1788
    %v1791 = vmul.f32 %v1767, %v1788
    %v1792 = vmul.f32 %v1768, %v1788
    %v1793 = vmul.f32 %v1769, %v1788
    %1794 = vset.pattern.permute.xlu0 33
    %1795 = vperm.xlu0 %1794, %v71
    %v1796 = vpop.permute.xlu0 %1795
    %v1798 = vadd.f32 %v1790, %v1796
    %v1799 = vadd.f32 %v1791, %v1796
    %v1800 = vadd.f32 %v1792, %v1796
    %v1801 = vadd.f32 %v1793, %v1796
    %s1802 = scalar_lea.vmem [#allocation5], 193
    %v1803 = vld [vmem:[%s1802] ss:$8 sm:$0xf]
    %v1805 = vlaneseq
    %v1806 = vshrl.u32 %v1805, 7
    %v1807 = vsub.s32 0, %v1806
    %v1808 = vrot.slane %v1803, %v1807
    %v1809 = vlaneseq
    %v1810 = vshrl.u32 %v1809, 7
    %v1811 = vsub.s32 1, %v1810
    %v1812 = vrot.slane %v1803, %v1811
    %v1813 = vlaneseq
    %v1814 = vshrl.u32 %v1813, 7
    %v1815 = vsub.s32 2, %v1814
    %v1816 = vrot.slane %v1803, %v1815
    %v1817 = vlaneseq
    %v1818 = vshrl.u32 %v1817, 7
    %v1819 = vsub.s32 3, %v1818
    %v1820 = vrot.slane %v1803, %v1819
    %v1825 = vmul.f32 %v1782, %v1808
    %v1826 = vmul.f32 %v1783, %v1812
    %v1827 = vmul.f32 %v1784, %v1816
    %v1828 = vmul.f32 %v1785, %v1820
    %v1829 = vsel %vm448, %v1825, 0.0
    %v1830 = vsel %vm448, %v1826, 0.0
    %v1831 = vadd.f32 %v1829, %v1830
    %v1832 = vsel %vm448, %v1827, 0.0
    %v1833 = vadd.f32 %v1831, %v1832
    %v1834 = vsel %vm448, %v1828, 0.0
    %v1835 = vadd.f32 %v1833, %v1834
    %1836 = vadd.xlane.f32.xlu0 %v1835
    %v1837 = vpop.xlane.xlu0 %1836
    %v1838 = vmul.f32 %v1837, 0.00390625
    %v1839 = vmul.f32 %v1798, %v1808
    %v1840 = vmul.f32 %v1799, %v1812
    %v1841 = vmul.f32 %v1800, %v1816
    %v1842 = vmul.f32 %v1801, %v1820
    %v1843 = vsel %vm448, %v1839, 0.0
    %v1844 = vsel %vm448, %v1840, 0.0
    %v1845 = vadd.f32 %v1843, %v1844
    %v1846 = vsel %vm448, %v1841, 0.0
    %v1847 = vadd.f32 %v1845, %v1846
    %v1848 = vsel %vm448, %v1842, 0.0
    %v1849 = vadd.f32 %v1847, %v1848
    %1850 = vadd.xlane.f32.xlu0 %v1849
    %v1851 = vpop.xlane.xlu0 %1850
    %v1852 = vmul.f32 %v1851, 0.00390625
    %v1854 = vrot.slane %v1838, 7
    %v1857 = vrot.slane %v1852, 3
    %vm1859 = vcmask 1040384
    %v1860 = vsel %vm1859, 0.0, %v1854
    %vm1861 = vcmask 1044480
    %v1862 = vsel %vm1861, %v1860, %v1857
    %v1863 = vsel %vm1859, %v1857, 0.0
    %v1864 = vlaneseq
    %v1865 = vshrl.u32 %v1864, 7
    %v1866 = vsub.s32 0, %v1865
    %v1867 = vrot.slane %v71, %v1866
    %1869 = vrot.lane.b32.xlu0 %v1862, 34
    %v1870 = vpop.permute.xlu0 %1869
    %v1872 = vmul.f32 %v1867, %v1870
    %v1873 = vlaneseq
    %v1874 = vshrl.u32 %v1873, 7
    %v1875 = vsub.s32 1, %v1874
    %v1876 = vrot.slane %v71, %v1875
    %vm1878 = vcmask 1046528
    %v1879 = vrot.slane %v1862, 1
    %v1880 = vrot.slane %v1863, 1
    %v1881 = vsel %vm1878, %v1879, %v1880
    %1882 = vrot.lane.b32.xlu0 %v1881, 34
    %v1883 = vpop.permute.xlu0 %1882
    %v1885 = vmul.f32 %v1876, %v1883
    %v1886 = vadd.f32 %v1872, %v1885
    %v1887 = vlaneseq
    %v1888 = vshrl.u32 %v1887, 7
    %v1889 = vsub.s32 2, %v1888
    %v1890 = vrot.slane %v71, %v1889
    %vm1891 = vcmask 1045504
    %v1892 = vrot.slane %v1862, 2
    %v1893 = vrot.slane %v1863, 2
    %v1894 = vsel %vm1891, %v1892, %v1893
    %1895 = vrot.lane.b32.xlu0 %v1894, 34
    %v1896 = vpop.permute.xlu0 %1895
    %v1898 = vmul.f32 %v1890, %v1896
    %v1899 = vadd.f32 %v1886, %v1898
    %v1900 = vsub.f32 0.0, %v1899
    %v1901 = vmul.f32 %v1900, 1.442695
    %v1902 = vpow.pop %v1901
    %v1903 = vadd.f32 %v1902, 1.0
    %v1904 = vrcp.pop %v1903
    %1906 = vset.pattern.permute.xlu0 34
    %1907 = vperm.xlu0 %1906, %v1904
    %v1908 = vpop.permute.xlu0 %1907
    %v1910 = vmul.f32 %v1908, %v1808
    %v1911 = vmul.f32 %v1908, %v1812
    %v1912 = vmul.f32 %v1908, %v1816
    %v1913 = vmul.f32 %v1908, %v1820
    %s1914 = scalar_lea.vmem [#allocation5], 194
    %v1915 = vld [vmem:[%s1914] ss:$8 sm:$0xf]
    %v1917 = vlaneseq
    %v1918 = vshrl.u32 %v1917, 7
    %v1919 = vsub.s32 0, %v1918
    %v1920 = vrot.slane %v1915, %v1919
    %v1921 = vlaneseq
    %v1922 = vshrl.u32 %v1921, 7
    %v1923 = vsub.s32 1, %v1922
    %v1924 = vrot.slane %v1915, %v1923
    %v1925 = vlaneseq
    %v1926 = vshrl.u32 %v1925, 7
    %v1927 = vsub.s32 2, %v1926
    %v1928 = vrot.slane %v1915, %v1927
    %v1929 = vlaneseq
    %v1930 = vshrl.u32 %v1929, 7
    %v1931 = vsub.s32 3, %v1930
    %v1932 = vrot.slane %v1915, %v1931
    %v1937 = vmul.f32 %v1782, %v1920
    %v1938 = vmul.f32 %v1783, %v1924
    %v1939 = vmul.f32 %v1784, %v1928
    %v1940 = vmul.f32 %v1785, %v1932
    %v1941 = vsel %vm448, %v1937, 0.0
    %v1942 = vsel %vm448, %v1938, 0.0
    %v1943 = vadd.f32 %v1941, %v1942
    %v1944 = vsel %vm448, %v1939, 0.0
    %v1945 = vadd.f32 %v1943, %v1944
    %v1946 = vsel %vm448, %v1940, 0.0
    %v1947 = vadd.f32 %v1945, %v1946
    %1948 = vadd.xlane.f32.xlu0 %v1947
    %v1949 = vpop.xlane.xlu0 %1948
    %v1950 = vmul.f32 %v1949, 0.00390625
    %v1951 = vmul.f32 %v1798, %v1920
    %v1952 = vmul.f32 %v1799, %v1924
    %v1953 = vmul.f32 %v1800, %v1928
    %v1954 = vmul.f32 %v1801, %v1932
    %v1955 = vsel %vm448, %v1951, 0.0
    %v1956 = vsel %vm448, %v1952, 0.0
    %v1957 = vadd.f32 %v1955, %v1956
    %v1958 = vsel %vm448, %v1953, 0.0
    %v1959 = vadd.f32 %v1957, %v1958
    %v1960 = vsel %vm448, %v1954, 0.0
    %v1961 = vadd.f32 %v1959, %v1960
    %1962 = vadd.xlane.f32.xlu0 %v1961
    %v1963 = vpop.xlane.xlu0 %1962
    %v1964 = vmul.f32 %v1963, 0.00390625
    %v1966 = vrot.slane %v1950, 7
    %v1969 = vrot.slane %v1964, 3
    %v1971 = vsel %vm1859, 0.0, %v1966
    %v1972 = vsel %vm1861, %v1971, %v1969
    %v1973 = vsel %vm1859, %v1969, 0.0
    %1975 = vrot.lane.b32.xlu0 %v1972, 34
    %v1976 = vpop.permute.xlu0 %1975
    %v1978 = vmul.f32 %v1867, %v1976
    %v1980 = vrot.slane %v1972, 1
    %v1981 = vrot.slane %v1973, 1
    %v1982 = vsel %vm1878, %v1980, %v1981
    %1983 = vrot.lane.b32.xlu0 %v1982, 34
    %v1984 = vpop.permute.xlu0 %1983
    %v1986 = vmul.f32 %v1876, %v1984
    %v1987 = vadd.f32 %v1978, %v1986
    %v1988 = vrot.slane %v1972, 2
    %v1989 = vrot.slane %v1973, 2
    %v1990 = vsel %vm1891, %v1988, %v1989
    %1991 = vrot.lane.b32.xlu0 %v1990, 34
    %v1992 = vpop.permute.xlu0 %1991
    %v1994 = vmul.f32 %v1890, %v1992
    %v1995 = vadd.f32 %v1987, %v1994
    %v1996 = vsub.f32 0.0, %v1995
    %v1997 = vmul.f32 %v1996, 1.442695
    %v1998 = vpow.pop %v1997
    %v1999 = vadd.f32 %v1998, 1.0
    %v2000 = vrcp.pop %v1999
    %2002 = vset.pattern.permute.xlu0 34
    %2003 = vperm.xlu0 %2002, %v2000
    %v2004 = vpop.permute.xlu0 %2003
    %v2006 = vmul.f32 %v2004, %v1920
    %v2007 = vmul.f32 %v2004, %v1924
    %v2008 = vmul.f32 %v2004, %v1928
    %v2009 = vmul.f32 %v2004, %v1932
    %v2010 = vadd.f32 %v1910, %v2006
    %v2011 = vadd.f32 %v1911, %v2007
    %v2012 = vadd.f32 %v1912, %v2008
    %v2013 = vadd.f32 %v1913, %v2009
    %v2014 = vmul.f32 %v1782, %v2010
    %v2015 = vmul.f32 %v1783, %v2011
    %v2016 = vmul.f32 %v1784, %v2012
    %v2017 = vmul.f32 %v1785, %v2013
    %v2022 = vrot.slane %v2010, 4
    %v2023 = vrot.slane %v2011, 4
    %v2024 = vrot.slane %v2012, 4
    %v2025 = vrot.slane %v2013, 4
    %v2030 = vmul.f32 %v1798, %v2022
    %v2031 = vmul.f32 %v1799, %v2023
    %v2032 = vmul.f32 %v1800, %v2024
    %v2033 = vmul.f32 %v1801, %v2025
    %v2034 = vsel %vm448, %v2014, 0.0
    %v2035 = vrot.slane %v2034, 4
    %v2036 = vadd.f32 %v2034, %v2035
    %v2037 = vrot.slane %v2036, 2
    %v2038 = vadd.f32 %v2036, %v2037
    %v2039 = vrot.slane %v2038, 1
    %v2040 = vadd.f32 %v2038, %v2039
    %v2041 = vsel %vm448, %v2015, 0.0
    %v2042 = vrot.slane %v2041, 4
    %v2043 = vadd.f32 %v2041, %v2042
    %v2044 = vrot.slane %v2043, 2
    %v2045 = vadd.f32 %v2043, %v2044
    %v2046 = vrot.slane %v2045, 1
    %v2047 = vadd.f32 %v2045, %v2046
    %v2048 = vsel %vm448, %v2016, 0.0
    %v2049 = vrot.slane %v2048, 4
    %v2050 = vadd.f32 %v2048, %v2049
    %v2051 = vrot.slane %v2050, 2
    %v2052 = vadd.f32 %v2050, %v2051
    %v2053 = vrot.slane %v2052, 1
    %v2054 = vadd.f32 %v2052, %v2053
    %v2055 = vsel %vm448, %v2017, 0.0
    %v2056 = vrot.slane %v2055, 4
    %v2057 = vadd.f32 %v2055, %v2056
    %v2058 = vrot.slane %v2057, 2
    %v2059 = vadd.f32 %v2057, %v2058
    %v2060 = vrot.slane %v2059, 1
    %v2061 = vadd.f32 %v2059, %v2060
    %v2062 = vsel %vm448, %v2030, 0.0
    %v2063 = vrot.slane %v2062, 4
    %v2064 = vadd.f32 %v2062, %v2063
    %v2065 = vrot.slane %v2064, 2
    %v2066 = vadd.f32 %v2064, %v2065
    %v2067 = vrot.slane %v2066, 1
    %v2068 = vadd.f32 %v2066, %v2067
    %v2069 = vsel %vm448, %v2031, 0.0
    %v2070 = vrot.slane %v2069, 4
    %v2071 = vadd.f32 %v2069, %v2070
    %v2072 = vrot.slane %v2071, 2
    %v2073 = vadd.f32 %v2071, %v2072
    %v2074 = vrot.slane %v2073, 1
    %v2075 = vadd.f32 %v2073, %v2074
    %v2076 = vsel %vm448, %v2032, 0.0
    %v2077 = vrot.slane %v2076, 4
    %v2078 = vadd.f32 %v2076, %v2077
    %v2079 = vrot.slane %v2078, 2
    %v2080 = vadd.f32 %v2078, %v2079
    %v2081 = vrot.slane %v2080, 1
    %v2082 = vadd.f32 %v2080, %v2081
    %v2083 = vsel %vm448, %v2033, 0.0
    %v2084 = vrot.slane %v2083, 4
    %v2085 = vadd.f32 %v2083, %v2084
    %v2086 = vrot.slane %v2085, 2
    %v2087 = vadd.f32 %v2085, %v2086
    %v2088 = vrot.slane %v2087, 1
    %v2089 = vadd.f32 %v2087, %v2088
    %v2090 = vadd.f32 %v2040, %v2068
    %v2091 = vadd.f32 %v2047, %v2075
    %v2092 = vadd.f32 %v2054, %v2082
    %v2093 = vadd.f32 %v2061, %v2089
    %v2094 = vmul.f32 %v2090, 0.125
    %v2095 = vmul.f32 %v2091, 0.125
    %v2096 = vmul.f32 %v2092, 0.125
    %v2097 = vmul.f32 %v2093, 0.125
    %v2098 = vsel %vm448, %v2014, -inf
    %v2099 = vrot.slane %v2098, 4
    %v2100 = vmax.f32 %v2098, %v2099
    %v2101 = vrot.slane %v2100, 2
    %v2102 = vmax.f32 %v2100, %v2101
    %v2103 = vrot.slane %v2102, 1
    %v2104 = vmax.f32 %v2102, %v2103
    %v2105 = vsel %vm448, %v2015, -inf
    %v2106 = vrot.slane %v2105, 4
    %v2107 = vmax.f32 %v2105, %v2106
    %v2108 = vrot.slane %v2107, 2
    %v2109 = vmax.f32 %v2107, %v2108
    %v2110 = vrot.slane %v2109, 1
    %v2111 = vmax.f32 %v2109, %v2110
    %v2112 = vsel %vm448, %v2016, -inf
    %v2113 = vrot.slane %v2112, 4
    %v2114 = vmax.f32 %v2112, %v2113
    %v2115 = vrot.slane %v2114, 2
    %v2116 = vmax.f32 %v2114, %v2115
    %v2117 = vrot.slane %v2116, 1
    %v2118 = vmax.f32 %v2116, %v2117
    %v2119 = vsel %vm448, %v2017, -inf
    %v2120 = vrot.slane %v2119, 4
    %v2121 = vmax.f32 %v2119, %v2120
    %v2122 = vrot.slane %v2121, 2
    %v2123 = vmax.f32 %v2121, %v2122
    %v2124 = vrot.slane %v2123, 1
    %v2125 = vmax.f32 %v2123, %v2124
    %v2126 = vsel %vm448, %v2030, -inf
    %v2127 = vrot.slane %v2126, 4
    %v2128 = vmax.f32 %v2126, %v2127
    %v2129 = vrot.slane %v2128, 2
    %v2130 = vmax.f32 %v2128, %v2129
    %v2131 = vrot.slane %v2130, 1
    %v2132 = vmax.f32 %v2130, %v2131
    %v2133 = vsel %vm448, %v2031, -inf
    %v2134 = vrot.slane %v2133, 4
    %v2135 = vmax.f32 %v2133, %v2134
    %v2136 = vrot.slane %v2135, 2
    %v2137 = vmax.f32 %v2135, %v2136
    %v2138 = vrot.slane %v2137, 1
    %v2139 = vmax.f32 %v2137, %v2138
    %v2140 = vsel %vm448, %v2032, -inf
    %v2141 = vrot.slane %v2140, 4
    %v2142 = vmax.f32 %v2140, %v2141
    %v2143 = vrot.slane %v2142, 2
    %v2144 = vmax.f32 %v2142, %v2143
    %v2145 = vrot.slane %v2144, 1
    %v2146 = vmax.f32 %v2144, %v2145
    %v2147 = vsel %vm448, %v2033, -inf
    %v2148 = vrot.slane %v2147, 4
    %v2149 = vmax.f32 %v2147, %v2148
    %v2150 = vrot.slane %v2149, 2
    %v2151 = vmax.f32 %v2149, %v2150
    %v2152 = vrot.slane %v2151, 1
    %v2153 = vmax.f32 %v2151, %v2152
    %v2154 = vmax.f32 %v2104, %v2132
    %v2155 = vmax.f32 %v2111, %v2139
    %v2156 = vmax.f32 %v2118, %v2146
    %v2157 = vmax.f32 %v2125, %v2153
    %v2158 = vsel %vm1859, %v2094, %v2154
    %v2159 = vsel %vm1859, %v2095, %v2155
    %v2160 = vsel %vm1859, %v2096, %v2156
    %v2161 = vsel %vm1859, %v2097, %v2157
    %2162 = vrot.lane.b32.xlu0 %v2158, 51
    %v2163 = vpop.permute.xlu0 %2162
    %2164 = vrot.lane.b32.xlu0 %v2159, 51
    %v2165 = vpop.permute.xlu0 %2164
    %2166 = vrot.lane.b32.xlu0 %v2160, 51
    %v2167 = vpop.permute.xlu0 %2166
    %2168 = vrot.lane.b32.xlu0 %v2161, 51
    %v2169 = vpop.permute.xlu0 %2168
    %vm2170 = vcmp.lt.s32.totalorder %v87, 51
    %v2171 = vsel %vm2170, %v2167, %v2169
    %v2172 = vsel %vm2170, %v2165, %v2167
    %v2173 = vsel %vm2170, %v2163, %v2165
    %v2174 = vsel %vm2170, %v2169, %v2163
    %v2175 = vld [vmem:[#allocation5] ss:$8 sm:$0xf]
    %v2177 = vlaneseq
    %v2178 = vshrl.u32 %v2177, 7
    %v2179 = vsub.s32 0, %v2178
    %v2180 = vrot.slane %v2175, %v2179
    %v2181 = vlaneseq
    %v2182 = vshrl.u32 %v2181, 7
    %v2183 = vsub.s32 1, %v2182
    %v2184 = vrot.slane %v2175, %v2183
    %v2185 = vlaneseq
    %v2186 = vshrl.u32 %v2185, 7
    %v2187 = vsub.s32 2, %v2186
    %v2188 = vrot.slane %v2175, %v2187
    %v2189 = vlaneseq
    %v2190 = vshrl.u32 %v2189, 7
    %v2191 = vsub.s32 3, %v2190
    %v2192 = vrot.slane %v2175, %v2191
    %v2197 = vmul.f32 %v2174, %v2180
    %v2198 = vmul.f32 %v2173, %v2184
    %v2199 = vmul.f32 %v2172, %v2188
    %v2200 = vmul.f32 %v2171, %v2192
    %2201 = vrot.lane.b32.xlu0 %v2158, 50
    %v2202 = vpop.permute.xlu0 %2201
    %2203 = vrot.lane.b32.xlu0 %v2159, 50
    %v2204 = vpop.permute.xlu0 %2203
    %2205 = vrot.lane.b32.xlu0 %v2160, 50
    %v2206 = vpop.permute.xlu0 %2205
    %2207 = vrot.lane.b32.xlu0 %v2161, 50
    %v2208 = vpop.permute.xlu0 %2207
    %vm2209 = vcmp.lt.s32.totalorder %v87, 50
    %v2210 = vsel %vm2209, %v2206, %v2208
    %v2211 = vsel %vm2209, %v2204, %v2206
    %v2212 = vsel %vm2209, %v2202, %v2204
    %v2213 = vsel %vm2209, %v2208, %v2202
    %s2214 = scalar_lea.vmem [#allocation5], 1
    %v2215 = vld [vmem:[%s2214] ss:$8 sm:$0xf]
    %v2217 = vlaneseq
    %v2218 = vshrl.u32 %v2217, 7
    %v2219 = vsub.s32 0, %v2218
    %v2220 = vrot.slane %v2215, %v2219
    %v2221 = vlaneseq
    %v2222 = vshrl.u32 %v2221, 7
    %v2223 = vsub.s32 1, %v2222
    %v2224 = vrot.slane %v2215, %v2223
    %v2225 = vlaneseq
    %v2226 = vshrl.u32 %v2225, 7
    %v2227 = vsub.s32 2, %v2226
    %v2228 = vrot.slane %v2215, %v2227
    %v2229 = vlaneseq
    %v2230 = vshrl.u32 %v2229, 7
    %v2231 = vsub.s32 3, %v2230
    %v2232 = vrot.slane %v2215, %v2231
    %v2237 = vmul.f32 %v2213, %v2220
    %v2238 = vmul.f32 %v2212, %v2224
    %v2239 = vmul.f32 %v2211, %v2228
    %v2240 = vmul.f32 %v2210, %v2232
    %2241 = vrot.lane.b32.xlu0 %v2158, 49
    %v2242 = vpop.permute.xlu0 %2241
    %2243 = vrot.lane.b32.xlu0 %v2159, 49
    %v2244 = vpop.permute.xlu0 %2243
    %2245 = vrot.lane.b32.xlu0 %v2160, 49
    %v2246 = vpop.permute.xlu0 %2245
    %2247 = vrot.lane.b32.xlu0 %v2161, 49
    %v2248 = vpop.permute.xlu0 %2247
    %vm2249 = vcmp.lt.s32.totalorder %v87, 49
    %v2250 = vsel %vm2249, %v2246, %v2248
    %v2251 = vsel %vm2249, %v2244, %v2246
    %v2252 = vsel %vm2249, %v2242, %v2244
    %v2253 = vsel %vm2249, %v2248, %v2242
    %s2254 = scalar_lea.vmem [#allocation5], 2
    %v2255 = vld [vmem:[%s2254] ss:$8 sm:$0xf]
    %v2257 = vlaneseq
    %v2258 = vshrl.u32 %v2257, 7
    %v2259 = vsub.s32 0, %v2258
    %v2260 = vrot.slane %v2255, %v2259
    %v2261 = vlaneseq
    %v2262 = vshrl.u32 %v2261, 7
    %v2263 = vsub.s32 1, %v2262
    %v2264 = vrot.slane %v2255, %v2263
    %v2265 = vlaneseq
    %v2266 = vshrl.u32 %v2265, 7
    %v2267 = vsub.s32 2, %v2266
    %v2268 = vrot.slane %v2255, %v2267
    %v2269 = vlaneseq
    %v2270 = vshrl.u32 %v2269, 7
    %v2271 = vsub.s32 3, %v2270
    %v2272 = vrot.slane %v2255, %v2271
    %v2277 = vmul.f32 %v2253, %v2260
    %v2278 = vmul.f32 %v2252, %v2264
    %v2279 = vmul.f32 %v2251, %v2268
    %v2280 = vmul.f32 %v2250, %v2272
    %2281 = vrot.lane.b32.xlu0 %v2158, 48
    %v2282 = vpop.permute.xlu0 %2281
    %2283 = vrot.lane.b32.xlu0 %v2159, 48
    %v2284 = vpop.permute.xlu0 %2283
    %2285 = vrot.lane.b32.xlu0 %v2160, 48
    %v2286 = vpop.permute.xlu0 %2285
    %2287 = vrot.lane.b32.xlu0 %v2161, 48
    %v2288 = vpop.permute.xlu0 %2287
    %vm2289 = vcmp.lt.s32.totalorder %v87, 48
    %v2290 = vsel %vm2289, %v2286, %v2288
    %v2291 = vsel %vm2289, %v2284, %v2286
    %v2292 = vsel %vm2289, %v2282, %v2284
    %v2293 = vsel %vm2289, %v2288, %v2282
    %s2294 = scalar_lea.vmem [#allocation5], 3
    %v2295 = vld [vmem:[%s2294] ss:$8 sm:$0xf]
    %v2297 = vlaneseq
    %v2298 = vshrl.u32 %v2297, 7
    %v2299 = vsub.s32 0, %v2298
    %v2300 = vrot.slane %v2295, %v2299
    %v2301 = vlaneseq
    %v2302 = vshrl.u32 %v2301, 7
    %v2303 = vsub.s32 1, %v2302
    %v2304 = vrot.slane %v2295, %v2303
    %v2305 = vlaneseq
    %v2306 = vshrl.u32 %v2305, 7
    %v2307 = vsub.s32 2, %v2306
    %v2308 = vrot.slane %v2295, %v2307
    %v2309 = vlaneseq
    %v2310 = vshrl.u32 %v2309, 7
    %v2311 = vsub.s32 3, %v2310
    %v2312 = vrot.slane %v2295, %v2311
    %v2317 = vmul.f32 %v2293, %v2300
    %v2318 = vmul.f32 %v2292, %v2304
    %v2319 = vmul.f32 %v2291, %v2308
    %v2320 = vmul.f32 %v2290, %v2312
    %2321 = vrot.lane.b32.xlu0 %v2158, 47
    %v2322 = vpop.permute.xlu0 %2321
    %2323 = vrot.lane.b32.xlu0 %v2159, 47
    %v2324 = vpop.permute.xlu0 %2323
    %2325 = vrot.lane.b32.xlu0 %v2160, 47
    %v2326 = vpop.permute.xlu0 %2325
    %2327 = vrot.lane.b32.xlu0 %v2161, 47
    %v2328 = vpop.permute.xlu0 %2327
    %vm2329 = vcmp.lt.s32.totalorder %v87, 47
    %v2330 = vsel %vm2329, %v2326, %v2328
    %v2331 = vsel %vm2329, %v2324, %v2326
    %v2332 = vsel %vm2329, %v2322, %v2324
    %v2333 = vsel %vm2329, %v2328, %v2322
    %s2334 = scalar_lea.vmem [#allocation5], 4
    %v2335 = vld [vmem:[%s2334] ss:$8 sm:$0xf]
    %v2337 = vlaneseq
    %v2338 = vshrl.u32 %v2337, 7
    %v2339 = vsub.s32 0, %v2338
    %v2340 = vrot.slane %v2335, %v2339
    %v2341 = vlaneseq
    %v2342 = vshrl.u32 %v2341, 7
    %v2343 = vsub.s32 1, %v2342
    %v2344 = vrot.slane %v2335, %v2343
    %v2345 = vlaneseq
    %v2346 = vshrl.u32 %v2345, 7
    %v2347 = vsub.s32 2, %v2346
    %v2348 = vrot.slane %v2335, %v2347
    %v2349 = vlaneseq
    %v2350 = vshrl.u32 %v2349, 7
    %v2351 = vsub.s32 3, %v2350
    %v2352 = vrot.slane %v2335, %v2351
    %v2357 = vmul.f32 %v2333, %v2340
    %v2358 = vmul.f32 %v2332, %v2344
    %v2359 = vmul.f32 %v2331, %v2348
    %v2360 = vmul.f32 %v2330, %v2352
    %2361 = vrot.lane.b32.xlu0 %v2158, 46
    %v2362 = vpop.permute.xlu0 %2361
    %2363 = vrot.lane.b32.xlu0 %v2159, 46
    %v2364 = vpop.permute.xlu0 %2363
    %2365 = vrot.lane.b32.xlu0 %v2160, 46
    %v2366 = vpop.permute.xlu0 %2365
    %2367 = vrot.lane.b32.xlu0 %v2161, 46
    %v2368 = vpop.permute.xlu0 %2367
    %vm2369 = vcmp.lt.s32.totalorder %v87, 46
    %v2370 = vsel %vm2369, %v2366, %v2368
    %v2371 = vsel %vm2369, %v2364, %v2366
    %v2372 = vsel %vm2369, %v2362, %v2364
    %v2373 = vsel %vm2369, %v2368, %v2362
    %s2374 = scalar_lea.vmem [#allocation5], 5
    %v2375 = vld [vmem:[%s2374] ss:$8 sm:$0xf]
    %v2377 = vlaneseq
    %v2378 = vshrl.u32 %v2377, 7
    %v2379 = vsub.s32 0, %v2378
    %v2380 = vrot.slane %v2375, %v2379
    %v2381 = vlaneseq
    %v2382 = vshrl.u32 %v2381, 7
    %v2383 = vsub.s32 1, %v2382
    %v2384 = vrot.slane %v2375, %v2383
    %v2385 = vlaneseq
    %v2386 = vshrl.u32 %v2385, 7
    %v2387 = vsub.s32 2, %v2386
    %v2388 = vrot.slane %v2375, %v2387
    %v2389 = vlaneseq
    %v2390 = vshrl.u32 %v2389, 7
    %v2391 = vsub.s32 3, %v2390
    %v2392 = vrot.slane %v2375, %v2391
    %v2397 = vmul.f32 %v2373, %v2380
    %v2398 = vmul.f32 %v2372, %v2384
    %v2399 = vmul.f32 %v2371, %v2388
    %v2400 = vmul.f32 %v2370, %v2392
    %2401 = vrot.lane.b32.xlu0 %v2158, 45
    %v2402 = vpop.permute.xlu0 %2401
    %2403 = vrot.lane.b32.xlu0 %v2159, 45
    %v2404 = vpop.permute.xlu0 %2403
    %2405 = vrot.lane.b32.xlu0 %v2160, 45
    %v2406 = vpop.permute.xlu0 %2405
    %2407 = vrot.lane.b32.xlu0 %v2161, 45
    %v2408 = vpop.permute.xlu0 %2407
    %vm2409 = vcmp.lt.s32.totalorder %v87, 45
    %v2410 = vsel %vm2409, %v2406, %v2408
    %v2411 = vsel %vm2409, %v2404, %v2406
    %v2412 = vsel %vm2409, %v2402, %v2404
    %v2413 = vsel %vm2409, %v2408, %v2402
    %s2414 = scalar_lea.vmem [#allocation5], 6
    %v2415 = vld [vmem:[%s2414] ss:$8 sm:$0xf]
    %v2417 = vlaneseq
    %v2418 = vshrl.u32 %v2417, 7
    %v2419 = vsub.s32 0, %v2418
    %v2420 = vrot.slane %v2415, %v2419
    %v2421 = vlaneseq
    %v2422 = vshrl.u32 %v2421, 7
    %v2423 = vsub.s32 1, %v2422
    %v2424 = vrot.slane %v2415, %v2423
    %v2425 = vlaneseq
    %v2426 = vshrl.u32 %v2425, 7
    %v2427 = vsub.s32 2, %v2426
    %v2428 = vrot.slane %v2415, %v2427
    %v2429 = vlaneseq
    %v2430 = vshrl.u32 %v2429, 7
    %v2431 = vsub.s32 3, %v2430
    %v2432 = vrot.slane %v2415, %v2431
    %v2437 = vmul.f32 %v2413, %v2420
    %v2438 = vmul.f32 %v2412, %v2424
    %v2439 = vmul.f32 %v2411, %v2428
    %v2440 = vmul.f32 %v2410, %v2432
    %2441 = vrot.lane.b32.xlu0 %v2158, 35
    %v2442 = vpop.permute.xlu0 %2441
    %2443 = vrot.lane.b32.xlu0 %v2159, 35
    %v2444 = vpop.permute.xlu0 %2443
    %2445 = vrot.lane.b32.xlu0 %v2160, 35
    %v2446 = vpop.permute.xlu0 %2445
    %2447 = vrot.lane.b32.xlu0 %v2161, 35
    %v2448 = vpop.permute.xlu0 %2447
    %vm2449 = vcmp.lt.s32.totalorder %v87, 35
    %v2450 = vsel %vm2449, %v2446, %v2448
    %v2451 = vsel %vm2449, %v2444, %v2446
    %v2452 = vsel %vm2449, %v2442, %v2444
    %v2453 = vsel %vm2449, %v2448, %v2442
    %s2454 = scalar_lea.vmem [#allocation5], 7
    %v2455 = vld [vmem:[%s2454] ss:$8 sm:$0xf]
    %v2457 = vlaneseq
    %v2458 = vshrl.u32 %v2457, 7
    %v2459 = vsub.s32 0, %v2458
    %v2460 = vrot.slane %v2455, %v2459
    %v2461 = vlaneseq
    %v2462 = vshrl.u32 %v2461, 7
    %v2463 = vsub.s32 1, %v2462
    %v2464 = vrot.slane %v2455, %v2463
    %v2465 = vlaneseq
    %v2466 = vshrl.u32 %v2465, 7
    %v2467 = vsub.s32 2, %v2466
    %v2468 = vrot.slane %v2455, %v2467
    %v2469 = vlaneseq
    %v2470 = vshrl.u32 %v2469, 7
    %v2471 = vsub.s32 3, %v2470
    %v2472 = vrot.slane %v2455, %v2471
    %v2477 = vmul.f32 %v2453, %v2460
    %v2478 = vmul.f32 %v2452, %v2464
    %v2479 = vmul.f32 %v2451, %v2468
    %v2480 = vmul.f32 %v2450, %v2472
    %2481 = vrot.lane.b32.xlu0 %v2158, 34
    %v2482 = vpop.permute.xlu0 %2481
    %2483 = vrot.lane.b32.xlu0 %v2159, 34
    %v2484 = vpop.permute.xlu0 %2483
    %2485 = vrot.lane.b32.xlu0 %v2160, 34
    %v2486 = vpop.permute.xlu0 %2485
    %2487 = vrot.lane.b32.xlu0 %v2161, 34
    %v2488 = vpop.permute.xlu0 %2487
    %vm2489 = vcmp.lt.s32.totalorder %v87, 34
    %v2490 = vsel %vm2489, %v2486, %v2488
    %v2491 = vsel %vm2489, %v2484, %v2486
    %v2492 = vsel %vm2489, %v2482, %v2484
    %v2493 = vsel %vm2489, %v2488, %v2482
    %s2494 = scalar_lea.vmem [#allocation5], 32
    %v2495 = vld [vmem:[%s2494] ss:$8 sm:$0xf]
    %v2497 = vlaneseq
    %v2498 = vshrl.u32 %v2497, 7
    %v2499 = vsub.s32 0, %v2498
    %v2500 = vrot.slane %v2495, %v2499
    %v2501 = vlaneseq
    %v2502 = vshrl.u32 %v2501, 7
    %v2503 = vsub.s32 1, %v2502
    %v2504 = vrot.slane %v2495, %v2503
    %v2505 = vlaneseq
    %v2506 = vshrl.u32 %v2505, 7
    %v2507 = vsub.s32 2, %v2506
    %v2508 = vrot.slane %v2495, %v2507
    %v2509 = vlaneseq
    %v2510 = vshrl.u32 %v2509, 7
    %v2511 = vsub.s32 3, %v2510
    %v2512 = vrot.slane %v2495, %v2511
    %v2517 = vmul.f32 %v2493, %v2500
    %v2518 = vmul.f32 %v2492, %v2504
    %v2519 = vmul.f32 %v2491, %v2508
    %v2520 = vmul.f32 %v2490, %v2512
    %2521 = vrot.lane.b32.xlu0 %v2158, 33
    %v2522 = vpop.permute.xlu0 %2521
    %2523 = vrot.lane.b32.xlu0 %v2159, 33
    %v2524 = vpop.permute.xlu0 %2523
    %2525 = vrot.lane.b32.xlu0 %v2160, 33
    %v2526 = vpop.permute.xlu0 %2525
    %2527 = vrot.lane.b32.xlu0 %v2161, 33
    %v2528 = vpop.permute.xlu0 %2527
    %vm2529 = vcmp.lt.s32.totalorder %v87, 33
    %v2530 = vsel %vm2529, %v2526, %v2528
    %v2531 = vsel %vm2529, %v2524, %v2526
    %v2532 = vsel %vm2529, %v2522, %v2524
    %v2533 = vsel %vm2529, %v2528, %v2522
    %s2534 = scalar_lea.vmem [#allocation5], 33
    %v2535 = vld [vmem:[%s2534] ss:$8 sm:$0xf]
    %v2537 = vlaneseq
    %v2538 = vshrl.u32 %v2537, 7
    %v2539 = vsub.s32 0, %v2538
    %v2540 = vrot.slane %v2535, %v2539
    %v2541 = vlaneseq
    %v2542 = vshrl.u32 %v2541, 7
    %v2543 = vsub.s32 1, %v2542
    %v2544 = vrot.slane %v2535, %v2543
    %v2545 = vlaneseq
    %v2546 = vshrl.u32 %v2545, 7
    %v2547 = vsub.s32 2, %v2546
    %v2548 = vrot.slane %v2535, %v2547
    %v2549 = vlaneseq
    %v2550 = vshrl.u32 %v2549, 7
    %v2551 = vsub.s32 3, %v2550
    %v2552 = vrot.slane %v2535, %v2551
    %v2557 = vmul.f32 %v2533, %v2540
    %v2558 = vmul.f32 %v2532, %v2544
    %v2559 = vmul.f32 %v2531, %v2548
    %v2560 = vmul.f32 %v2530, %v2552
    %2561 = vrot.lane.b32.xlu0 %v2158, 32
    %v2562 = vpop.permute.xlu0 %2561
    %2563 = vrot.lane.b32.xlu0 %v2159, 32
    %v2564 = vpop.permute.xlu0 %2563
    %2565 = vrot.lane.b32.xlu0 %v2160, 32
    %v2566 = vpop.permute.xlu0 %2565
    %2567 = vrot.lane.b32.xlu0 %v2161, 32
    %v2568 = vpop.permute.xlu0 %2567
    %vm2569 = vcmp.lt.s32.totalorder %v87, 32
    %v2570 = vsel %vm2569, %v2566, %v2568
    %v2571 = vsel %vm2569, %v2564, %v2566
    %v2572 = vsel %vm2569, %v2562, %v2564
    %v2573 = vsel %vm2569, %v2568, %v2562
    %s2574 = scalar_lea.vmem [#allocation5], 34
    %v2575 = vld [vmem:[%s2574] ss:$8 sm:$0xf]
    %v2577 = vlaneseq
    %v2578 = vshrl.u32 %v2577, 7
    %v2579 = vsub.s32 0, %v2578
    %v2580 = vrot.slane %v2575, %v2579
    %v2581 = vlaneseq
    %v2582 = vshrl.u32 %v2581, 7
    %v2583 = vsub.s32 1, %v2582
    %v2584 = vrot.slane %v2575, %v2583
    %v2585 = vlaneseq
    %v2586 = vshrl.u32 %v2585, 7
    %v2587 = vsub.s32 2, %v2586
    %v2588 = vrot.slane %v2575, %v2587
    %v2589 = vlaneseq
    %v2590 = vshrl.u32 %v2589, 7
    %v2591 = vsub.s32 3, %v2590
    %v2592 = vrot.slane %v2575, %v2591
    %v2597 = vmul.f32 %v2573, %v2580
    %v2598 = vmul.f32 %v2572, %v2584
    %v2599 = vmul.f32 %v2571, %v2588
    %v2600 = vmul.f32 %v2570, %v2592
    %2601 = vrot.lane.b32.xlu0 %v2158, 31
    %v2602 = vpop.permute.xlu0 %2601
    %2603 = vrot.lane.b32.xlu0 %v2159, 31
    %v2604 = vpop.permute.xlu0 %2603
    %2605 = vrot.lane.b32.xlu0 %v2160, 31
    %v2606 = vpop.permute.xlu0 %2605
    %2607 = vrot.lane.b32.xlu0 %v2161, 31
    %v2608 = vpop.permute.xlu0 %2607
    %vm2609 = vcmp.lt.s32.totalorder %v87, 31
    %v2610 = vsel %vm2609, %v2606, %v2608
    %v2611 = vsel %vm2609, %v2604, %v2606
    %v2612 = vsel %vm2609, %v2602, %v2604
    %v2613 = vsel %vm2609, %v2608, %v2602
    %s2614 = scalar_lea.vmem [#allocation5], 35
    %v2615 = vld [vmem:[%s2614] ss:$8 sm:$0xf]
    %v2617 = vlaneseq
    %v2618 = vshrl.u32 %v2617, 7
    %v2619 = vsub.s32 0, %v2618
    %v2620 = vrot.slane %v2615, %v2619
    %v2621 = vlaneseq
    %v2622 = vshrl.u32 %v2621, 7
    %v2623 = vsub.s32 1, %v2622
    %v2624 = vrot.slane %v2615, %v2623
    %v2625 = vlaneseq
    %v2626 = vshrl.u32 %v2625, 7
    %v2627 = vsub.s32 2, %v2626
    %v2628 = vrot.slane %v2615, %v2627
    %v2629 = vlaneseq
    %v2630 = vshrl.u32 %v2629, 7
    %v2631 = vsub.s32 3, %v2630
    %v2632 = vrot.slane %v2615, %v2631
    %v2637 = vmul.f32 %v2613, %v2620
    %v2638 = vmul.f32 %v2612, %v2624
    %v2639 = vmul.f32 %v2611, %v2628
    %v2640 = vmul.f32 %v2610, %v2632
    %2641 = vrot.lane.b32.xlu0 %v2158, 30
    %v2642 = vpop.permute.xlu0 %2641
    %2643 = vrot.lane.b32.xlu0 %v2159, 30
    %v2644 = vpop.permute.xlu0 %2643
    %2645 = vrot.lane.b32.xlu0 %v2160, 30
    %v2646 = vpop.permute.xlu0 %2645
    %2647 = vrot.lane.b32.xlu0 %v2161, 30
    %v2648 = vpop.permute.xlu0 %2647
    %vm2649 = vcmp.lt.s32.totalorder %v87, 30
    %v2650 = vsel %vm2649, %v2646, %v2648
    %v2651 = vsel %vm2649, %v2644, %v2646
    %v2652 = vsel %vm2649, %v2642, %v2644
    %v2653 = vsel %vm2649, %v2648, %v2642
    %s2654 = scalar_lea.vmem [#allocation5], 36
    %v2655 = vld [vmem:[%s2654] ss:$8 sm:$0xf]
    %v2657 = vlaneseq
    %v2658 = vshrl.u32 %v2657, 7
    %v2659 = vsub.s32 0, %v2658
    %v2660 = vrot.slane %v2655, %v2659
    %v2661 = vlaneseq
    %v2662 = vshrl.u32 %v2661, 7
    %v2663 = vsub.s32 1, %v2662
    %v2664 = vrot.slane %v2655, %v2663
    %v2665 = vlaneseq
    %v2666 = vshrl.u32 %v2665, 7
    %v2667 = vsub.s32 2, %v2666
    %v2668 = vrot.slane %v2655, %v2667
    %v2669 = vlaneseq
    %v2670 = vshrl.u32 %v2669, 7
    %v2671 = vsub.s32 3, %v2670
    %v2672 = vrot.slane %v2655, %v2671
    %v2677 = vmul.f32 %v2653, %v2660
    %v2678 = vmul.f32 %v2652, %v2664
    %v2679 = vmul.f32 %v2651, %v2668
    %v2680 = vmul.f32 %v2650, %v2672
    %2681 = vrot.lane.b32.xlu0 %v2158, 29
    %v2682 = vpop.permute.xlu0 %2681
    %2683 = vrot.lane.b32.xlu0 %v2159, 29
    %v2684 = vpop.permute.xlu0 %2683
    %2685 = vrot.lane.b32.xlu0 %v2160, 29
    %v2686 = vpop.permute.xlu0 %2685
    %2687 = vrot.lane.b32.xlu0 %v2161, 29
    %v2688 = vpop.permute.xlu0 %2687
    %vm2689 = vcmp.lt.s32.totalorder %v87, 29
    %v2690 = vsel %vm2689, %v2686, %v2688
    %v2691 = vsel %vm2689, %v2684, %v2686
    %v2692 = vsel %vm2689, %v2682, %v2684
    %v2693 = vsel %vm2689, %v2688, %v2682
    %s2694 = scalar_lea.vmem [#allocation5], 37
    %v2695 = vld [vmem:[%s2694] ss:$8 sm:$0xf]
    %v2697 = vlaneseq
    %v2698 = vshrl.u32 %v2697, 7
    %v2699 = vsub.s32 0, %v2698
    %v2700 = vrot.slane %v2695, %v2699
    %v2701 = vlaneseq
    %v2702 = vshrl.u32 %v2701, 7
    %v2703 = vsub.s32 1, %v2702
    %v2704 = vrot.slane %v2695, %v2703
    %v2705 = vlaneseq
    %v2706 = vshrl.u32 %v2705, 7
    %v2707 = vsub.s32 2, %v2706
    %v2708 = vrot.slane %v2695, %v2707
    %v2709 = vlaneseq
    %v2710 = vshrl.u32 %v2709, 7
    %v2711 = vsub.s32 3, %v2710
    %v2712 = vrot.slane %v2695, %v2711
    %v2717 = vmul.f32 %v2693, %v2700
    %v2718 = vmul.f32 %v2692, %v2704
    %v2719 = vmul.f32 %v2691, %v2708
    %v2720 = vmul.f32 %v2690, %v2712
    %2721 = vrot.lane.b32.xlu0 %v2158, 19
    %v2722 = vpop.permute.xlu0 %2721
    %2723 = vrot.lane.b32.xlu0 %v2159, 19
    %v2724 = vpop.permute.xlu0 %2723
    %2725 = vrot.lane.b32.xlu0 %v2160, 19
    %v2726 = vpop.permute.xlu0 %2725
    %2727 = vrot.lane.b32.xlu0 %v2161, 19
    %v2728 = vpop.permute.xlu0 %2727
    %vm2729 = vcmp.lt.s32.totalorder %v87, 19
    %v2730 = vsel %vm2729, %v2726, %v2728
    %v2731 = vsel %vm2729, %v2724, %v2726
    %v2732 = vsel %vm2729, %v2722, %v2724
    %v2733 = vsel %vm2729, %v2728, %v2722
    %s2734 = scalar_lea.vmem [#allocation5], 38
    %v2735 = vld [vmem:[%s2734] ss:$8 sm:$0xf]
    %v2737 = vlaneseq
    %v2738 = vshrl.u32 %v2737, 7
    %v2739 = vsub.s32 0, %v2738
    %v2740 = vrot.slane %v2735, %v2739
    %v2741 = vlaneseq
    %v2742 = vshrl.u32 %v2741, 7
    %v2743 = vsub.s32 1, %v2742
    %v2744 = vrot.slane %v2735, %v2743
    %v2745 = vlaneseq
    %v2746 = vshrl.u32 %v2745, 7
    %v2747 = vsub.s32 2, %v2746
    %v2748 = vrot.slane %v2735, %v2747
    %v2749 = vlaneseq
    %v2750 = vshrl.u32 %v2749, 7
    %v2751 = vsub.s32 3, %v2750
    %v2752 = vrot.slane %v2735, %v2751
    %v2757 = vmul.f32 %v2733, %v2740
    %v2758 = vmul.f32 %v2732, %v2744
    %v2759 = vmul.f32 %v2731, %v2748
    %v2760 = vmul.f32 %v2730, %v2752
    %2761 = vrot.lane.b32.xlu0 %v2158, 18
    %v2762 = vpop.permute.xlu0 %2761
    %2763 = vrot.lane.b32.xlu0 %v2159, 18
    %v2764 = vpop.permute.xlu0 %2763
    %2765 = vrot.lane.b32.xlu0 %v2160, 18
    %v2766 = vpop.permute.xlu0 %2765
    %2767 = vrot.lane.b32.xlu0 %v2161, 18
    %v2768 = vpop.permute.xlu0 %2767
    %vm2769 = vcmp.lt.s32.totalorder %v87, 18
    %v2770 = vsel %vm2769, %v2766, %v2768
    %v2771 = vsel %vm2769, %v2764, %v2766
    %v2772 = vsel %vm2769, %v2762, %v2764
    %v2773 = vsel %vm2769, %v2768, %v2762
    %s2774 = scalar_lea.vmem [#allocation5], 39
    %v2775 = vld [vmem:[%s2774] ss:$8 sm:$0xf]
    %v2777 = vlaneseq
    %v2778 = vshrl.u32 %v2777, 7
    %v2779 = vsub.s32 0, %v2778
    %v2780 = vrot.slane %v2775, %v2779
    %v2781 = vlaneseq
    %v2782 = vshrl.u32 %v2781, 7
    %v2783 = vsub.s32 1, %v2782
    %v2784 = vrot.slane %v2775, %v2783
    %v2785 = vlaneseq
    %v2786 = vshrl.u32 %v2785, 7
    %v2787 = vsub.s32 2, %v2786
    %v2788 = vrot.slane %v2775, %v2787
    %v2789 = vlaneseq
    %v2790 = vshrl.u32 %v2789, 7
    %v2791 = vsub.s32 3, %v2790
    %v2792 = vrot.slane %v2775, %v2791
    %v2797 = vmul.f32 %v2773, %v2780
    %v2798 = vmul.f32 %v2772, %v2784
    %v2799 = vmul.f32 %v2771, %v2788
    %v2800 = vmul.f32 %v2770, %v2792
    %2801 = vrot.lane.b32.xlu0 %v2158, 17
    %v2802 = vpop.permute.xlu0 %2801
    %2803 = vrot.lane.b32.xlu0 %v2159, 17
    %v2804 = vpop.permute.xlu0 %2803
    %2805 = vrot.lane.b32.xlu0 %v2160, 17
    %v2806 = vpop.permute.xlu0 %2805
    %2807 = vrot.lane.b32.xlu0 %v2161, 17
    %v2808 = vpop.permute.xlu0 %2807
    %v2809 = vsel %vm88, %v2806, %v2808
    %v2810 = vsel %vm88, %v2804, %v2806
    %v2811 = vsel %vm88, %v2802, %v2804
    %v2812 = vsel %vm88, %v2808, %v2802
    %v2813 = vmul.f32 %v2812, %v99
    %v2814 = vmul.f32 %v2811, %v103
    %v2815 = vmul.f32 %v2810, %v107
    %v2816 = vmul.f32 %v2809, %v111
    %2817 = vrot.lane.b32.xlu0 %v2158, 16
    %v2818 = vpop.permute.xlu0 %2817
    %2819 = vrot.lane.b32.xlu0 %v2159, 16
    %v2820 = vpop.permute.xlu0 %2819
    %2821 = vrot.lane.b32.xlu0 %v2160, 16
    %v2822 = vpop.permute.xlu0 %2821
    %2823 = vrot.lane.b32.xlu0 %v2161, 16
    %v2824 = vpop.permute.xlu0 %2823
    %v2825 = vsel %vm128, %v2822, %v2824
    %v2826 = vsel %vm128, %v2820, %v2822
    %v2827 = vsel %vm128, %v2818, %v2820
    %v2828 = vsel %vm128, %v2824, %v2818
    %v2829 = vmul.f32 %v2828, %v139
    %v2830 = vmul.f32 %v2827, %v143
    %v2831 = vmul.f32 %v2826, %v147
    %v2832 = vmul.f32 %v2825, %v151
    %2833 = vrot.lane.b32.xlu0 %v2158, 15
    %v2834 = vpop.permute.xlu0 %2833
    %2835 = vrot.lane.b32.xlu0 %v2159, 15
    %v2836 = vpop.permute.xlu0 %2835
    %2837 = vrot.lane.b32.xlu0 %v2160, 15
    %v2838 = vpop.permute.xlu0 %2837
    %2839 = vrot.lane.b32.xlu0 %v2161, 15
    %v2840 = vpop.permute.xlu0 %2839
    %v2841 = vsel %vm168, %v2838, %v2840
    %v2842 = vsel %vm168, %v2836, %v2838
    %v2843 = vsel %vm168, %v2834, %v2836
    %v2844 = vsel %vm168, %v2840, %v2834
    %v2845 = vmul.f32 %v2844, %v179
    %v2846 = vmul.f32 %v2843, %v183
    %v2847 = vmul.f32 %v2842, %v187
    %v2848 = vmul.f32 %v2841, %v191
    %2849 = vrot.lane.b32.xlu0 %v2158, 14
    %v2850 = vpop.permute.xlu0 %2849
    %2851 = vrot.lane.b32.xlu0 %v2159, 14
    %v2852 = vpop.permute.xlu0 %2851
    %2853 = vrot.lane.b32.xlu0 %v2160, 14
    %v2854 = vpop.permute.xlu0 %2853
    %2855 = vrot.lane.b32.xlu0 %v2161, 14
    %v2856 = vpop.permute.xlu0 %2855
    %vm2857 = vcmp.lt.s32.totalorder %v87, 14
    %v2858 = vsel %vm2857, %v2854, %v2856
    %v2859 = vsel %vm2857, %v2852, %v2854
    %v2860 = vsel %vm2857, %v2850, %v2852
    %v2861 = vsel %vm2857, %v2856, %v2850
    %s2862 = scalar_lea.vmem [#allocation5], 67
    %v2863 = vld [vmem:[%s2862] ss:$8 sm:$0xf]
    %v2865 = vlaneseq
    %v2866 = vshrl.u32 %v2865, 7
    %v2867 = vsub.s32 0, %v2866
    %v2868 = vrot.slane %v2863, %v2867
    %v2869 = vlaneseq
    %v2870 = vshrl.u32 %v2869, 7
    %v2871 = vsub.s32 1, %v2870
    %v2872 = vrot.slane %v2863, %v2871
    %v2873 = vlaneseq
    %v2874 = vshrl.u32 %v2873, 7
    %v2875 = vsub.s32 2, %v2874
    %v2876 = vrot.slane %v2863, %v2875
    %v2877 = vlaneseq
    %v2878 = vshrl.u32 %v2877, 7
    %v2879 = vsub.s32 3, %v2878
    %v2880 = vrot.slane %v2863, %v2879
    %v2885 = vmul.f32 %v2861, %v2868
    %v2886 = vmul.f32 %v2860, %v2872
    %v2887 = vmul.f32 %v2859, %v2876
    %v2888 = vmul.f32 %v2858, %v2880
    %2889 = vrot.lane.b32.xlu0 %v2158, 13
    %v2890 = vpop.permute.xlu0 %2889
    %2891 = vrot.lane.b32.xlu0 %v2159, 13
    %v2892 = vpop.permute.xlu0 %2891
    %2893 = vrot.lane.b32.xlu0 %v2160, 13
    %v2894 = vpop.permute.xlu0 %2893
    %2895 = vrot.lane.b32.xlu0 %v2161, 13
    %v2896 = vpop.permute.xlu0 %2895
    %vm2897 = vcmp.lt.s32.totalorder %v87, 13
    %v2898 = vsel %vm2897, %v2894, %v2896
    %v2899 = vsel %vm2897, %v2892, %v2894
    %v2900 = vsel %vm2897, %v2890, %v2892
    %v2901 = vsel %vm2897, %v2896, %v2890
    %s2902 = scalar_lea.vmem [#allocation5], 68
    %v2903 = vld [vmem:[%s2902] ss:$8 sm:$0xf]
    %v2905 = vlaneseq
    %v2906 = vshrl.u32 %v2905, 7
    %v2907 = vsub.s32 0, %v2906
    %v2908 = vrot.slane %v2903, %v2907
    %v2909 = vlaneseq
    %v2910 = vshrl.u32 %v2909, 7
    %v2911 = vsub.s32 1, %v2910
    %v2912 = vrot.slane %v2903, %v2911
    %v2913 = vlaneseq
    %v2914 = vshrl.u32 %v2913, 7
    %v2915 = vsub.s32 2, %v2914
    %v2916 = vrot.slane %v2903, %v2915
    %v2917 = vlaneseq
    %v2918 = vshrl.u32 %v2917, 7
    %v2919 = vsub.s32 3, %v2918
    %v2920 = vrot.slane %v2903, %v2919
    %v2925 = vmul.f32 %v2901, %v2908
    %v2926 = vmul.f32 %v2900, %v2912
    %v2927 = vmul.f32 %v2899, %v2916
    %v2928 = vmul.f32 %v2898, %v2920
    %2929 = vrot.lane.b32.xlu0 %v2158, 3
    %v2930 = vpop.permute.xlu0 %2929
    %2931 = vrot.lane.b32.xlu0 %v2159, 3
    %v2932 = vpop.permute.xlu0 %2931
    %2933 = vrot.lane.b32.xlu0 %v2160, 3
    %v2934 = vpop.permute.xlu0 %2933
    %2935 = vrot.lane.b32.xlu0 %v2161, 3
    %v2936 = vpop.permute.xlu0 %2935
    %vm2937 = vcmp.lt.s32.totalorder %v87, 3
    %v2938 = vsel %vm2937, %v2934, %v2936
    %v2939 = vsel %vm2937, %v2932, %v2934
    %v2940 = vsel %vm2937, %v2930, %v2932
    %v2941 = vsel %vm2937, %v2936, %v2930
    %s2942 = scalar_lea.vmem [#allocation5], 69
    %v2943 = vld [vmem:[%s2942] ss:$8 sm:$0xf]
    %v2945 = vlaneseq
    %v2946 = vshrl.u32 %v2945, 7
    %v2947 = vsub.s32 0, %v2946
    %v2948 = vrot.slane %v2943, %v2947
    %v2949 = vlaneseq
    %v2950 = vshrl.u32 %v2949, 7
    %v2951 = vsub.s32 1, %v2950
    %v2952 = vrot.slane %v2943, %v2951
    %v2953 = vlaneseq
    %v2954 = vshrl.u32 %v2953, 7
    %v2955 = vsub.s32 2, %v2954
    %v2956 = vrot.slane %v2943, %v2955
    %v2957 = vlaneseq
    %v2958 = vshrl.u32 %v2957, 7
    %v2959 = vsub.s32 3, %v2958
    %v2960 = vrot.slane %v2943, %v2959
    %v2965 = vmul.f32 %v2941, %v2948
    %v2966 = vmul.f32 %v2940, %v2952
    %v2967 = vmul.f32 %v2939, %v2956
    %v2968 = vmul.f32 %v2938, %v2960
    %2969 = vrot.lane.b32.xlu0 %v2158, 2
    %v2970 = vpop.permute.xlu0 %2969
    %2971 = vrot.lane.b32.xlu0 %v2159, 2
    %v2972 = vpop.permute.xlu0 %2971
    %2973 = vrot.lane.b32.xlu0 %v2160, 2
    %v2974 = vpop.permute.xlu0 %2973
    %2975 = vrot.lane.b32.xlu0 %v2161, 2
    %v2976 = vpop.permute.xlu0 %2975
    %vm2977 = vcmp.lt.s32.totalorder %v87, 2
    %v2978 = vsel %vm2977, %v2974, %v2976
    %v2979 = vsel %vm2977, %v2972, %v2974
    %v2980 = vsel %vm2977, %v2970, %v2972
    %v2981 = vsel %vm2977, %v2976, %v2970
    %s2982 = scalar_lea.vmem [#allocation5], 70
    %v2983 = vld [vmem:[%s2982] ss:$8 sm:$0xf]
    %v2985 = vlaneseq
    %v2986 = vshrl.u32 %v2985, 7
    %v2987 = vsub.s32 0, %v2986
    %v2988 = vrot.slane %v2983, %v2987
    %v2989 = vlaneseq
    %v2990 = vshrl.u32 %v2989, 7
    %v2991 = vsub.s32 1, %v2990
    %v2992 = vrot.slane %v2983, %v2991
    %v2993 = vlaneseq
    %v2994 = vshrl.u32 %v2993, 7
    %v2995 = vsub.s32 2, %v2994
    %v2996 = vrot.slane %v2983, %v2995
    %v2997 = vlaneseq
    %v2998 = vshrl.u32 %v2997, 7
    %v2999 = vsub.s32 3, %v2998
    %v3000 = vrot.slane %v2983, %v2999
    %v3005 = vmul.f32 %v2981, %v2988
    %v3006 = vmul.f32 %v2980, %v2992
    %v3007 = vmul.f32 %v2979, %v2996
    %v3008 = vmul.f32 %v2978, %v3000
    %3009 = vrot.lane.b32.xlu0 %v2158, 1
    %v3010 = vpop.permute.xlu0 %3009
    %3011 = vrot.lane.b32.xlu0 %v2159, 1
    %v3012 = vpop.permute.xlu0 %3011
    %3013 = vrot.lane.b32.xlu0 %v2160, 1
    %v3014 = vpop.permute.xlu0 %3013
    %3015 = vrot.lane.b32.xlu0 %v2161, 1
    %v3016 = vpop.permute.xlu0 %3015
    %v3017 = vsel %vm208, %v3014, %v3016
    %v3018 = vsel %vm208, %v3012, %v3014
    %v3019 = vsel %vm208, %v3010, %v3012
    %v3020 = vsel %vm208, %v3016, %v3010
    %v3021 = vmul.f32 %v3020, %v219
    %v3022 = vmul.f32 %v3019, %v223
    %v3023 = vmul.f32 %v3018, %v227
    %v3024 = vmul.f32 %v3017, %v231
    %3025 = vrot.lane.b32.xlu0 %v2158, 127
    %v3026 = vpop.permute.xlu0 %3025
    %3027 = vrot.lane.b32.xlu0 %v2159, 127
    %v3028 = vpop.permute.xlu0 %3027
    %3029 = vrot.lane.b32.xlu0 %v2160, 127
    %v3030 = vpop.permute.xlu0 %3029
    %3031 = vrot.lane.b32.xlu0 %v2161, 127
    %v3032 = vpop.permute.xlu0 %3031
    %v3033 = vsel %vm248, %v3030, %v3032
    %v3034 = vsel %vm248, %v3028, %v3030
    %v3035 = vsel %vm248, %v3026, %v3028
    %v3036 = vsel %vm248, %v3032, %v3026
    %v3037 = vmul.f32 %v3035, %v259
    %v3038 = vmul.f32 %v3034, %v263
    %v3039 = vmul.f32 %v3033, %v267
    %v3040 = vmul.f32 %v3036, %v271
    %3041 = vrot.lane.b32.xlu0 %v2158, 126
    %v3042 = vpop.permute.xlu0 %3041
    %3043 = vrot.lane.b32.xlu0 %v2159, 126
    %v3044 = vpop.permute.xlu0 %3043
    %3045 = vrot.lane.b32.xlu0 %v2160, 126
    %v3046 = vpop.permute.xlu0 %3045
    %3047 = vrot.lane.b32.xlu0 %v2161, 126
    %v3048 = vpop.permute.xlu0 %3047
    %vm3049 = vcmp.lt.s32.totalorder %v87, 126
    %v3050 = vsel %vm3049, %v3046, %v3048
    %v3051 = vsel %vm3049, %v3044, %v3046
    %v3052 = vsel %vm3049, %v3042, %v3044
    %v3053 = vsel %vm3049, %v3048, %v3042
    %s3054 = scalar_lea.vmem [#allocation5], 98
    %v3055 = vld [vmem:[%s3054] ss:$8 sm:$0xf]
    %v3057 = vlaneseq
    %v3058 = vshrl.u32 %v3057, 7
    %v3059 = vsub.s32 0, %v3058
    %v3060 = vrot.slane %v3055, %v3059
    %v3061 = vlaneseq
    %v3062 = vshrl.u32 %v3061, 7
    %v3063 = vsub.s32 1, %v3062
    %v3064 = vrot.slane %v3055, %v3063
    %v3065 = vlaneseq
    %v3066 = vshrl.u32 %v3065, 7
    %v3067 = vsub.s32 2, %v3066
    %v3068 = vrot.slane %v3055, %v3067
    %v3069 = vlaneseq
    %v3070 = vshrl.u32 %v3069, 7
    %v3071 = vsub.s32 3, %v3070
    %v3072 = vrot.slane %v3055, %v3071
    %v3077 = vmul.f32 %v3052, %v3060
    %v3078 = vmul.f32 %v3051, %v3064
    %v3079 = vmul.f32 %v3050, %v3068
    %v3080 = vmul.f32 %v3053, %v3072
    %3081 = vrot.lane.b32.xlu0 %v2158, 125
    %v3082 = vpop.permute.xlu0 %3081
    %3083 = vrot.lane.b32.xlu0 %v2159, 125
    %v3084 = vpop.permute.xlu0 %3083
    %3085 = vrot.lane.b32.xlu0 %v2160, 125
    %v3086 = vpop.permute.xlu0 %3085
    %3087 = vrot.lane.b32.xlu0 %v2161, 125
    %v3088 = vpop.permute.xlu0 %3087
    %vm3089 = vcmp.lt.s32.totalorder %v87, 125
    %v3090 = vsel %vm3089, %v3086, %v3088
    %v3091 = vsel %vm3089, %v3084, %v3086
    %v3092 = vsel %vm3089, %v3082, %v3084
    %v3093 = vsel %vm3089, %v3088, %v3082
    %s3094 = scalar_lea.vmem [#allocation5], 99
    %v3095 = vld [vmem:[%s3094] ss:$8 sm:$0xf]
    %v3097 = vlaneseq
    %v3098 = vshrl.u32 %v3097, 7
    %v3099 = vsub.s32 0, %v3098
    %v3100 = vrot.slane %v3095, %v3099
    %v3101 = vlaneseq
    %v3102 = vshrl.u32 %v3101, 7
    %v3103 = vsub.s32 1, %v3102
    %v3104 = vrot.slane %v3095, %v3103
    %v3105 = vlaneseq
    %v3106 = vshrl.u32 %v3105, 7
    %v3107 = vsub.s32 2, %v3106
    %v3108 = vrot.slane %v3095, %v3107
    %v3109 = vlaneseq
    %v3110 = vshrl.u32 %v3109, 7
    %v3111 = vsub.s32 3, %v3110
    %v3112 = vrot.slane %v3095, %v3111
    %v3117 = vmul.f32 %v3092, %v3100
    %v3118 = vmul.f32 %v3091, %v3104
    %v3119 = vmul.f32 %v3090, %v3108
    %v3120 = vmul.f32 %v3093, %v3112
    %3121 = vrot.lane.b32.xlu0 %v2158, 115
    %v3122 = vpop.permute.xlu0 %3121
    %3123 = vrot.lane.b32.xlu0 %v2159, 115
    %v3124 = vpop.permute.xlu0 %3123
    %3125 = vrot.lane.b32.xlu0 %v2160, 115
    %v3126 = vpop.permute.xlu0 %3125
    %3127 = vrot.lane.b32.xlu0 %v2161, 115
    %v3128 = vpop.permute.xlu0 %3127
    %vm3129 = vcmp.lt.s32.totalorder %v87, 115
    %v3130 = vsel %vm3129, %v3126, %v3128
    %v3131 = vsel %vm3129, %v3124, %v3126
    %v3132 = vsel %vm3129, %v3122, %v3124
    %v3133 = vsel %vm3129, %v3128, %v3122
    %s3134 = scalar_lea.vmem [#allocation5], 100
    %v3135 = vld [vmem:[%s3134] ss:$8 sm:$0xf]
    %v3137 = vlaneseq
    %v3138 = vshrl.u32 %v3137, 7
    %v3139 = vsub.s32 0, %v3138
    %v3140 = vrot.slane %v3135, %v3139
    %v3141 = vlaneseq
    %v3142 = vshrl.u32 %v3141, 7
    %v3143 = vsub.s32 1, %v3142
    %v3144 = vrot.slane %v3135, %v3143
    %v3145 = vlaneseq
    %v3146 = vshrl.u32 %v3145, 7
    %v3147 = vsub.s32 2, %v3146
    %v3148 = vrot.slane %v3135, %v3147
    %v3149 = vlaneseq
    %v3150 = vshrl.u32 %v3149, 7
    %v3151 = vsub.s32 3, %v3150
    %v3152 = vrot.slane %v3135, %v3151
    %v3157 = vmul.f32 %v3132, %v3140
    %v3158 = vmul.f32 %v3131, %v3144
    %v3159 = vmul.f32 %v3130, %v3148
    %v3160 = vmul.f32 %v3133, %v3152
    %3161 = vrot.lane.b32.xlu0 %v2158, 114
    %v3162 = vpop.permute.xlu0 %3161
    %3163 = vrot.lane.b32.xlu0 %v2159, 114
    %v3164 = vpop.permute.xlu0 %3163
    %3165 = vrot.lane.b32.xlu0 %v2160, 114
    %v3166 = vpop.permute.xlu0 %3165
    %3167 = vrot.lane.b32.xlu0 %v2161, 114
    %v3168 = vpop.permute.xlu0 %3167
    %vm3169 = vcmp.lt.s32.totalorder %v87, 114
    %v3170 = vsel %vm3169, %v3166, %v3168
    %v3171 = vsel %vm3169, %v3164, %v3166
    %v3172 = vsel %vm3169, %v3162, %v3164
    %v3173 = vsel %vm3169, %v3168, %v3162
    %s3174 = scalar_lea.vmem [#allocation5], 101
    %v3175 = vld [vmem:[%s3174] ss:$8 sm:$0xf]
    %v3177 = vlaneseq
    %v3178 = vshrl.u32 %v3177, 7
    %v3179 = vsub.s32 0, %v3178
    %v3180 = vrot.slane %v3175, %v3179
    %v3181 = vlaneseq
    %v3182 = vshrl.u32 %v3181, 7
    %v3183 = vsub.s32 1, %v3182
    %v3184 = vrot.slane %v3175, %v3183
    %v3185 = vlaneseq
    %v3186 = vshrl.u32 %v3185, 7
    %v3187 = vsub.s32 2, %v3186
    %v3188 = vrot.slane %v3175, %v3187
    %v3189 = vlaneseq
    %v3190 = vshrl.u32 %v3189, 7
    %v3191 = vsub.s32 3, %v3190
    %v3192 = vrot.slane %v3175, %v3191
    %v3197 = vmul.f32 %v3172, %v3180
    %v3198 = vmul.f32 %v3171, %v3184
    %v3199 = vmul.f32 %v3170, %v3188
    %v3200 = vmul.f32 %v3173, %v3192
    %3201 = vrot.lane.b32.xlu0 %v2158, 113
    %v3202 = vpop.permute.xlu0 %3201
    %3203 = vrot.lane.b32.xlu0 %v2159, 113
    %v3204 = vpop.permute.xlu0 %3203
    %3205 = vrot.lane.b32.xlu0 %v2160, 113
    %v3206 = vpop.permute.xlu0 %3205
    %3207 = vrot.lane.b32.xlu0 %v2161, 113
    %v3208 = vpop.permute.xlu0 %3207
    %v3209 = vsel %vm288, %v3206, %v3208
    %v3210 = vsel %vm288, %v3204, %v3206
    %v3211 = vsel %vm288, %v3202, %v3204
    %v3212 = vsel %vm288, %v3208, %v3202
    %v3213 = vmul.f32 %v3211, %v299
    %v3214 = vmul.f32 %v3210, %v303
    %v3215 = vmul.f32 %v3209, %v307
    %v3216 = vmul.f32 %v3212, %v311
    %3217 = vrot.lane.b32.xlu0 %v2158, 112
    %v3218 = vpop.permute.xlu0 %3217
    %3219 = vrot.lane.b32.xlu0 %v2159, 112
    %v3220 = vpop.permute.xlu0 %3219
    %3221 = vrot.lane.b32.xlu0 %v2160, 112
    %v3222 = vpop.permute.xlu0 %3221
    %3223 = vrot.lane.b32.xlu0 %v2161, 112
    %v3224 = vpop.permute.xlu0 %3223
    %v3225 = vsel %vm328, %v3222, %v3224
    %v3226 = vsel %vm328, %v3220, %v3222
    %v3227 = vsel %vm328, %v3218, %v3220
    %v3228 = vsel %vm328, %v3224, %v3218
    %v3229 = vmul.f32 %v3227, %v339
    %v3230 = vmul.f32 %v3226, %v343
    %v3231 = vmul.f32 %v3225, %v347
    %v3232 = vmul.f32 %v3228, %v351
    %3233 = vrot.lane.b32.xlu0 %v2158, 111
    %v3234 = vpop.permute.xlu0 %3233
    %3235 = vrot.lane.b32.xlu0 %v2159, 111
    %v3236 = vpop.permute.xlu0 %3235
    %3237 = vrot.lane.b32.xlu0 %v2160, 111
    %v3238 = vpop.permute.xlu0 %3237
    %3239 = vrot.lane.b32.xlu0 %v2161, 111
    %v3240 = vpop.permute.xlu0 %3239
    %v3241 = vsel %vm368, %v3238, %v3240
    %v3242 = vsel %vm368, %v3236, %v3238
    %v3243 = vsel %vm368, %v3234, %v3236
    %v3244 = vsel %vm368, %v3240, %v3234
    %v3245 = vmul.f32 %v3243, %v379
    %v3246 = vmul.f32 %v3242, %v383
    %v3247 = vmul.f32 %v3241, %v387
    %v3248 = vmul.f32 %v3244, %v391
    %3249 = vrot.lane.b32.xlu0 %v2158, 110
    %v3250 = vpop.permute.xlu0 %3249
    %3251 = vrot.lane.b32.xlu0 %v2159, 110
    %v3252 = vpop.permute.xlu0 %3251
    %3253 = vrot.lane.b32.xlu0 %v2160, 110
    %v3254 = vpop.permute.xlu0 %3253
    %3255 = vrot.lane.b32.xlu0 %v2161, 110
    %v3256 = vpop.permute.xlu0 %3255
    %vm3257 = vcmp.lt.s32.totalorder %v87, 110
    %v3258 = vsel %vm3257, %v3254, %v3256
    %v3259 = vsel %vm3257, %v3252, %v3254
    %v3260 = vsel %vm3257, %v3250, %v3252
    %v3261 = vsel %vm3257, %v3256, %v3250
    %s3262 = scalar_lea.vmem [#allocation5], 129
    %v3263 = vld [vmem:[%s3262] ss:$8 sm:$0xf]
    %v3265 = vlaneseq
    %v3266 = vshrl.u32 %v3265, 7
    %v3267 = vsub.s32 0, %v3266
    %v3268 = vrot.slane %v3263, %v3267
    %v3269 = vlaneseq
    %v3270 = vshrl.u32 %v3269, 7
    %v3271 = vsub.s32 1, %v3270
    %v3272 = vrot.slane %v3263, %v3271
    %v3273 = vlaneseq
    %v3274 = vshrl.u32 %v3273, 7
    %v3275 = vsub.s32 2, %v3274
    %v3276 = vrot.slane %v3263, %v3275
    %v3277 = vlaneseq
    %v3278 = vshrl.u32 %v3277, 7
    %v3279 = vsub.s32 3, %v3278
    %v3280 = vrot.slane %v3263, %v3279
    %v3285 = vmul.f32 %v3260, %v3268
    %v3286 = vmul.f32 %v3259, %v3272
    %v3287 = vmul.f32 %v3258, %v3276
    %v3288 = vmul.f32 %v3261, %v3280
    %3289 = vrot.lane.b32.xlu0 %v2158, 109
    %v3290 = vpop.permute.xlu0 %3289
    %3291 = vrot.lane.b32.xlu0 %v2159, 109
    %v3292 = vpop.permute.xlu0 %3291
    %3293 = vrot.lane.b32.xlu0 %v2160, 109
    %v3294 = vpop.permute.xlu0 %3293
    %3295 = vrot.lane.b32.xlu0 %v2161, 109
    %v3296 = vpop.permute.xlu0 %3295
    %vm3297 = vcmp.lt.s32.totalorder %v87, 109
    %v3298 = vsel %vm3297, %v3294, %v3296
    %v3299 = vsel %vm3297, %v3292, %v3294
    %v3300 = vsel %vm3297, %v3290, %v3292
    %v3301 = vsel %vm3297, %v3296, %v3290
    %s3302 = scalar_lea.vmem [#allocation5], 130
    %v3303 = vld [vmem:[%s3302] ss:$8 sm:$0xf]
    %v3305 = vlaneseq
    %v3306 = vshrl.u32 %v3305, 7
    %v3307 = vsub.s32 0, %v3306
    %v3308 = vrot.slane %v3303, %v3307
    %v3309 = vlaneseq
    %v3310 = vshrl.u32 %v3309, 7
    %v3311 = vsub.s32 1, %v3310
    %v3312 = vrot.slane %v3303, %v3311
    %v3313 = vlaneseq
    %v3314 = vshrl.u32 %v3313, 7
    %v3315 = vsub.s32 2, %v3314
    %v3316 = vrot.slane %v3303, %v3315
    %v3317 = vlaneseq
    %v3318 = vshrl.u32 %v3317, 7
    %v3319 = vsub.s32 3, %v3318
    %v3320 = vrot.slane %v3303, %v3319
    %v3325 = vmul.f32 %v3300, %v3308
    %v3326 = vmul.f32 %v3299, %v3312
    %v3327 = vmul.f32 %v3298, %v3316
    %v3328 = vmul.f32 %v3301, %v3320
    %3329 = vrot.lane.b32.xlu0 %v2158, 99
    %v3330 = vpop.permute.xlu0 %3329
    %3331 = vrot.lane.b32.xlu0 %v2159, 99
    %v3332 = vpop.permute.xlu0 %3331
    %3333 = vrot.lane.b32.xlu0 %v2160, 99
    %v3334 = vpop.permute.xlu0 %3333
    %3335 = vrot.lane.b32.xlu0 %v2161, 99
    %v3336 = vpop.permute.xlu0 %3335
    %vm3337 = vcmp.lt.s32.totalorder %v87, 99
    %v3338 = vsel %vm3337, %v3334, %v3336
    %v3339 = vsel %vm3337, %v3332, %v3334
    %v3340 = vsel %vm3337, %v3330, %v3332
    %v3341 = vsel %vm3337, %v3336, %v3330
    %s3342 = scalar_lea.vmem [#allocation5], 131
    %v3343 = vld [vmem:[%s3342] ss:$8 sm:$0xf]
    %v3345 = vlaneseq
    %v3346 = vshrl.u32 %v3345, 7
    %v3347 = vsub.s32 0, %v3346
    %v3348 = vrot.slane %v3343, %v3347
    %v3349 = vlaneseq
    %v3350 = vshrl.u32 %v3349, 7
    %v3351 = vsub.s32 1, %v3350
    %v3352 = vrot.slane %v3343, %v3351
    %v3353 = vlaneseq
    %v3354 = vshrl.u32 %v3353, 7
    %v3355 = vsub.s32 2, %v3354
    %v3356 = vrot.slane %v3343, %v3355
    %v3357 = vlaneseq
    %v3358 = vshrl.u32 %v3357, 7
    %v3359 = vsub.s32 3, %v3358
    %v3360 = vrot.slane %v3343, %v3359
    %v3365 = vmul.f32 %v3340, %v3348
    %v3366 = vmul.f32 %v3339, %v3352
    %v3367 = vmul.f32 %v3338, %v3356
    %v3368 = vmul.f32 %v3341, %v3360
    %3369 = vrot.lane.b32.xlu0 %v2158, 98
    %v3370 = vpop.permute.xlu0 %3369
    %3371 = vrot.lane.b32.xlu0 %v2159, 98
    %v3372 = vpop.permute.xlu0 %3371
    %3373 = vrot.lane.b32.xlu0 %v2160, 98
    %v3374 = vpop.permute.xlu0 %3373
    %3375 = vrot.lane.b32.xlu0 %v2161, 98
    %v3376 = vpop.permute.xlu0 %3375
    %vm3377 = vcmp.lt.s32.totalorder %v87, 98
    %v3378 = vsel %vm3377, %v3374, %v3376
    %v3379 = vsel %vm3377, %v3372, %v3374
    %v3380 = vsel %vm3377, %v3370, %v3372
    %v3381 = vsel %vm3377, %v3376, %v3370
    %s3382 = scalar_lea.vmem [#allocation5], 132
    %v3383 = vld [vmem:[%s3382] ss:$8 sm:$0xf]
    %v3385 = vlaneseq
    %v3386 = vshrl.u32 %v3385, 7
    %v3387 = vsub.s32 0, %v3386
    %v3388 = vrot.slane %v3383, %v3387
    %v3389 = vlaneseq
    %v3390 = vshrl.u32 %v3389, 7
    %v3391 = vsub.s32 1, %v3390
    %v3392 = vrot.slane %v3383, %v3391
    %v3393 = vlaneseq
    %v3394 = vshrl.u32 %v3393, 7
    %v3395 = vsub.s32 2, %v3394
    %v3396 = vrot.slane %v3383, %v3395
    %v3397 = vlaneseq
    %v3398 = vshrl.u32 %v3397, 7
    %v3399 = vsub.s32 3, %v3398
    %v3400 = vrot.slane %v3383, %v3399
    %v3405 = vmul.f32 %v3380, %v3388
    %v3406 = vmul.f32 %v3379, %v3392
    %v3407 = vmul.f32 %v3378, %v3396
    %v3408 = vmul.f32 %v3381, %v3400
    %3409 = vrot.lane.b32.xlu0 %v2158, 97
    %v3410 = vpop.permute.xlu0 %3409
    %3411 = vrot.lane.b32.xlu0 %v2159, 97
    %v3412 = vpop.permute.xlu0 %3411
    %3413 = vrot.lane.b32.xlu0 %v2160, 97
    %v3414 = vpop.permute.xlu0 %3413
    %3415 = vrot.lane.b32.xlu0 %v2161, 97
    %v3416 = vpop.permute.xlu0 %3415
    %vm3417 = vcmp.lt.s32.totalorder %v87, 97
    %v3418 = vsel %vm3417, %v3414, %v3416
    %v3419 = vsel %vm3417, %v3412, %v3414
    %v3420 = vsel %vm3417, %v3410, %v3412
    %v3421 = vsel %vm3417, %v3416, %v3410
    %s3422 = scalar_lea.vmem [#allocation5], 133
    %v3423 = vld [vmem:[%s3422] ss:$8 sm:$0xf]
    %v3425 = vlaneseq
    %v3426 = vshrl.u32 %v3425, 7
    %v3427 = vsub.s32 0, %v3426
    %v3428 = vrot.slane %v3423, %v3427
    %v3429 = vlaneseq
    %v3430 = vshrl.u32 %v3429, 7
    %v3431 = vsub.s32 1, %v3430
    %v3432 = vrot.slane %v3423, %v3431
    %v3433 = vlaneseq
    %v3434 = vshrl.u32 %v3433, 7
    %v3435 = vsub.s32 2, %v3434
    %v3436 = vrot.slane %v3423, %v3435
    %v3437 = vlaneseq
    %v3438 = vshrl.u32 %v3437, 7
    %v3439 = vsub.s32 3, %v3438
    %v3440 = vrot.slane %v3423, %v3439
    %v3445 = vmul.f32 %v3420, %v3428
    %v3446 = vmul.f32 %v3419, %v3432
    %v3447 = vmul.f32 %v3418, %v3436
    %v3448 = vmul.f32 %v3421, %v3440
    %3449 = vrot.lane.b32.xlu0 %v2158, 96
    %v3450 = vpop.permute.xlu0 %3449
    %3451 = vrot.lane.b32.xlu0 %v2159, 96
    %v3452 = vpop.permute.xlu0 %3451
    %3453 = vrot.lane.b32.xlu0 %v2160, 96
    %v3454 = vpop.permute.xlu0 %3453
    %3455 = vrot.lane.b32.xlu0 %v2161, 96
    %v3456 = vpop.permute.xlu0 %3455
    %vm3457 = vcmp.lt.s32.totalorder %v87, 96
    %v3458 = vsel %vm3457, %v3454, %v3456
    %v3459 = vsel %vm3457, %v3452, %v3454
    %v3460 = vsel %vm3457, %v3450, %v3452
    %v3461 = vsel %vm3457, %v3456, %v3450
    %s3462 = scalar_lea.vmem [#allocation5], 134
    %v3463 = vld [vmem:[%s3462] ss:$8 sm:$0xf]
    %v3465 = vlaneseq
    %v3466 = vshrl.u32 %v3465, 7
    %v3467 = vsub.s32 0, %v3466
    %v3468 = vrot.slane %v3463, %v3467
    %v3469 = vlaneseq
    %v3470 = vshrl.u32 %v3469, 7
    %v3471 = vsub.s32 1, %v3470
    %v3472 = vrot.slane %v3463, %v3471
    %v3473 = vlaneseq
    %v3474 = vshrl.u32 %v3473, 7
    %v3475 = vsub.s32 2, %v3474
    %v3476 = vrot.slane %v3463, %v3475
    %v3477 = vlaneseq
    %v3478 = vshrl.u32 %v3477, 7
    %v3479 = vsub.s32 3, %v3478
    %v3480 = vrot.slane %v3463, %v3479
    %v3485 = vmul.f32 %v3460, %v3468
    %v3486 = vmul.f32 %v3459, %v3472
    %v3487 = vmul.f32 %v3458, %v3476
    %v3488 = vmul.f32 %v3461, %v3480
    %3489 = vrot.lane.b32.xlu0 %v2158, 95
    %v3490 = vpop.permute.xlu0 %3489
    %3491 = vrot.lane.b32.xlu0 %v2159, 95
    %v3492 = vpop.permute.xlu0 %3491
    %3493 = vrot.lane.b32.xlu0 %v2160, 95
    %v3494 = vpop.permute.xlu0 %3493
    %3495 = vrot.lane.b32.xlu0 %v2161, 95
    %v3496 = vpop.permute.xlu0 %3495
    %vm3497 = vcmp.lt.s32.totalorder %v87, 95
    %v3498 = vsel %vm3497, %v3494, %v3496
    %v3499 = vsel %vm3497, %v3492, %v3494
    %v3500 = vsel %vm3497, %v3490, %v3492
    %v3501 = vsel %vm3497, %v3496, %v3490
    %s3502 = scalar_lea.vmem [#allocation5], 135
    %v3503 = vld [vmem:[%s3502] ss:$8 sm:$0xf]
    %v3505 = vlaneseq
    %v3506 = vshrl.u32 %v3505, 7
    %v3507 = vsub.s32 0, %v3506
    %v3508 = vrot.slane %v3503, %v3507
    %v3509 = vlaneseq
    %v3510 = vshrl.u32 %v3509, 7
    %v3511 = vsub.s32 1, %v3510
    %v3512 = vrot.slane %v3503, %v3511
    %v3513 = vlaneseq
    %v3514 = vshrl.u32 %v3513, 7
    %v3515 = vsub.s32 2, %v3514
    %v3516 = vrot.slane %v3503, %v3515
    %v3517 = vlaneseq
    %v3518 = vshrl.u32 %v3517, 7
    %v3519 = vsub.s32 3, %v3518
    %v3520 = vrot.slane %v3503, %v3519
    %v3525 = vmul.f32 %v3500, %v3508
    %v3526 = vmul.f32 %v3499, %v3512
    %v3527 = vmul.f32 %v3498, %v3516
    %v3528 = vmul.f32 %v3501, %v3520
    %3529 = vrot.lane.b32.xlu0 %v2158, 94
    %v3530 = vpop.permute.xlu0 %3529
    %3531 = vrot.lane.b32.xlu0 %v2159, 94
    %v3532 = vpop.permute.xlu0 %3531
    %3533 = vrot.lane.b32.xlu0 %v2160, 94
    %v3534 = vpop.permute.xlu0 %3533
    %3535 = vrot.lane.b32.xlu0 %v2161, 94
    %v3536 = vpop.permute.xlu0 %3535
    %vm3537 = vcmp.lt.s32.totalorder %v87, 94
    %v3538 = vsel %vm3537, %v3534, %v3536
    %v3539 = vsel %vm3537, %v3532, %v3534
    %v3540 = vsel %vm3537, %v3530, %v3532
    %v3541 = vsel %vm3537, %v3536, %v3530
    %s3542 = scalar_lea.vmem [#allocation5], 160
    %v3543 = vld [vmem:[%s3542] ss:$8 sm:$0xf]
    %v3545 = vlaneseq
    %v3546 = vshrl.u32 %v3545, 7
    %v3547 = vsub.s32 0, %v3546
    %v3548 = vrot.slane %v3543, %v3547
    %v3549 = vlaneseq
    %v3550 = vshrl.u32 %v3549, 7
    %v3551 = vsub.s32 1, %v3550
    %v3552 = vrot.slane %v3543, %v3551
    %v3553 = vlaneseq
    %v3554 = vshrl.u32 %v3553, 7
    %v3555 = vsub.s32 2, %v3554
    %v3556 = vrot.slane %v3543, %v3555
    %v3557 = vlaneseq
    %v3558 = vshrl.u32 %v3557, 7
    %v3559 = vsub.s32 3, %v3558
    %v3560 = vrot.slane %v3543, %v3559
    %v3565 = vmul.f32 %v3540, %v3548
    %v3566 = vmul.f32 %v3539, %v3552
    %v3567 = vmul.f32 %v3538, %v3556
    %v3568 = vmul.f32 %v3541, %v3560
    %3569 = vrot.lane.b32.xlu0 %v2158, 93
    %v3570 = vpop.permute.xlu0 %3569
    %3571 = vrot.lane.b32.xlu0 %v2159, 93
    %v3572 = vpop.permute.xlu0 %3571
    %3573 = vrot.lane.b32.xlu0 %v2160, 93
    %v3574 = vpop.permute.xlu0 %3573
    %3575 = vrot.lane.b32.xlu0 %v2161, 93
    %v3576 = vpop.permute.xlu0 %3575
    %vm3577 = vcmp.lt.s32.totalorder %v87, 93
    %v3578 = vsel %vm3577, %v3574, %v3576
    %v3579 = vsel %vm3577, %v3572, %v3574
    %v3580 = vsel %vm3577, %v3570, %v3572
    %v3581 = vsel %vm3577, %v3576, %v3570
    %s3582 = scalar_lea.vmem [#allocation5], 161
    %v3583 = vld [vmem:[%s3582] ss:$8 sm:$0xf]
    %v3585 = vlaneseq
    %v3586 = vshrl.u32 %v3585, 7
    %v3587 = vsub.s32 0, %v3586
    %v3588 = vrot.slane %v3583, %v3587
    %v3589 = vlaneseq
    %v3590 = vshrl.u32 %v3589, 7
    %v3591 = vsub.s32 1, %v3590
    %v3592 = vrot.slane %v3583, %v3591
    %v3593 = vlaneseq
    %v3594 = vshrl.u32 %v3593, 7
    %v3595 = vsub.s32 2, %v3594
    %v3596 = vrot.slane %v3583, %v3595
    %v3597 = vlaneseq
    %v3598 = vshrl.u32 %v3597, 7
    %v3599 = vsub.s32 3, %v3598
    %v3600 = vrot.slane %v3583, %v3599
    %v3605 = vmul.f32 %v3580, %v3588
    %v3606 = vmul.f32 %v3579, %v3592
    %v3607 = vmul.f32 %v3578, %v3596
    %v3608 = vmul.f32 %v3581, %v3600
    %3609 = vrot.lane.b32.xlu0 %v2158, 83
    %v3610 = vpop.permute.xlu0 %3609
    %3611 = vrot.lane.b32.xlu0 %v2159, 83
    %v3612 = vpop.permute.xlu0 %3611
    %3613 = vrot.lane.b32.xlu0 %v2160, 83
    %v3614 = vpop.permute.xlu0 %3613
    %3615 = vrot.lane.b32.xlu0 %v2161, 83
    %v3616 = vpop.permute.xlu0 %3615
    %vm3617 = vcmp.lt.s32.totalorder %v87, 83
    %v3618 = vsel %vm3617, %v3614, %v3616
    %v3619 = vsel %vm3617, %v3612, %v3614
    %v3620 = vsel %vm3617, %v3610, %v3612
    %v3621 = vsel %vm3617, %v3616, %v3610
    %s3622 = scalar_lea.vmem [#allocation5], 162
    %v3623 = vld [vmem:[%s3622] ss:$8 sm:$0xf]
    %v3625 = vlaneseq
    %v3626 = vshrl.u32 %v3625, 7
    %v3627 = vsub.s32 0, %v3626
    %v3628 = vrot.slane %v3623, %v3627
    %v3629 = vlaneseq
    %v3630 = vshrl.u32 %v3629, 7
    %v3631 = vsub.s32 1, %v3630
    %v3632 = vrot.slane %v3623, %v3631
    %v3633 = vlaneseq
    %v3634 = vshrl.u32 %v3633, 7
    %v3635 = vsub.s32 2, %v3634
    %v3636 = vrot.slane %v3623, %v3635
    %v3637 = vlaneseq
    %v3638 = vshrl.u32 %v3637, 7
    %v3639 = vsub.s32 3, %v3638
    %v3640 = vrot.slane %v3623, %v3639
    %v3645 = vmul.f32 %v3620, %v3628
    %v3646 = vmul.f32 %v3619, %v3632
    %v3647 = vmul.f32 %v3618, %v3636
    %v3648 = vmul.f32 %v3621, %v3640
    %3649 = vrot.lane.b32.xlu0 %v2158, 82
    %v3650 = vpop.permute.xlu0 %3649
    %3651 = vrot.lane.b32.xlu0 %v2159, 82
    %v3652 = vpop.permute.xlu0 %3651
    %3653 = vrot.lane.b32.xlu0 %v2160, 82
    %v3654 = vpop.permute.xlu0 %3653
    %3655 = vrot.lane.b32.xlu0 %v2161, 82
    %v3656 = vpop.permute.xlu0 %3655
    %vm3657 = vcmp.lt.s32.totalorder %v87, 82
    %v3658 = vsel %vm3657, %v3654, %v3656
    %v3659 = vsel %vm3657, %v3652, %v3654
    %v3660 = vsel %vm3657, %v3650, %v3652
    %v3661 = vsel %vm3657, %v3656, %v3650
    %s3662 = scalar_lea.vmem [#allocation5], 163
    %v3663 = vld [vmem:[%s3662] ss:$8 sm:$0xf]
    %v3665 = vlaneseq
    %v3666 = vshrl.u32 %v3665, 7
    %v3667 = vsub.s32 0, %v3666
    %v3668 = vrot.slane %v3663, %v3667
    %v3669 = vlaneseq
    %v3670 = vshrl.u32 %v3669, 7
    %v3671 = vsub.s32 1, %v3670
    %v3672 = vrot.slane %v3663, %v3671
    %v3673 = vlaneseq
    %v3674 = vshrl.u32 %v3673, 7
    %v3675 = vsub.s32 2, %v3674
    %v3676 = vrot.slane %v3663, %v3675
    %v3677 = vlaneseq
    %v3678 = vshrl.u32 %v3677, 7
    %v3679 = vsub.s32 3, %v3678
    %v3680 = vrot.slane %v3663, %v3679
    %v3685 = vmul.f32 %v3660, %v3668
    %v3686 = vmul.f32 %v3659, %v3672
    %v3687 = vmul.f32 %v3658, %v3676
    %v3688 = vmul.f32 %v3661, %v3680
    %3689 = vrot.lane.b32.xlu0 %v2158, 81
    %v3690 = vpop.permute.xlu0 %3689
    %3691 = vrot.lane.b32.xlu0 %v2159, 81
    %v3692 = vpop.permute.xlu0 %3691
    %3693 = vrot.lane.b32.xlu0 %v2160, 81
    %v3694 = vpop.permute.xlu0 %3693
    %3695 = vrot.lane.b32.xlu0 %v2161, 81
    %v3696 = vpop.permute.xlu0 %3695
    %vm3697 = vcmp.lt.s32.totalorder %v87, 81
    %v3698 = vsel %vm3697, %v3694, %v3696
    %v3699 = vsel %vm3697, %v3692, %v3694
    %v3700 = vsel %vm3697, %v3690, %v3692
    %v3701 = vsel %vm3697, %v3696, %v3690
    %s3702 = scalar_lea.vmem [#allocation5], 164
    %v3703 = vld [vmem:[%s3702] ss:$8 sm:$0xf]
    %v3705 = vlaneseq
    %v3706 = vshrl.u32 %v3705, 7
    %v3707 = vsub.s32 0, %v3706
    %v3708 = vrot.slane %v3703, %v3707
    %v3709 = vlaneseq
    %v3710 = vshrl.u32 %v3709, 7
    %v3711 = vsub.s32 1, %v3710
    %v3712 = vrot.slane %v3703, %v3711
    %v3713 = vlaneseq
    %v3714 = vshrl.u32 %v3713, 7
    %v3715 = vsub.s32 2, %v3714
    %v3716 = vrot.slane %v3703, %v3715
    %v3717 = vlaneseq
    %v3718 = vshrl.u32 %v3717, 7
    %v3719 = vsub.s32 3, %v3718
    %v3720 = vrot.slane %v3703, %v3719
    %v3725 = vmul.f32 %v3700, %v3708
    %v3726 = vmul.f32 %v3699, %v3712
    %v3727 = vmul.f32 %v3698, %v3716
    %v3728 = vmul.f32 %v3701, %v3720
    %3729 = vrot.lane.b32.xlu0 %v2158, 80
    %v3730 = vpop.permute.xlu0 %3729
    %3731 = vrot.lane.b32.xlu0 %v2159, 80
    %v3732 = vpop.permute.xlu0 %3731
    %3733 = vrot.lane.b32.xlu0 %v2160, 80
    %v3734 = vpop.permute.xlu0 %3733
    %3735 = vrot.lane.b32.xlu0 %v2161, 80
    %v3736 = vpop.permute.xlu0 %3735
    %vm3737 = vcmp.lt.s32.totalorder %v87, 80
    %v3738 = vsel %vm3737, %v3734, %v3736
    %v3739 = vsel %vm3737, %v3732, %v3734
    %v3740 = vsel %vm3737, %v3730, %v3732
    %v3741 = vsel %vm3737, %v3736, %v3730
    %s3742 = scalar_lea.vmem [#allocation5], 165
    %v3743 = vld [vmem:[%s3742] ss:$8 sm:$0xf]
    %v3745 = vlaneseq
    %v3746 = vshrl.u32 %v3745, 7
    %v3747 = vsub.s32 0, %v3746
    %v3748 = vrot.slane %v3743, %v3747
    %v3749 = vlaneseq
    %v3750 = vshrl.u32 %v3749, 7
    %v3751 = vsub.s32 1, %v3750
    %v3752 = vrot.slane %v3743, %v3751
    %v3753 = vlaneseq
    %v3754 = vshrl.u32 %v3753, 7
    %v3755 = vsub.s32 2, %v3754
    %v3756 = vrot.slane %v3743, %v3755
    %v3757 = vlaneseq
    %v3758 = vshrl.u32 %v3757, 7
    %v3759 = vsub.s32 3, %v3758
    %v3760 = vrot.slane %v3743, %v3759
    %v3765 = vmul.f32 %v3740, %v3748
    %v3766 = vmul.f32 %v3739, %v3752
    %v3767 = vmul.f32 %v3738, %v3756
    %v3768 = vmul.f32 %v3741, %v3760
    %3769 = vrot.lane.b32.xlu0 %v2158, 79
    %v3770 = vpop.permute.xlu0 %3769
    %3771 = vrot.lane.b32.xlu0 %v2159, 79
    %v3772 = vpop.permute.xlu0 %3771
    %3773 = vrot.lane.b32.xlu0 %v2160, 79
    %v3774 = vpop.permute.xlu0 %3773
    %3775 = vrot.lane.b32.xlu0 %v2161, 79
    %v3776 = vpop.permute.xlu0 %3775
    %vm3777 = vcmp.lt.s32.totalorder %v87, 79
    %v3778 = vsel %vm3777, %v3774, %v3776
    %v3779 = vsel %vm3777, %v3772, %v3774
    %v3780 = vsel %vm3777, %v3770, %v3772
    %v3781 = vsel %vm3777, %v3776, %v3770
    %s3782 = scalar_lea.vmem [#allocation5], 166
    %v3783 = vld [vmem:[%s3782] ss:$8 sm:$0xf]
    %v3785 = vlaneseq
    %v3786 = vshrl.u32 %v3785, 7
    %v3787 = vsub.s32 0, %v3786
    %v3788 = vrot.slane %v3783, %v3787
    %v3789 = vlaneseq
    %v3790 = vshrl.u32 %v3789, 7
    %v3791 = vsub.s32 1, %v3790
    %v3792 = vrot.slane %v3783, %v3791
    %v3793 = vlaneseq
    %v3794 = vshrl.u32 %v3793, 7
    %v3795 = vsub.s32 2, %v3794
    %v3796 = vrot.slane %v3783, %v3795
    %v3797 = vlaneseq
    %v3798 = vshrl.u32 %v3797, 7
    %v3799 = vsub.s32 3, %v3798
    %v3800 = vrot.slane %v3783, %v3799
    %v3805 = vmul.f32 %v3780, %v3788
    %v3806 = vmul.f32 %v3779, %v3792
    %v3807 = vmul.f32 %v3778, %v3796
    %v3808 = vmul.f32 %v3781, %v3800
    %3809 = vrot.lane.b32.xlu0 %v2158, 78
    %v3810 = vpop.permute.xlu0 %3809
    %3811 = vrot.lane.b32.xlu0 %v2159, 78
    %v3812 = vpop.permute.xlu0 %3811
    %3813 = vrot.lane.b32.xlu0 %v2160, 78
    %v3814 = vpop.permute.xlu0 %3813
    %3815 = vrot.lane.b32.xlu0 %v2161, 78
    %v3816 = vpop.permute.xlu0 %3815
    %vm3817 = vcmp.lt.s32.totalorder %v87, 78
    %v3818 = vsel %vm3817, %v3814, %v3816
    %v3819 = vsel %vm3817, %v3812, %v3814
    %v3820 = vsel %vm3817, %v3810, %v3812
    %v3821 = vsel %vm3817, %v3816, %v3810
    %s3822 = scalar_lea.vmem [#allocation5], 167
    %v3823 = vld [vmem:[%s3822] ss:$8 sm:$0xf]
    %v3825 = vlaneseq
    %v3826 = vshrl.u32 %v3825, 7
    %v3827 = vsub.s32 0, %v3826
    %v3828 = vrot.slane %v3823, %v3827
    %v3829 = vlaneseq
    %v3830 = vshrl.u32 %v3829, 7
    %v3831 = vsub.s32 1, %v3830
    %v3832 = vrot.slane %v3823, %v3831
    %v3833 = vlaneseq
    %v3834 = vshrl.u32 %v3833, 7
    %v3835 = vsub.s32 2, %v3834
    %v3836 = vrot.slane %v3823, %v3835
    %v3837 = vlaneseq
    %v3838 = vshrl.u32 %v3837, 7
    %v3839 = vsub.s32 3, %v3838
    %v3840 = vrot.slane %v3823, %v3839
    %v3845 = vmul.f32 %v3820, %v3828
    %v3846 = vmul.f32 %v3819, %v3832
    %v3847 = vmul.f32 %v3818, %v3836
    %v3848 = vmul.f32 %v3821, %v3840
    %3849 = vrot.lane.b32.xlu0 %v2158, 77
    %v3850 = vpop.permute.xlu0 %3849
    %3851 = vrot.lane.b32.xlu0 %v2159, 77
    %v3852 = vpop.permute.xlu0 %3851
    %3853 = vrot.lane.b32.xlu0 %v2160, 77
    %v3854 = vpop.permute.xlu0 %3853
    %3855 = vrot.lane.b32.xlu0 %v2161, 77
    %v3856 = vpop.permute.xlu0 %3855
    %vm3857 = vcmp.lt.s32.totalorder %v87, 77
    %v3858 = vsel %vm3857, %v3854, %v3856
    %v3859 = vsel %vm3857, %v3852, %v3854
    %v3860 = vsel %vm3857, %v3850, %v3852
    %v3861 = vsel %vm3857, %v3856, %v3850
    %s3862 = scalar_lea.vmem [#allocation5], 192
    %v3863 = vld [vmem:[%s3862] ss:$8 sm:$0xf]
    %v3865 = vlaneseq
    %v3866 = vshrl.u32 %v3865, 7
    %v3867 = vsub.s32 0, %v3866
    %v3868 = vrot.slane %v3863, %v3867
    %v3869 = vlaneseq
    %v3870 = vshrl.u32 %v3869, 7
    %v3871 = vsub.s32 1, %v3870
    %v3872 = vrot.slane %v3863, %v3871
    %v3873 = vlaneseq
    %v3874 = vshrl.u32 %v3873, 7
    %v3875 = vsub.s32 2, %v3874
    %v3876 = vrot.slane %v3863, %v3875
    %v3877 = vlaneseq
    %v3878 = vshrl.u32 %v3877, 7
    %v3879 = vsub.s32 3, %v3878
    %v3880 = vrot.slane %v3863, %v3879
    %v3885 = vmul.f32 %v3860, %v3868
    %v3886 = vmul.f32 %v3859, %v3872
    %v3887 = vmul.f32 %v3858, %v3876
    %v3888 = vmul.f32 %v3861, %v3880
    %v3893 = vrot.slane %v2237, 6
    %v3894 = vrot.slane %v2238, 6
    %v3895 = vrot.slane %v2239, 6
    %v3896 = vrot.slane %v2240, 6
    %v3905 = vrot.slane %v2277, 4
    %v3906 = vrot.slane %v2278, 4
    %v3907 = vrot.slane %v2279, 4
    %v3908 = vrot.slane %v2280, 4
    %v3917 = vrot.slane %v2317, 2
    %v3918 = vrot.slane %v2318, 2
    %v3919 = vrot.slane %v2319, 2
    %v3920 = vrot.slane %v2320, 2
    %v3929 = vrot.slane %v2397, 6
    %v3930 = vrot.slane %v2398, 6
    %v3931 = vrot.slane %v2399, 6
    %v3932 = vrot.slane %v2400, 6
    %v3941 = vrot.slane %v2437, 4
    %v3942 = vrot.slane %v2438, 4
    %v3943 = vrot.slane %v2439, 4
    %v3944 = vrot.slane %v2440, 4
    %v3953 = vrot.slane %v2477, 2
    %v3954 = vrot.slane %v2478, 2
    %v3955 = vrot.slane %v2479, 2
    %v3956 = vrot.slane %v2480, 2
    %v3965 = vrot.slane %v2557, 6
    %v3966 = vrot.slane %v2558, 6
    %v3967 = vrot.slane %v2559, 6
    %v3968 = vrot.slane %v2560, 6
    %v3977 = vrot.slane %v2597, 4
    %v3978 = vrot.slane %v2598, 4
    %v3979 = vrot.slane %v2599, 4
    %v3980 = vrot.slane %v2600, 4
    %v3989 = vrot.slane %v2637, 2
    %v3990 = vrot.slane %v2638, 2
    %v3991 = vrot.slane %v2639, 2
    %v3992 = vrot.slane %v2640, 2
    %v4001 = vrot.slane %v2717, 6
    %v4002 = vrot.slane %v2718, 6
    %v4003 = vrot.slane %v2719, 6
    %v4004 = vrot.slane %v2720, 6
    %v4013 = vrot.slane %v2757, 4
    %v4014 = vrot.slane %v2758, 4
    %v4015 = vrot.slane %v2759, 4
    %v4016 = vrot.slane %v2760, 4
    %v4025 = vrot.slane %v2797, 2
    %v4026 = vrot.slane %v2798, 2
    %v4027 = vrot.slane %v2799, 2
    %v4028 = vrot.slane %v2800, 2
    %v4033 = vsel %vm486, %v2197, %v3893
    %v4034 = vsel %vm486, %v2198, %v3894
    %v4035 = vsel %vm486, %v2199, %v3895
    %v4036 = vsel %vm486, %v2200, %v3896
    %v4037 = vsel %vm448, %v4033, %v3905
    %v4038 = vsel %vm448, %v4034, %v3906
    %v4039 = vsel %vm448, %v4035, %v3907
    %v4040 = vsel %vm448, %v4036, %v3908
    %v4041 = vsel %vm1891, %v4037, %v3917
    %v4042 = vsel %vm1891, %v4038, %v3918
    %v4043 = vsel %vm1891, %v4039, %v3919
    %v4044 = vsel %vm1891, %v4040, %v3920
    %v4045 = vsel %vm486, %v2357, %v3929
    %v4046 = vsel %vm486, %v2358, %v3930
    %v4047 = vsel %vm486, %v2359, %v3931
    %v4048 = vsel %vm486, %v2360, %v3932
    %v4049 = vsel %vm448, %v4045, %v3941
    %v4050 = vsel %vm448, %v4046, %v3942
    %v4051 = vsel %vm448, %v4047, %v3943
    %v4052 = vsel %vm448, %v4048, %v3944
    %v4053 = vsel %vm1891, %v4049, %v3953
    %v4054 = vsel %vm1891, %v4050, %v3954
    %v4055 = vsel %vm1891, %v4051, %v3955
    %v4056 = vsel %vm1891, %v4052, %v3956
    %v4057 = vsel %vm486, %v2517, %v3965
    %v4058 = vsel %vm486, %v2518, %v3966
    %v4059 = vsel %vm486, %v2519, %v3967
    %v4060 = vsel %vm486, %v2520, %v3968
    %v4061 = vsel %vm448, %v4057, %v3977
    %v4062 = vsel %vm448, %v4058, %v3978
    %v4063 = vsel %vm448, %v4059, %v3979
    %v4064 = vsel %vm448, %v4060, %v3980
    %v4065 = vsel %vm1891, %v4061, %v3989
    %v4066 = vsel %vm1891, %v4062, %v3990
    %v4067 = vsel %vm1891, %v4063, %v3991
    %v4068 = vsel %vm1891, %v4064, %v3992
    %v4069 = vsel %vm486, %v2677, %v4001
    %v4070 = vsel %vm486, %v2678, %v4002
    %v4071 = vsel %vm486, %v2679, %v4003
    %v4072 = vsel %vm486, %v2680, %v4004
    %v4073 = vsel %vm448, %v4069, %v4013
    %v4074 = vsel %vm448, %v4070, %v4014
    %v4075 = vsel %vm448, %v4071, %v4015
    %v4076 = vsel %vm448, %v4072, %v4016
    %v4077 = vsel %vm1891, %v4073, %v4025
    %v4078 = vsel %vm1891, %v4074, %v4026
    %v4079 = vsel %vm1891, %v4075, %v4027
    %v4080 = vsel %vm1891, %v4076, %v4028
    %v4085 = vrot.slane %v2829, 6
    %v4086 = vrot.slane %v2830, 6
    %v4087 = vrot.slane %v2831, 6
    %v4088 = vrot.slane %v2832, 6
    %v4097 = vrot.slane %v2845, 4
    %v4098 = vrot.slane %v2846, 4
    %v4099 = vrot.slane %v2847, 4
    %v4100 = vrot.slane %v2848, 4
    %v4109 = vrot.slane %v2885, 2
    %v4110 = vrot.slane %v2886, 2
    %v4111 = vrot.slane %v2887, 2
    %v4112 = vrot.slane %v2888, 2
    %v4121 = vrot.slane %v2965, 6
    %v4122 = vrot.slane %v2966, 6
    %v4123 = vrot.slane %v2967, 6
    %v4124 = vrot.slane %v2968, 6
    %v4133 = vrot.slane %v3005, 4
    %v4134 = vrot.slane %v3006, 4
    %v4135 = vrot.slane %v3007, 4
    %v4136 = vrot.slane %v3008, 4
    %v4145 = vrot.slane %v3021, 2
    %v4146 = vrot.slane %v3022, 2
    %v4147 = vrot.slane %v3023, 2
    %v4148 = vrot.slane %v3024, 2
    %v4157 = vrot.slane %v3037, 6
    %v4158 = vrot.slane %v3038, 6
    %v4159 = vrot.slane %v3039, 6
    %v4160 = vrot.slane %v3040, 6
    %v4169 = vrot.slane %v3077, 4
    %v4170 = vrot.slane %v3078, 4
    %v4171 = vrot.slane %v3079, 4
    %v4172 = vrot.slane %v3080, 4
    %v4181 = vrot.slane %v3117, 2
    %v4182 = vrot.slane %v3118, 2
    %v4183 = vrot.slane %v3119, 2
    %v4184 = vrot.slane %v3120, 2
    %v4193 = vrot.slane %v3197, 6
    %v4194 = vrot.slane %v3198, 6
    %v4195 = vrot.slane %v3199, 6
    %v4196 = vrot.slane %v3200, 6
    %v4205 = vrot.slane %v3213, 4
    %v4206 = vrot.slane %v3214, 4
    %v4207 = vrot.slane %v3215, 4
    %v4208 = vrot.slane %v3216, 4
    %v4217 = vrot.slane %v3229, 2
    %v4218 = vrot.slane %v3230, 2
    %v4219 = vrot.slane %v3231, 2
    %v4220 = vrot.slane %v3232, 2
    %v4225 = vsel %vm486, %v2813, %v4085
    %v4226 = vsel %vm486, %v2814, %v4086
    %v4227 = vsel %vm486, %v2815, %v4087
    %v4228 = vsel %vm486, %v2816, %v4088
    %v4229 = vsel %vm448, %v4225, %v4097
    %v4230 = vsel %vm448, %v4226, %v4098
    %v4231 = vsel %vm448, %v4227, %v4099
    %v4232 = vsel %vm448, %v4228, %v4100
    %v4233 = vsel %vm1891, %v4229, %v4109
    %v4234 = vsel %vm1891, %v4230, %v4110
    %v4235 = vsel %vm1891, %v4231, %v4111
    %v4236 = vsel %vm1891, %v4232, %v4112
    %v4237 = vsel %vm486, %v2925, %v4121
    %v4238 = vsel %vm486, %v2926, %v4122
    %v4239 = vsel %vm486, %v2927, %v4123
    %v4240 = vsel %vm486, %v2928, %v4124
    %v4241 = vsel %vm448, %v4237, %v4133
    %v4242 = vsel %vm448, %v4238, %v4134
    %v4243 = vsel %vm448, %v4239, %v4135
    %v4244 = vsel %vm448, %v4240, %v4136
    %v4245 = vsel %vm1891, %v4241, %v4145
    %v4246 = vsel %vm1891, %v4242, %v4146
    %v4247 = vsel %vm1891, %v4243, %v4147
    %v4248 = vsel %vm1891, %v4244, %v4148
    %v4249 = vsel %vm486, %v2158, %v4157
    %v4250 = vsel %vm486, %v2159, %v4158
    %v4251 = vsel %vm486, %v2160, %v4159
    %v4252 = vsel %vm486, %v2161, %v4160
    %v4253 = vsel %vm448, %v4249, %v4169
    %v4254 = vsel %vm448, %v4250, %v4170
    %v4255 = vsel %vm448, %v4251, %v4171
    %v4256 = vsel %vm448, %v4252, %v4172
    %v4257 = vsel %vm1891, %v4253, %v4181
    %v4258 = vsel %vm1891, %v4254, %v4182
    %v4259 = vsel %vm1891, %v4255, %v4183
    %v4260 = vsel %vm1891, %v4256, %v4184
    %v4261 = vsel %vm486, %v3157, %v4193
    %v4262 = vsel %vm486, %v3158, %v4194
    %v4263 = vsel %vm486, %v3159, %v4195
    %v4264 = vsel %vm486, %v3160, %v4196
    %v4265 = vsel %vm448, %v4261, %v4205
    %v4266 = vsel %vm448, %v4262, %v4206
    %v4267 = vsel %vm448, %v4263, %v4207
    %v4268 = vsel %vm448, %v4264, %v4208
    %v4269 = vsel %vm1891, %v4265, %v4217
    %v4270 = vsel %vm1891, %v4266, %v4218
    %v4271 = vsel %vm1891, %v4267, %v4219
    %v4272 = vsel %vm1891, %v4268, %v4220
    %v4277 = vrot.slane %v3285, 6
    %v4278 = vrot.slane %v3286, 6
    %v4279 = vrot.slane %v3287, 6
    %v4280 = vrot.slane %v3288, 6
    %v4289 = vrot.slane %v3325, 4
    %v4290 = vrot.slane %v3326, 4
    %v4291 = vrot.slane %v3327, 4
    %v4292 = vrot.slane %v3328, 4
    %v4301 = vrot.slane %v3365, 2
    %v4302 = vrot.slane %v3366, 2
    %v4303 = vrot.slane %v3367, 2
    %v4304 = vrot.slane %v3368, 2
    %v4313 = vrot.slane %v3445, 6
    %v4314 = vrot.slane %v3446, 6
    %v4315 = vrot.slane %v3447, 6
    %v4316 = vrot.slane %v3448, 6
    %v4325 = vrot.slane %v3485, 4
    %v4326 = vrot.slane %v3486, 4
    %v4327 = vrot.slane %v3487, 4
    %v4328 = vrot.slane %v3488, 4
    %v4337 = vrot.slane %v3525, 2
    %v4338 = vrot.slane %v3526, 2
    %v4339 = vrot.slane %v3527, 2
    %v4340 = vrot.slane %v3528, 2
    %v4349 = vrot.slane %v3605, 6
    %v4350 = vrot.slane %v3606, 6
    %v4351 = vrot.slane %v3607, 6
    %v4352 = vrot.slane %v3608, 6
    %v4361 = vrot.slane %v3645, 4
    %v4362 = vrot.slane %v3646, 4
    %v4363 = vrot.slane %v3647, 4
    %v4364 = vrot.slane %v3648, 4
    %v4373 = vrot.slane %v3685, 2
    %v4374 = vrot.slane %v3686, 2
    %v4375 = vrot.slane %v3687, 2
    %v4376 = vrot.slane %v3688, 2
    %v4385 = vrot.slane %v3765, 6
    %v4386 = vrot.slane %v3766, 6
    %v4387 = vrot.slane %v3767, 6
    %v4388 = vrot.slane %v3768, 6
    %v4397 = vrot.slane %v3805, 4
    %v4398 = vrot.slane %v3806, 4
    %v4399 = vrot.slane %v3807, 4
    %v4400 = vrot.slane %v3808, 4
    %v4409 = vrot.slane %v3845, 2
    %v4410 = vrot.slane %v3846, 2
    %v4411 = vrot.slane %v3847, 2
    %v4412 = vrot.slane %v3848, 2
    %v4417 = vsel %vm486, %v3245, %v4277
    %v4418 = vsel %vm486, %v3246, %v4278
    %v4419 = vsel %vm486, %v3247, %v4279
    %v4420 = vsel %vm486, %v3248, %v4280
    %v4421 = vsel %vm448, %v4417, %v4289
    %v4422 = vsel %vm448, %v4418, %v4290
    %v4423 = vsel %vm448, %v4419, %v4291
    %v4424 = vsel %vm448, %v4420, %v4292
    %v4425 = vsel %vm1891, %v4421, %v4301
    %v4426 = vsel %vm1891, %v4422, %v4302
    %v4427 = vsel %vm1891, %v4423, %v4303
    %v4428 = vsel %vm1891, %v4424, %v4304
    %v4429 = vsel %vm486, %v3405, %v4313
    %v4430 = vsel %vm486, %v3406, %v4314
    %v4431 = vsel %vm486, %v3407, %v4315
    %v4432 = vsel %vm486, %v3408, %v4316
    %v4433 = vsel %vm448, %v4429, %v4325
    %v4434 = vsel %vm448, %v4430, %v4326
    %v4435 = vsel %vm448, %v4431, %v4327
    %v4436 = vsel %vm448, %v4432, %v4328
    %v4437 = vsel %vm1891, %v4433, %v4337
    %v4438 = vsel %vm1891, %v4434, %v4338
    %v4439 = vsel %vm1891, %v4435, %v4339
    %v4440 = vsel %vm1891, %v4436, %v4340
    %v4441 = vsel %vm486, %v3565, %v4349
    %v4442 = vsel %vm486, %v3566, %v4350
    %v4443 = vsel %vm486, %v3567, %v4351
    %v4444 = vsel %vm486, %v3568, %v4352
    %v4445 = vsel %vm448, %v4441, %v4361
    %v4446 = vsel %vm448, %v4442, %v4362
    %v4447 = vsel %vm448, %v4443, %v4363
    %v4448 = vsel %vm448, %v4444, %v4364
    %v4449 = vsel %vm1891, %v4445, %v4373
    %v4450 = vsel %vm1891, %v4446, %v4374
    %v4451 = vsel %vm1891, %v4447, %v4375
    %v4452 = vsel %vm1891, %v4448, %v4376
    %v4453 = vsel %vm486, %v3725, %v4385
    %v4454 = vsel %vm486, %v3726, %v4386
    %v4455 = vsel %vm486, %v3727, %v4387
    %v4456 = vsel %vm486, %v3728, %v4388
    %v4457 = vsel %vm448, %v4453, %v4397
    %v4458 = vsel %vm448, %v4454, %v4398
    %v4459 = vsel %vm448, %v4455, %v4399
    %v4460 = vsel %vm448, %v4456, %v4400
    %v4461 = vsel %vm1891, %v4457, %v4409
    %v4462 = vsel %vm1891, %v4458, %v4410
    %v4463 = vsel %vm1891, %v4459, %v4411
    %v4464 = vsel %vm1891, %v4460, %v4412
    %v4465 = vpack.c.bf16 %v4053, %v4041
    %v4466 = vpack.c.bf16 %v4054, %v4042
    %v4467 = vpack.c.bf16 %v4055, %v4043
    %v4468 = vpack.c.bf16 %v4056, %v4044
    %v4469 = vpack.c.bf16 %v4077, %v4065
    %v4470 = vpack.c.bf16 %v4078, %v4066
    %v4471 = vpack.c.bf16 %v4079, %v4067
    %v4472 = vpack.c.bf16 %v4080, %v4068
    %v4473 = vpack.c.bf16 %v4245, %v4233
    %v4474 = vpack.c.bf16 %v4246, %v4234
    %v4475 = vpack.c.bf16 %v4247, %v4235
    %v4476 = vpack.c.bf16 %v4248, %v4236
    %v4477 = vpack.c.bf16 %v4269, %v4257
    %v4478 = vpack.c.bf16 %v4270, %v4258
    %v4479 = vpack.c.bf16 %v4271, %v4259
    %v4480 = vpack.c.bf16 %v4272, %v4260
    %v4481 = vpack.c.bf16 %v4437, %v4425
    %v4482 = vpack.c.bf16 %v4438, %v4426
    %v4483 = vpack.c.bf16 %v4439, %v4427
    %v4484 = vpack.c.bf16 %v4440, %v4428
    %v4485 = vpack.c.bf16 %v4461, %v4449
    %v4486 = vpack.c.bf16 %v4462, %v4450
    %v4487 = vpack.c.bf16 %v4463, %v4451
    %v4488 = vpack.c.bf16 %v4464, %v4452
    %v4489 = vpack.c.bf16 %v3885, %v3885
    %v4490 = vpack.c.bf16 %v3886, %v3886
    %v4491 = vpack.c.bf16 %v3887, %v3887
    %v4492 = vpack.c.bf16 %v3888, %v3888
    %4493 = vset.pattern.permute.xlu0 35
    %4494 = vperm.xlu0 %4493, %v71
    %v4495 = vpop.permute.xlu0 %4494
    %v4497 = vunpack.c.h.b16 %v70
    %v4498 = vpack.c.b16 %v4497, %v4497
    %4499 = vrot.lane.b32.xlu0 %v1315, 20
    %v4500 = vpop.permute.xlu0 %4499
    %4501 = vrot.lane.b32.xlu0 %v4498, 20
    %v4502 = vpop.permute.xlu0 %4501
    %vm4503 = vcmask 162816
    %v4504 = vsel %vm4503, %v4500, %v4502
    %vm4505 = vcmask 801792
    %v4507 = vsel %vm4505, %v4504, 0
    %v4510 = vsel %vm1859, %v4489, 0
    %v4513 = vsel %vm1859, %v4490, 0
    %v4516 = vsel %vm1859, %v4491, 0
    %v4519 = vsel %vm1859, %v4492, 0
    %4521 = vmatprep.subr.bf16.mxu0 0
    %4522 = vmatpush1.bf16.msra.mxu0 0
    %4523 = vmatprep.subr.bf16.mxu0 %v4513
    %4524 = vmatpush1.bf16.msra.mxu0 %v4510
    %4525 = vmatprep.subr.bf16.mxu0 %v4486
    %4526 = vmatpush1.bf16.msra.mxu0 %v4485
    %4527 = vmatprep.subr.bf16.mxu0 %v4482
    %4528 = vmatpush1.bf16.msra.mxu0 %v4481
    %4529 = vmatprep.subr.bf16.mxu0 %v4478
    %4530 = vmatpush1.bf16.msra.mxu0 %v4477
    %4531 = vmatprep.subr.bf16.mxu0 %v4474
    %4532 = vmatpush1.bf16.msra.mxu0 %v4473
    %4533 = vmatprep.subr.bf16.mxu0 %v4470
    %4534 = vmatpush1.bf16.msra.mxu0 %v4469
    %4535 = vmatprep.subr.bf16.mxu0 %v4466
    %4536 = vmatpush1.bf16.msra.mxu0 %v4465
    %4537 = vmatprep.subr.bf16.mxu0 0
    %4538 = vmatpush2.bf16.msra.mxu0 0
    %4539 = vmatprep.subr.bf16.mxu0 0
    %4540 = vmatpush2.bf16.msra.mxu0 0
    %4541 = vmatprep.subr.bf16.mxu0 0
    %4542 = vmatpush2.bf16.msra.mxu0 0
    %4543 = vmatprep.subr.bf16.mxu0 0
    %4544 = vmatpush2.bf16.msra.mxu0 0
    %4545 = vmatprep.subr.bf16.mxu0 0
    %4546 = vmatpush2.bf16.msra.mxu0 0
    %4547 = vmatprep.subr.bf16.mxu0 0
    %4548 = vmatpush2.bf16.msra.mxu0 0
    %4549 = vmatprep.subr.bf16.mxu0 0
    %4550 = vmatpush2.bf16.msra.mxu0 0
    %4551 = vmatprep.subr.bf16.mxu0 0
    %4552 = vmatpush2.bf16.msra.mxu0 0
    %4553 = vmatprep.mubr.bf16.mxu0 0
    %4554 = vmatmul.mubr.bf16.gmra.mxu0 %v4507
    %v4555 = vpop.f32.mrf.mxu0
    %v4556 = vadd.f32 %v4495, %v4555
    %v4557 = vpop.f32.mrf.mxu0
    %v4558 = vadd.f32 %v4495, %v4557
    %v4559 = vpop.f32.mrf.mxu0
    %v4560 = vpop.f32.mrf.mxu0
    %4561 = vdwg.mxu0
    %4562 = vmatprep.subr.bf16.mxu0 0
    %4563 = vmatpush1.bf16.msra.mxu0 0
    %4564 = vmatprep.subr.bf16.mxu0 %v4519
    %4565 = vmatpush1.bf16.msra.mxu0 %v4516
    %4566 = vmatprep.subr.bf16.mxu0 %v4488
    %4567 = vmatpush1.bf16.msra.mxu0 %v4487
    %4568 = vmatprep.subr.bf16.mxu0 %v4484
    %4569 = vmatpush1.bf16.msra.mxu0 %v4483
    %4570 = vmatprep.subr.bf16.mxu0 %v4480
    %4571 = vmatpush1.bf16.msra.mxu0 %v4479
    %4572 = vmatprep.subr.bf16.mxu0 %v4476
    %4573 = vmatpush1.bf16.msra.mxu0 %v4475
    %4574 = vmatprep.subr.bf16.mxu0 %v4472
    %4575 = vmatpush1.bf16.msra.mxu0 %v4471
    %4576 = vmatprep.subr.bf16.mxu0 %v4468
    %4577 = vmatpush1.bf16.msra.mxu0 %v4467
    %4578 = vmatprep.subr.bf16.mxu0 0
    %4579 = vmatpush2.bf16.msra.mxu0 0
    %4580 = vmatprep.subr.bf16.mxu0 0
    %4581 = vmatpush2.bf16.msra.mxu0 0
    %4582 = vmatprep.subr.bf16.mxu0 0
    %4583 = vmatpush2.bf16.msra.mxu0 0
    %4584 = vmatprep.subr.bf16.mxu0 0
    %4585 = vmatpush2.bf16.msra.mxu0 0
    %4586 = vmatprep.subr.bf16.mxu0 0
    %4587 = vmatpush2.bf16.msra.mxu0 0
    %4588 = vmatprep.subr.bf16.mxu0 0
    %4589 = vmatpush2.bf16.msra.mxu0 0
    %4590 = vmatprep.subr.bf16.mxu0 0
    %4591 = vmatpush2.bf16.msra.mxu0 0
    %4592 = vmatprep.subr.bf16.mxu0 0
    %4593 = vmatpush2.bf16.msra.mxu0 0
    %4594 = vmatprep.mubr.bf16.mxu0 0
    %4595 = vmatmul.mubr.bf16.gmra.mxu0 %v4507
    %v4596 = vpop.f32.mrf.mxu0
    %v4597 = vadd.f32 %v4495, %v4596
    %v4598 = vpop.f32.mrf.mxu0
    %v4599 = vadd.f32 %v4495, %v4598
    %v4600 = vpop.f32.mrf.mxu0
    %v4601 = vpop.f32.mrf.mxu0
    %4602 = vdwg.mxu0
    %v4603 = vsub.f32 0.0, %v4556
    %v4604 = vsub.f32 0.0, %v4558
    %v4605 = vsub.f32 0.0, %v4597
    %v4606 = vsub.f32 0.0, %v4599
    %v4607 = vmul.f32 %v4603, 1.442695
    %v4608 = vpow.pop %v4607
    %v4609 = vmul.f32 %v4604, 1.442695
    %v4610 = vpow.pop %v4609
    %v4611 = vmul.f32 %v4605, 1.442695
    %v4612 = vpow.pop %v4611
    %v4613 = vmul.f32 %v4606, 1.442695
    %v4614 = vpow.pop %v4613
    %v4615 = vadd.f32 %v4608, 1.0
    %v4616 = vadd.f32 %v4610, 1.0
    %v4617 = vadd.f32 %v4612, 1.0
    %v4618 = vadd.f32 %v4614, 1.0
    %v4619 = vrcp.pop %v4615
    %v4620 = vrcp.pop %v4616
    %v4621 = vrcp.pop %v4617
    %v4622 = vrcp.pop %v4618
    %v4623 = vlaneseq
    %v4624 = vshrl.u32 %v4623, 7
    %v4625 = vsub.s32 0, %v4624
    %v4626 = vrot.slane %v4619, %v4625
    %v4627 = vlaneseq
    %v4628 = vshrl.u32 %v4627, 7
    %v4629 = vsub.s32 0, %v4628
    %v4630 = vrot.slane %v4620, %v4629
    %v4631 = vlaneseq
    %v4632 = vshrl.u32 %v4631, 7
    %v4633 = vsub.s32 0, %v4632
    %v4634 = vrot.slane %v4621, %v4633
    %v4635 = vlaneseq
    %v4636 = vshrl.u32 %v4635, 7
    %v4637 = vsub.s32 0, %v4636
    %v4638 = vrot.slane %v4622, %v4637
    %v4639 = vmul.f32 %v2014, %v4626
    %v4640 = vmul.f32 %v2015, %v4630
    %v4641 = vmul.f32 %v2016, %v4634
    %v4642 = vmul.f32 %v2017, %v4638
    %v4647 = vrot.slane %v883, 4
    %v4648 = vrot.slane %v884, 4
    %v4649 = vrot.slane %v885, 4
    %v4650 = vrot.slane %v886, 4
    %v4655 = vadd.f32 %v4639, %v4647
    %v4656 = vadd.f32 %v4640, %v4648
    %v4657 = vadd.f32 %v4641, %v4649
    %v4658 = vadd.f32 %v4642, %v4650
    %v4659 = vmax.f32 %v4655, 0.0
    %v4660 = vmax.f32 %v4656, 0.0
    %v4661 = vmax.f32 %v4657, 0.0
    %v4662 = vmax.f32 %v4658, 0.0
    %v4663 = vmul.f32 %v2030, %v4626
    %v4664 = vmul.f32 %v2031, %v4630
    %v4665 = vmul.f32 %v2032, %v4634
    %v4666 = vmul.f32 %v2033, %v4638
    %v4671 = vrot.slane %v901, 4
    %v4672 = vrot.slane %v902, 4
    %v4673 = vrot.slane %v903, 4
    %v4674 = vrot.slane %v904, 4
    %v4679 = vadd.f32 %v4663, %v4671
    %v4680 = vadd.f32 %v4664, %v4672
    %v4681 = vadd.f32 %v4665, %v4673
    %v4682 = vadd.f32 %v4666, %v4674
    %v4683 = vmax.f32 %v4679, 0.0
    %v4684 = vmax.f32 %v4680, 0.0
    %v4685 = vmax.f32 %v4681, 0.0
    %v4686 = vmax.f32 %v4682, 0.0
    %v4691 = vrot.slane %v4683, 4
    %v4692 = vrot.slane %v4684, 4
    %v4693 = vrot.slane %v4685, 4
    %v4694 = vrot.slane %v4686, 4
    %v4699 = vsel %vm448, %v4659, %v4691
    %v4700 = vsel %vm448, %v4660, %v4692
    %v4701 = vsel %vm448, %v4661, %v4693
    %v4702 = vsel %vm448, %v4662, %v4694
    %4703 = vst [vmem:[#allocation10] sm:$0xff] %v4699
    %4704 = vst [vmem:[#allocation10 + $0x8] sm:$0xff] %v4700
    %4705 = vst [vmem:[#allocation10 + $0x10] sm:$0xff] %v4701
    %4706 = vst [vmem:[#allocation10 + $0x18] sm:$0xff] %v4702
    // Predicated region
    $region34: #{tpu_custom_call.1} parent=1 // pred_check
      _
    $region35: #{tpu_custom_call.1} parent=1 // pred_check_branch
      %4708 = sbr.rel (0) target = $region37
    $region36: #{tpu_custom_call.1} parent=1 // pred_region
      %s4710 = ssub.s32 512, 512
      %4711 = vsyncadd [#allocation4], %s4710
      %s4713 = sshll.u32 [#allocation10], 4
      %s4714 = int_to_ptr.vmem [resolvable:$true] %s4713
      %4716 = dma.vmem_to_hbm [thread:$0]  %s4714, 512, %s4, [#allocation4]
    $region37: #{tpu_custom_call.1} parent=1 // pred_fallthru
      _
    // Predicated region
    $region38: #{tpu_custom_call.1} parent=1 // pred_check
      _
    $region39: #{tpu_custom_call.1} parent=1 // pred_check_branch
      %4718 = sbr.rel (0) target = $region41
    $region40: #{tpu_custom_call.1} parent=1 // pred_region
      %4719 = dma.done [#allocation4], 512
    $region41: #{tpu_custom_call.1} parent=1 // pred_fallthru
      _
    %4720 = vsyncpa [#allocation3], 1
    %4721 = vsyncpa [#allocation6], 1
    %4722 = vsyncpa [#allocation9], 1
    %4723 = vsyncpa [#allocation4], 1

</llo_original>
